<compile_context>
chip_gen: v6e
topology: v6e:2x2x1
jax: 0.10.0
libtpu: 0.0.40
codegen_flags: <defaults>
</compile_context>

<pallas_src>
import numpy as np
import jax
import jax.numpy as jnp
from jax import lax
from jax.experimental import pallas as pl
from jax.experimental.pallas import tpu as pltpu

# ---------------- synthetic config (small, consistent with the module) ----------
NUM_OBJ_CLS = 10        # len(obj_classes)
NUM_REL_CLS = 5         # len(rel_classes) (unused in this forward path)
IN_CHANNELS = 32        # roi feature dim
EMBED_DIM   = 32        # MODEL.ROI_RELATION_HEAD.EMBED_DIM
HIDDEN_DIM  = 64        # CONTEXT_HIDDEN_DIM
NUM_HEAD    = 2         # TRANSFORMER.NUM_HEAD
K_DIM       = 16        # TRANSFORMER.KEY_DIM
V_DIM       = 16        # TRANSFORMER.VAL_DIM
INNER_DIM   = 128       # TRANSFORMER.INNER_DIM
OBJ_LAYER   = 1         # TRANSFORMER.OBJ_LAYER
EDGE_LAYER  = 1         # TRANSFORMER.REL_LAYER
ONEHOT_FILL = 1000.0    # to_onehot fill value
LN_EPS      = 1e-5
NEG_INF     = -1e9

# data-slab lane layout: [roi(0:32) | box9(32:41, padded to 48) | emb1(48:80) | emb2(80:112) | 0]
_ROI_OFF, _BOX_OFF, _EMB1_OFF, _EMB2_OFF = 0, 32, 48, 80
_DATA_LANES = 128


# ---------------- slab packing ----------------------------------------------------
class _SlabPacker:
    """Packs many small 2-D tensors into one (R, 128) slab + static row offsets."""

    def __init__(self):
        self._parts, self._offsets, self._r = [], {}, 0

    def add(self, name, arr):
        arr = jnp.asarray(arr, jnp.float32)
        rows, cols = arr.shape
        assert cols <= 128
        self._offsets[name] = (self._r, rows, cols)
        self._parts.append(jnp.pad(arr, ((0, 0), (0, 128 - cols))))
        self._r += rows

    def finalize(self, dtype, row_multiple):
        slab = jnp.concatenate(self._parts, axis=0)
        pad = (-slab.shape[0]) % row_multiple
        if pad:
            slab = jnp.pad(slab, ((0, pad), (0, 0)))
        return slab.astype(dtype), dict(self._offsets)


def _embed_rows(w, row_start, total_rows=_DATA_LANES):
    """Place w's rows at [row_start, row_start+rows) of a zero (total_rows, cols) matrix
    so `data_slab @ result` applies w to the corresponding lane range of the data slab."""
    full = jnp.zeros((total_rows, w.shape[1]), jnp.float32)
    return full.at[row_start:row_start + w.shape[0]].set(w)


def prepare_slabs(params):
    """Pack every matmul weight into one bf16 slab (all row offsets multiples of 16)
    and every bias / LayerNorm parameter into one f32 slab."""
    wp, bp = _SlabPacker(), _SlabPacker()
    q_scale = 1.0 / float(np.sqrt(K_DIM))

    # front projections, expressed directly on the 128-lane data slab
    wp.add('bw1', _embed_rows(params['bbox_w1'], _BOX_OFF))                     # (128,32)
    bp.add('bb1', params['bbox_b1'])
    wp.add('bw2', params['bbox_w2'])                                            # (32,128)
    bp.add('bb2', params['bbox_b2'])
    wp.add('w_ov_data', _embed_rows(params['lin_obj_vis_w'][:IN_CHANNELS], _ROI_OFF))
    wp.add('w_ov_pos', params['lin_obj_vis_w'][IN_CHANNELS:])                   # (128,64)
    bp.add('b_ov', params['lin_obj_vis_b'])
    wp.add('w_ot_data', _embed_rows(params['lin_obj_txt_w'], _EMB1_OFF))
    bp.add('b_ot', params['lin_obj_txt_b'])
    wp.add('w_ev_data', _embed_rows(params['lin_edge_vis_w'][:IN_CHANNELS], _ROI_OFF))
    wp.add('w_ev_obj', params['lin_edge_vis_w'][IN_CHANNELS:])                  # (64,64)
    bp.add('b_ev', params['lin_edge_vis_b'])
    wp.add('w_et_data', _embed_rows(params['lin_edge_txt_w'], _EMB2_OFF))
    bp.add('b_et', params['lin_edge_txt_b'])

    def add_stage(prefix, layers):
        for l, layer in enumerate(layers):
            t, v = layer['txt'], layer['vis']
            pv = f'{prefix}{l}_'
            # fused per-stream projections; 1/sqrt(d_k) folded into the Q block
            wp.add(pv + 'pwv', jnp.concatenate([v['wq'] * q_scale, t['wk'], t['wv']], 1))
            bp.add(pv + 'pbv', jnp.concatenate([v['bq'] * q_scale, t['bk'], t['bv']], 1))
            wp.add(pv + 'pwt', jnp.concatenate([t['wq'] * q_scale, v['wk'], v['wv']], 1))
            bp.add(pv + 'pbt', jnp.concatenate([t['bq'] * q_scale, v['bk'], v['bv']], 1))
            for cname, cell in (('txt_', t), ('vis_', v)):
                wp.add(pv + cname + 'wf', cell['wf'])
                wp.add(pv + cname + 'w1', cell['w1'])
                wp.add(pv + cname + 'w2', cell['w2'])
                for bn in ('bf', 'g1', 'be1', 'b1', 'b2', 'g2', 'be2'):
                    bp.add(pv + cname + bn, cell[bn])

    add_stage('obj', params['context_obj'])
    add_stage('edge', params['context_edge'])

    w_slab, w_offs = wp.finalize(jnp.bfloat16, 16)
    b_slab, b_offs = bp.finalize(jnp.float32, 8)
    return w_slab, w_offs, b_slab, b_offs


# ---------------- the fused kernel (one image per grid step) ----------------------
def _make_kernel(w_offs, b_offs, bucket, n_obj_layers, n_edge_layers):
    hk = NUM_HEAD * K_DIM

    def kernel(lens_ref, data_ref, w_ref, b_ref, out_ref):
        def W(name):                          # static carve of the bf16 weight slab
            r, rows, cols = w_offs[name]
            return w_ref[r:r + rows, :cols]

        def B(name):                          # static carve of the f32 bias slab
            r, _, cols = b_offs[name]
            return b_ref[r:r + 1, :cols]

        def mm(x_bf, name):                   # bf16 operands, f32 accumulation
            return jnp.dot(x_bf, W(name), preferred_element_type=jnp.float32)

        def ln(x, gname, bname):              # f32 LayerNorm
            mu = jnp.mean(x, axis=-1, keepdims=True)
            var = jnp.mean(jnp.square(x - mu), axis=-1, keepdims=True)
            return (x - mu) * lax.rsqrt(var + LN_EPS) * B(gname) + B(bname)

        # per-image key/pad mask.  Invariant: columns >= n_i are always masked, so
        # garbage in pad query rows can never leak into valid rows (wrapper slices [:n_i]).
        n_i = lens_ref[pl.program_id(0)]
        col = lax.broadcasted_iota(jnp.int32, (bucket, bucket), 1)
        add_mask = jnp.where(col < n_i, 0.0, NEG_INF).astype(jnp.float32)

        def cell(pfx, q, k, v, resid):
            """Tail of one Cross_Attention_Cell (eval): MHA + out-proj + resid/LN + FFN + resid/LN."""
            ctx = []
            for h in range(NUM_HEAD):                         # static, tiny head loop
                qh = q[:, h * K_DIM:(h + 1) * K_DIM]
                kh = k[:, h * K_DIM:(h + 1) * K_DIM]
                vh = v[:, h * V_DIM:(h + 1) * V_DIM]
                s = lax.dot_general(qh, kh, (((1,), (1,)), ((), ())),
                                    preferred_element_type=jnp.float32) + add_mask
                s = s - jnp.max(s, axis=-1, keepdims=True)
                p = jnp.exp(s)
                p = p * pl.reciprocal(jnp.sum(p, axis=-1, keepdims=True), approx=False)
                ctx.append(jnp.dot(p.astype(jnp.bfloat16), vh,
                                   preferred_element_type=jnp.float32))
            # merged-head output projection: one (bucket,32)@(32,64) matmul
            ctx = jnp.concatenate(ctx, axis=-1).astype(jnp.bfloat16)
            a = mm(ctx, pfx + 'wf') + B(pfx + 'bf')
            o = ln(a + resid, pfx + 'g1', pfx + 'be1')
            h1 = jnp.maximum(mm(o.astype(jnp.bfloat16), pfx + 'w1') + B(pfx + 'b1'), 0.0)
            h2 = mm(h1.astype(jnp.bfloat16), pfx + 'w2') + B(pfx + 'b2')
            return ln(h2 + o, pfx + 'g2', pfx + 'be2')

        def stage(prefix, vis, txt, n_layers):
            """One CA_Encoder stage: n_layers x Single_Layer_Cross_Attention."""
            for l in range(n_layers):
                pv = f'{prefix}{l}_'
                # fused per-stream projections:
                #   vproj = [Q(vis cell) | K(txt cell) | V(txt cell)]
                #   tproj = [Q(txt cell) | K(vis cell) | V(vis cell)]
                vproj = (mm(vis.astype(jnp.bfloat16), pv + 'pwv')
                         + B(pv + 'pbv')).astype(jnp.bfloat16)
                tproj = (mm(txt.astype(jnp.bfloat16), pv + 'pwt')
                         + B(pv + 'pbt')).astype(jnp.bfloat16)
                # CA_Cell_txt(text, visual) then CA_Cell_vis(visual, text), both on old values
                txt_new = cell(pv + 'txt_', tproj[:, :hk], vproj[:, hk:2 * hk],
                               vproj[:, 2 * hk:], txt)
                vis_new = cell(pv + 'vis_', vproj[:, :hk], tproj[:, hk:2 * hk],
                               tproj[:, 2 * hk:], vis)
                vis, txt = vis_new, txt_new
            return vis, txt

        data = data_ref[...]                                  # bf16 (bucket, 128)

        # ---- object-context front projections (all on the 128-lane data slab) ----
        pos_h = jnp.maximum(mm(data, 'bw1') + B('bb1'), 0.0)                 # bbox MLP l1
        pos = jnp.maximum(mm(pos_h.astype(jnp.bfloat16), 'bw2') + B('bb2'), 0.0)
        vis = mm(data, 'w_ov_data') + mm(pos.astype(jnp.bfloat16), 'w_ov_pos') + B('b_ov')
        txt = mm(data, 'w_ot_data') + B('b_ot')
        obj_feats, _ = stage('obj', vis, txt, n_obj_layers)

        # ---- edge-context front projections ---------------------------------------
        evis = (mm(data, 'w_ev_data')
                + mm(obj_feats.astype(jnp.bfloat16), 'w_ev_obj') + B('b_ev'))
        etxt = mm(data, 'w_et_data') + B('b_et')
        evis, etxt = stage('edge', evis, etxt, n_edge_layers)

        # lane-dense (bucket, 128) single store: [edge_vis | edge_txt]
        out_ref[...] = jnp.concatenate([evis, etxt], axis=-1).astype(jnp.float32)

    return kernel


# ---------------- cost estimate -----------------------------------------------------
def _cost_estimate(bucket, num_img, data_slab, w_slab, b_slab):
    B = bucket
    n_layers = OBJ_LAYER + EDGE_LAYER
    front = 2 * B * (128 * 32 + 32 * 128 + 3 * 128 * 64 + 128 * 64 + 64 * 64 + 128 * 64)
    per_layer = 2 * (2 * B * 64 * (3 * NUM_HEAD * K_DIM))
    per_cell = (NUM_HEAD * (2 * B * B * K_DIM + 2 * B * B * V_DIM)
                + 2 * B * (NUM_HEAD * V_DIM * HIDDEN_DIM
                           + HIDDEN_DIM * INNER_DIM + INNER_DIM * HIDDEN_DIM))
    flops = num_img * (front + n_layers * (per_layer + 2 * per_cell))
    transc = num_img * n_layers * 2 * NUM_HEAD * B * B
    byts = (data_slab.size * 2 + w_slab.size * 2 + b_slab.size * 4
            + num_img * B * 2 * HIDDEN_DIM * 4)
    return pl.CostEstimate(flops=int(flops), transcendentals=int(transc),
                           bytes_accessed=int(byts))


# ---------------- parameter init (deterministic, synthetic) ---------------------
def _dense(key, fan_in, fan_out, scale=0.05):
    return scale * jax.random.normal(key, (fan_in, fan_out), jnp.float32)


def init_cell_params(key, d_model, n_head, d_k, d_v, d_inner):
    ks = jax.random.split(key, 6)
    return dict(
        wq=_dense(ks[0], d_model, n_head * d_k), bq=jnp.zeros((1, n_head * d_k), jnp.float32),
        wk=_dense(ks[1], d_model, n_head * d_k), bk=jnp.zeros((1, n_head * d_k), jnp.float32),
        wv=_dense(ks[2], d_model, n_head * d_v), bv=jnp.zeros((1, n_head * d_v), jnp.float32),
        wf=_dense(ks[3], n_head * d_v, d_model), bf=jnp.zeros((1, d_model), jnp.float32),
        g1=jnp.ones((1, d_model), jnp.float32), be1=jnp.zeros((1, d_model), jnp.float32),
        w1=_dense(ks[4], d_model, d_inner), b1=jnp.zeros((1, d_inner), jnp.float32),
        w2=_dense(ks[5], d_inner, d_model), b2=jnp.zeros((1, d_model), jnp.float32),
        g2=jnp.ones((1, d_model), jnp.float32), be2=jnp.zeros((1, d_model), jnp.float32),
    )


def init_params(key):
    ks = jax.random.split(key, 10)
    p = {}
    # obj_edge_vectors (GloVe) replaced by deterministic random embeddings (synthetic).
    p['obj_embed1'] = 0.1 * jax.random.normal(ks[0], (NUM_OBJ_CLS, EMBED_DIM), jnp.float32)
    p['obj_embed2'] = 0.1 * jax.random.normal(ks[1], (NUM_OBJ_CLS, EMBED_DIM), jnp.float32)
    p['bbox_w1'] = _dense(ks[2], 9, 32);   p['bbox_b1'] = jnp.zeros((1, 32), jnp.float32)
    p['bbox_w2'] = _dense(ks[3], 32, 128); p['bbox_b2'] = jnp.zeros((1, 128), jnp.float32)
    p['lin_obj_vis_w'] = _dense(ks[4], IN_CHANNELS + 128, HIDDEN_DIM)
    p['lin_obj_vis_b'] = jnp.zeros((1, HIDDEN_DIM), jnp.float32)
    p['lin_obj_txt_w'] = _dense(ks[5], EMBED_DIM, HIDDEN_DIM)
    p['lin_obj_txt_b'] = jnp.zeros((1, HIDDEN_DIM), jnp.float32)
    p['lin_edge_vis_w'] = _dense(ks[6], IN_CHANNELS + HIDDEN_DIM, HIDDEN_DIM)
    p['lin_edge_vis_b'] = jnp.zeros((1, HIDDEN_DIM), jnp.float32)
    p['lin_edge_txt_w'] = _dense(ks[7], EMBED_DIM, HIDDEN_DIM)
    p['lin_edge_txt_b'] = jnp.zeros((1, HIDDEN_DIM), jnp.float32)

    def make_layers(base_key, n_layers):
        layers = []
        for i in range(n_layers):
            k_txt, k_vis = jax.random.split(jax.random.fold_in(base_key, i))
            layers.append(dict(
                txt=init_cell_params(k_txt, HIDDEN_DIM, NUM_HEAD, K_DIM, V_DIM, INNER_DIM),
                vis=init_cell_params(k_vis, HIDDEN_DIM, NUM_HEAD, K_DIM, V_DIM, INNER_DIM)))
        return layers

    p['context_obj'] = make_layers(ks[8], OBJ_LAYER)
    p['context_edge'] = make_layers(ks[9], EDGE_LAYER)
    # out_obj is only used when obj_decode=True (sgdet); not needed on this path.
    return p


# ---------------- glue ---------------------------------------------------------------
def to_onehot(labels, num_classes, fill=ONEHOT_FILL):
    oh = jax.nn.one_hot(labels, num_classes, dtype=jnp.float32)
    return oh * (2.0 * fill) - fill           # fill at label, -fill elsewhere


# ---------------- CA_Context forward (predcls / obj_decode=False, eval) ---------------
def ca_context_forward(roi_features, obj_labels, box_info9, num_objs, params):
    # TODO(synk): encode_box_info(proposals) needs BoxList geometry bookkeeping;
    # the 9-dim box encoding is taken directly as an input here.
    # TODO(synk): obj_decode=True branch (out_obj logits + nms_per_cls) not implemented.
    # TODO(synk): num_images and the per-image bucket are static per call shape; a
    # production version would bucket num_images as well to bound recompiles.
    num_objs = [int(x) for x in num_objs]
    n = roi_features.shape[0]
    assert n == sum(num_objs)
    num_img = len(num_objs)
    bucket = max(16, ((max(num_objs) + 15) // 16) * 16)      # bf16 sublane multiple

    emb1 = jnp.take(params['obj_embed1'], obj_labels, axis=0)   # obj_embed1(labels)
    emb2 = jnp.take(params['obj_embed2'], obj_labels, axis=0)   # obj_embed2(labels)

    # one lane-packed data slab: [roi | box9(padded) | emb1 | emb2 | 0], per-image bucketed
    feat = jnp.concatenate(
        [roi_features,
         jnp.pad(box_info9, ((0, 0), (0, _EMB1_OFF - _BOX_OFF - box_info9.shape[1]))),
         emb1, emb2], axis=-1)
    feat = jnp.pad(feat, ((0, 0), (0, _DATA_LANES - feat.shape[1])))
    parts, start = [], 0
    for nn in num_objs:
        parts.append(jnp.pad(feat[start:start + nn], ((0, bucket - nn), (0, 0))))
        start += nn
    data_slab = jnp.concatenate(parts, axis=0).astype(jnp.bfloat16)

    w_slab, w_offs, b_slab, b_offs = prepare_slabs(params)
    lens = jnp.asarray(num_objs, jnp.int32)

    kernel = _make_kernel(w_offs, b_offs, bucket, OBJ_LAYER, EDGE_LAYER)

    fused = pl.pallas_call(
        kernel,
        out_shape=jax.ShapeDtypeStruct((num_img * bucket, 2 * HIDDEN_DIM), jnp.float32),
        grid_spec=pltpu.PrefetchScalarGridSpec(
            num_scalar_prefetch=1,                           # lens -> SMEM
            grid=(num_img,),
            in_specs=[
                pl.BlockSpec((bucket, _DATA_LANES), lambda i, _lens: (i, 0)),
                pl.BlockSpec(tuple(w_slab.shape), lambda i, _lens: (0, 0)),   # resident
                pl.BlockSpec(tuple(b_slab.shape), lambda i, _lens: (0, 0)),   # resident
            ],
            out_specs=pl.BlockSpec((bucket, 2 * HIDDEN_DIM), lambda i, _lens: (i, 0)),
        ),
        compiler_params=pltpu.CompilerParams(
            dimension_semantics=("parallel",),               # image split across TCs (v7x)
            vmem_limit_bytes=32 * 1024 * 1024),
        cost_estimate=_cost_estimate(bucket, num_img, data_slab, w_slab, b_slab),
    )(lens, data_slab, w_slab, b_slab)

    rows = [fused[i * bucket: i * bucket + nn, :HIDDEN_DIM]
            for i, nn in enumerate(num_objs)]
    edge_ctx = jnp.concatenate(rows, axis=0)
    obj_preds = obj_labels
    obj_dists = to_onehot(obj_labels, NUM_OBJ_CLS)
    return obj_dists, obj_preds, edge_ctx, None


# ---------------- pure-JAX f32 reference (per-image, mirrors the PyTorch path) -------
def _ref_ln(x, g, b):
    mu = jnp.mean(x, axis=-1, keepdims=True)
    var = jnp.mean((x - mu) ** 2, axis=-1, keepdims=True)
    return (x - mu) / jnp.sqrt(var + LN_EPS) * g + b


def _ref_cell(x, y, cp):
    scale = 1.0 / float(np.sqrt(K_DIM))
    q = x @ cp['wq'] + cp['bq']
    k = y @ cp['wk'] + cp['bk']
    v = y @ cp['wv'] + cp['bv']
    heads = []
    for h in range(NUM_HEAD):
        qh = q[:, h * K_DIM:(h + 1) * K_DIM]
        kh = k[:, h * K_DIM:(h + 1) * K_DIM]
        vh = v[:, h * V_DIM:(h + 1) * V_DIM]
        heads.append(jax.nn.softmax((qh @ kh.T) * scale, axis=-1) @ vh)
    a = jnp.concatenate(heads, axis=-1) @ cp['wf'] + cp['bf']
    o = _ref_ln(a + x, cp['g1'], cp['be1'])
    h1 = jnp.maximum(o @ cp['w1'] + cp['b1'], 0.0)
    return _ref_ln(h1 @ cp['w2'] + cp['b2'] + o, cp['g2'], cp['be2'])


def _ref_stage(vis, txt, layers, num_objs):
    outs, start = [], 0
    for n in num_objs:
        v_i, t_i = vis[start:start + n], txt[start:start + n]
        for layer in layers:
            t_new = _ref_cell(t_i, v_i, layer['txt'])
            v_new = _ref_cell(v_i, t_i, layer['vis'])
            v_i, t_i = v_new, t_new
        outs.append(v_i)
        start += n
    return jnp.concatenate(outs, axis=0)


def reference_edge_ctx(roi, labels, box9, num_objs, params):
    emb1 = params['obj_embed1'][labels]
    emb2 = params['obj_embed2'][labels]
    pos = jnp.maximum(box9 @ params['bbox_w1'] + params['bbox_b1'], 0.0)
    pos = jnp.maximum(pos @ params['bbox_w2'] + params['bbox_b2'], 0.0)
    vis = jnp.concatenate([roi, pos], -1) @ params['lin_obj_vis_w'] + params['lin_obj_vis_b']
    txt = emb1 @ params['lin_obj_txt_w'] + params['lin_obj_txt_b']
    obj_feats = _ref_stage(vis, txt, params['context_obj'], num_objs)
    evis = jnp.concatenate([roi, obj_feats], -1) @ params['lin_edge_vis_w'] + params['lin_edge_vis_b']
    etxt = emb2 @ params['lin_edge_txt_w'] + params['lin_edge_txt_b']
    return _ref_stage(evis, etxt, params['context_edge'], num_objs)


# ---------------- main -----------------------------------------------------------------
if __name__ == "__main__":
    key = jax.random.PRNGKey(0)
    k_roi, k_box, k_lab, k_par = jax.random.split(key, 4)

    num_objs = [5, 4]                 # two "images", 5 and 4 proposals
    n_total = sum(num_objs)

    roi_features = jax.random.normal(k_roi, (n_total, IN_CHANNELS), jnp.float32)
    box_info9 = jax.random.uniform(k_box, (n_total, 9), jnp.float32)
    obj_labels = jax.random.randint(k_lab, (n_total,), 0, NUM_OBJ_CLS)

    params = init_params(k_par)

    obj_dists, obj_preds, edge_ctx, _ = ca_context_forward(
        roi_features, obj_labels, box_info9, num_objs, params)
    jax.block_until_ready(edge_ctx)

    assert obj_dists.shape == (n_total, NUM_OBJ_CLS)
    assert obj_preds.shape == (n_total,)
    assert edge_ctx.shape == (n_total, HIDDEN_DIM)
    assert bool(jnp.all(jnp.isfinite(obj_dists)))
    assert bool(jnp.all(jnp.isfinite(edge_ctx)))

    # f32 reference; kernel uses bf16 MXU operands (f32 accumulation), so the
    # tolerance is widened vs. a pure-f32 kernel.
    ref = reference_edge_ctx(roi_features, obj_labels, box_info9, num_objs, params)
    err = float(jnp.max(jnp.abs(edge_ctx - ref)))
    assert err < 6e-2, f"max |kernel - reference| = {err}"

    print("KERNEL_OK")
</pallas_src>

<mosaic_0001>
module attributes {stable_mosaic.version = 11 : i64} {
  func.func @kernel(%arg0: i32, %arg1: memref<2xi32, #tpu.memory_space<smem>>, %arg2: memref<16x128xbf16, #tpu.memory_space<vmem>>, %arg3: memref<2016x128xbf16, #tpu.memory_space<vmem>>, %arg4: memref<40x128xf32, #tpu.memory_space<vmem>>, %arg5: memref<16x128xf32, #tpu.memory_space<vmem>>) attributes {dimension_semantics = [#tpu.dimension_semantics<parallel>], iteration_bounds = array<i64: 2>, scalar_prefetch = 1 : i64, scratch_operands = 0 : i64, tpu.core_type = #tpu.core_type<tc>, window_params = [{transform_indices = @transform_0, window_bounds = array<i64: 16, 128>}, {pipeline_mode = #tpu.pipeline_mode<synchronous>, transform_indices = @transform_1, window_bounds = array<i64: 2016, 128>}, {pipeline_mode = #tpu.pipeline_mode<synchronous>, transform_indices = @transform_2, window_bounds = array<i64: 40, 128>}, {transform_indices = @transform_3, window_bounds = array<i64: 16, 128>}]} {
    %0 = arith.index_cast %arg0 : i32 to index
    %1 = memref.load %arg1[%0] : memref<2xi32, #tpu.memory_space<smem>>
    %2 = tpu.iota {dimensions = array<i32: 1>} : vector<16x16xi32>
    %3 = vector.broadcast %1 : i32 to vector<16x16xi32>
    %4 = arith.cmpi slt, %2, %3 : vector<16x16xi32>
    %cst = arith.constant 0.000000e+00 : f32
    %cst_0 = arith.constant -1.000000e+09 : f32
    %5 = vector.broadcast %cst : f32 to vector<16x16xf32>
    %6 = vector.broadcast %cst_0 : f32 to vector<16x16xf32>
    %7 = arith.select %4, %5, %6 : vector<16x16xi1>, vector<16x16xf32>
    %c0 = arith.constant 0 : index
    %c0_1 = arith.constant 0 : index
    %8 = vector.load %arg2[%c0, %c0_1] : memref<16x128xbf16, #tpu.memory_space<vmem>>, vector<16x128xbf16>
    %c0_2 = arith.constant 0 : index
    %c0_3 = arith.constant 0 : index
    %9 = vector.load %arg3[%c0_2, %c0_3] : memref<2016x128xbf16, #tpu.memory_space<vmem>>, vector<128x32xbf16>
    %cst_4 = arith.constant dense<0.000000e+00> : vector<16x32xf32>
    %10 = tpu.matmul %8, %9, %cst_4 {dimension_numbers = #tpu.dot_dimension_numbers<[1], [0], [0], [1], [0, 0, 1, 1], [], []>} : vector<16x128xbf16>, vector<128x32xbf16>, vector<16x32xf32> -> vector<16x32xf32>
    %c0_5 = arith.constant 0 : index
    %c0_6 = arith.constant 0 : index
    %11 = vector.load %arg4[%c0_5, %c0_6] : memref<40x128xf32, #tpu.memory_space<vmem>>, vector<1x32xf32>
    %12 = vector.broadcast %11 : vector<1x32xf32> to vector<16x32xf32>
    %13 = arith.addf %10, %12 : vector<16x32xf32>
    %cst_7 = arith.constant 0.000000e+00 : f32
    %14 = vector.broadcast %cst_7 : f32 to vector<16x32xf32>
    %15 = arith.maximumf %13, %14 : vector<16x32xf32>
    %16 = arith.truncf %15 : vector<16x32xf32> to vector<16x32xbf16>
    %c128 = arith.constant 128 : index
    %c0_8 = arith.constant 0 : index
    %17 = vector.load %arg3[%c128, %c0_8] : memref<2016x128xbf16, #tpu.memory_space<vmem>>, vector<32x128xbf16>
    %cst_9 = arith.constant dense<0.000000e+00> : vector<16x128xf32>
    %18 = tpu.matmul %16, %17, %cst_9 {dimension_numbers = #tpu.dot_dimension_numbers<[1], [0], [0], [1], [0, 0, 1, 1], [], []>} : vector<16x32xbf16>, vector<32x128xbf16>, vector<16x128xf32> -> vector<16x128xf32>
    %c1 = arith.constant 1 : index
    %c0_10 = arith.constant 0 : index
    %19 = vector.load %arg4[%c1, %c0_10] : memref<40x128xf32, #tpu.memory_space<vmem>>, vector<1x128xf32>
    %20 = vector.broadcast %19 : vector<1x128xf32> to vector<16x128xf32>
    %21 = arith.addf %18, %20 : vector<16x128xf32>
    %cst_11 = arith.constant 0.000000e+00 : f32
    %22 = vector.broadcast %cst_11 : f32 to vector<16x128xf32>
    %23 = arith.maximumf %21, %22 : vector<16x128xf32>
    %c160 = arith.constant 160 : index
    %c0_12 = arith.constant 0 : index
    %24 = vector.load %arg3[%c160, %c0_12] : memref<2016x128xbf16, #tpu.memory_space<vmem>>, vector<128x64xbf16>
    %cst_13 = arith.constant dense<0.000000e+00> : vector<16x64xf32>
    %25 = tpu.matmul %8, %24, %cst_13 {dimension_numbers = #tpu.dot_dimension_numbers<[1], [0], [0], [1], [0, 0, 1, 1], [], []>} : vector<16x128xbf16>, vector<128x64xbf16>, vector<16x64xf32> -> vector<16x64xf32>
    %26 = arith.truncf %23 : vector<16x128xf32> to vector<16x128xbf16>
    %c288 = arith.constant 288 : index
    %c0_14 = arith.constant 0 : index
    %27 = vector.load %arg3[%c288, %c0_14] : memref<2016x128xbf16, #tpu.memory_space<vmem>>, vector<128x64xbf16>
    %cst_15 = arith.constant dense<0.000000e+00> : vector<16x64xf32>
    %28 = tpu.matmul %26, %27, %cst_15 {dimension_numbers = #tpu.dot_dimension_numbers<[1], [0], [0], [1], [0, 0, 1, 1], [], []>} : vector<16x128xbf16>, vector<128x64xbf16>, vector<16x64xf32> -> vector<16x64xf32>
    %29 = arith.addf %25, %28 : vector<16x64xf32>
    %c2 = arith.constant 2 : index
    %c0_16 = arith.constant 0 : index
    %30 = vector.load %arg4[%c2, %c0_16] : memref<40x128xf32, #tpu.memory_space<vmem>>, vector<1x64xf32>
    %31 = vector.broadcast %30 : vector<1x64xf32> to vector<16x64xf32>
    %32 = arith.addf %29, %31 : vector<16x64xf32>
    %c416 = arith.constant 416 : index
    %c0_17 = arith.constant 0 : index
    %33 = vector.load %arg3[%c416, %c0_17] : memref<2016x128xbf16, #tpu.memory_space<vmem>>, vector<128x64xbf16>
    %cst_18 = arith.constant dense<0.000000e+00> : vector<16x64xf32>
    %34 = tpu.matmul %8, %33, %cst_18 {dimension_numbers = #tpu.dot_dimension_numbers<[1], [0], [0], [1], [0, 0, 1, 1], [], []>} : vector<16x128xbf16>, vector<128x64xbf16>, vector<16x64xf32> -> vector<16x64xf32>
    %c3 = arith.constant 3 : index
    %c0_19 = arith.constant 0 : index
    %35 = vector.load %arg4[%c3, %c0_19] : memref<40x128xf32, #tpu.memory_space<vmem>>, vector<1x64xf32>
    %36 = vector.broadcast %35 : vector<1x64xf32> to vector<16x64xf32>
    %37 = arith.addf %34, %36 : vector<16x64xf32>
    %38 = arith.truncf %32 : vector<16x64xf32> to vector<16x64xbf16>
    %c864 = arith.constant 864 : index
    %c0_20 = arith.constant 0 : index
    %39 = vector.load %arg3[%c864, %c0_20] : memref<2016x128xbf16, #tpu.memory_space<vmem>>, vector<64x96xbf16>
    %cst_21 = arith.constant dense<0.000000e+00> : vector<16x96xf32>
    %40 = tpu.matmul %38, %39, %cst_21 {dimension_numbers = #tpu.dot_dimension_numbers<[1], [0], [0], [1], [0, 0, 1, 1], [], []>} : vector<16x64xbf16>, vector<64x96xbf16>, vector<16x96xf32> -> vector<16x96xf32>
    %c6 = arith.constant 6 : index
    %c0_22 = arith.constant 0 : index
    %41 = vector.load %arg4[%c6, %c0_22] : memref<40x128xf32, #tpu.memory_space<vmem>>, vector<1x96xf32>
    %42 = vector.broadcast %41 : vector<1x96xf32> to vector<16x96xf32>
    %43 = arith.addf %40, %42 : vector<16x96xf32>
    %44 = arith.truncf %43 : vector<16x96xf32> to vector<16x96xbf16>
    %45 = arith.truncf %37 : vector<16x64xf32> to vector<16x64xbf16>
    %c928 = arith.constant 928 : index
    %c0_23 = arith.constant 0 : index
    %46 = vector.load %arg3[%c928, %c0_23] : memref<2016x128xbf16, #tpu.memory_space<vmem>>, vector<64x96xbf16>
    %cst_24 = arith.constant dense<0.000000e+00> : vector<16x96xf32>
    %47 = tpu.matmul %45, %46, %cst_24 {dimension_numbers = #tpu.dot_dimension_numbers<[1], [0], [0], [1], [0, 0, 1, 1], [], []>} : vector<16x64xbf16>, vector<64x96xbf16>, vector<16x96xf32> -> vector<16x96xf32>
    %c7 = arith.constant 7 : index
    %c0_25 = arith.constant 0 : index
    %48 = vector.load %arg4[%c7, %c0_25] : memref<40x128xf32, #tpu.memory_space<vmem>>, vector<1x96xf32>
    %49 = vector.broadcast %48 : vector<1x96xf32> to vector<16x96xf32>
    %50 = arith.addf %47, %49 : vector<16x96xf32>
    %51 = arith.truncf %50 : vector<16x96xf32> to vector<16x96xbf16>
    %52 = vector.extract_strided_slice %44 {offsets = [0, 0], sizes = [16, 32], strides = [1, 1]} : vector<16x96xbf16> to vector<16x32xbf16>
    %53 = vector.extract_strided_slice %51 {offsets = [0, 32], sizes = [16, 32], strides = [1, 1]} : vector<16x96xbf16> to vector<16x32xbf16>
    %54 = vector.extract_strided_slice %51 {offsets = [0, 64], sizes = [16, 32], strides = [1, 1]} : vector<16x96xbf16> to vector<16x32xbf16>
    %55 = vector.extract_strided_slice %52 {offsets = [0, 0], sizes = [16, 16], strides = [1, 1]} : vector<16x32xbf16> to vector<16x16xbf16>
    %56 = vector.extract_strided_slice %53 {offsets = [0, 0], sizes = [16, 16], strides = [1, 1]} : vector<16x32xbf16> to vector<16x16xbf16>
    %57 = vector.extract_strided_slice %54 {offsets = [0, 0], sizes = [16, 16], strides = [1, 1]} : vector<16x32xbf16> to vector<16x16xbf16>
    %cst_26 = arith.constant dense<0.000000e+00> : vector<16x16xf32>
    %58 = tpu.matmul %55, %56, %cst_26 {dimension_numbers = #tpu.dot_dimension_numbers<[1], [1], [0], [0], [0, 0, 1, 0], [], []>} : vector<16x16xbf16>, vector<16x16xbf16>, vector<16x16xf32> -> vector<16x16xf32>
    %59 = arith.addf %58, %7 : vector<16x16xf32>
    %cst_27 = arith.constant dense<0xFF800000> : vector<16xf32>
    %60 = vector.multi_reduction <maximumf>, %59, %cst_27 [1] : vector<16x16xf32> to vector<16xf32>
    %61 = vector.shape_cast %60 : vector<16xf32> to vector<16x1xf32>
    %62 = vector.broadcast %61 : vector<16x1xf32> to vector<16x16xf32>
    %63 = arith.subf %59, %62 : vector<16x16xf32>
    %64 = math.exp %63 : vector<16x16xf32>
    %cst_28 = arith.constant dense<0.000000e+00> : vector<16xf32>
    %65 = vector.multi_reduction <add>, %64, %cst_28 [1] : vector<16x16xf32> to vector<16xf32>
    %66 = vector.shape_cast %65 : vector<16xf32> to vector<16x1xf32>
    %67 = tpu.reciprocal %66 : vector<16x1xf32> -> vector<16x1xf32>
    %68 = vector.broadcast %67 : vector<16x1xf32> to vector<16x16xf32>
    %69 = arith.mulf %64, %68 : vector<16x16xf32>
    %70 = arith.truncf %69 : vector<16x16xf32> to vector<16x16xbf16>
    %cst_29 = arith.constant dense<0.000000e+00> : vector<16x16xf32>
    %71 = tpu.matmul %70, %57, %cst_29 {dimension_numbers = #tpu.dot_dimension_numbers<[1], [0], [0], [1], [0, 0, 1, 1], [], []>} : vector<16x16xbf16>, vector<16x16xbf16>, vector<16x16xf32> -> vector<16x16xf32>
    %72 = vector.extract_strided_slice %52 {offsets = [0, 16], sizes = [16, 16], strides = [1, 1]} : vector<16x32xbf16> to vector<16x16xbf16>
    %73 = vector.extract_strided_slice %53 {offsets = [0, 16], sizes = [16, 16], strides = [1, 1]} : vector<16x32xbf16> to vector<16x16xbf16>
    %74 = vector.extract_strided_slice %54 {offsets = [0, 16], sizes = [16, 16], strides = [1, 1]} : vector<16x32xbf16> to vector<16x16xbf16>
    %cst_30 = arith.constant dense<0.000000e+00> : vector<16x16xf32>
    %75 = tpu.matmul %72, %73, %cst_30 {dimension_numbers = #tpu.dot_dimension_numbers<[1], [1], [0], [0], [0, 0, 1, 0], [], []>} : vector<16x16xbf16>, vector<16x16xbf16>, vector<16x16xf32> -> vector<16x16xf32>
    %76 = arith.addf %75, %7 : vector<16x16xf32>
    %cst_31 = arith.constant dense<0xFF800000> : vector<16xf32>
    %77 = vector.multi_reduction <maximumf>, %76, %cst_31 [1] : vector<16x16xf32> to vector<16xf32>
    %78 = vector.shape_cast %77 : vector<16xf32> to vector<16x1xf32>
    %79 = vector.broadcast %78 : vector<16x1xf32> to vector<16x16xf32>
    %80 = arith.subf %76, %79 : vector<16x16xf32>
    %81 = math.exp %80 : vector<16x16xf32>
    %cst_32 = arith.constant dense<0.000000e+00> : vector<16xf32>
    %82 = vector.multi_reduction <add>, %81, %cst_32 [1] : vector<16x16xf32> to vector<16xf32>
    %83 = vector.shape_cast %82 : vector<16xf32> to vector<16x1xf32>
    %84 = tpu.reciprocal %83 : vector<16x1xf32> -> vector<16x1xf32>
    %85 = vector.broadcast %84 : vector<16x1xf32> to vector<16x16xf32>
    %86 = arith.mulf %81, %85 : vector<16x16xf32>
    %87 = arith.truncf %86 : vector<16x16xf32> to vector<16x16xbf16>
    %cst_33 = arith.constant dense<0.000000e+00> : vector<16x16xf32>
    %88 = tpu.matmul %87, %74, %cst_33 {dimension_numbers = #tpu.dot_dimension_numbers<[1], [0], [0], [1], [0, 0, 1, 1], [], []>} : vector<16x16xbf16>, vector<16x16xbf16>, vector<16x16xf32> -> vector<16x16xf32>
    %89 = tpu.concatenate %71, %88 in 1 : vector<16x16xf32>, vector<16x16xf32> -> vector<16x32xf32>
    %90 = arith.truncf %89 : vector<16x32xf32> to vector<16x32xbf16>
    %c1216 = arith.constant 1216 : index
    %c0_34 = arith.constant 0 : index
    %91 = vector.load %arg3[%c1216, %c0_34] : memref<2016x128xbf16, #tpu.memory_space<vmem>>, vector<32x64xbf16>
    %cst_35 = arith.constant dense<0.000000e+00> : vector<16x64xf32>
    %92 = tpu.matmul %90, %91, %cst_35 {dimension_numbers = #tpu.dot_dimension_numbers<[1], [0], [0], [1], [0, 0, 1, 1], [], []>} : vector<16x32xbf16>, vector<32x64xbf16>, vector<16x64xf32> -> vector<16x64xf32>
    %c15 = arith.constant 15 : index
    %c0_36 = arith.constant 0 : index
    %93 = vector.load %arg4[%c15, %c0_36] : memref<40x128xf32, #tpu.memory_space<vmem>>, vector<1x64xf32>
    %94 = vector.broadcast %93 : vector<1x64xf32> to vector<16x64xf32>
    %95 = arith.addf %92, %94 : vector<16x64xf32>
    %96 = arith.addf %95, %32 : vector<16x64xf32>
    %cst_37 = arith.constant dense<0.000000e+00> : vector<16xf32>
    %97 = vector.multi_reduction <add>, %96, %cst_37 [1] : vector<16x64xf32> to vector<16xf32>
    %98 = vector.shape_cast %97 : vector<16xf32> to vector<16x1xf32>
    %cst_38 = arith.constant 6.400000e+01 : f32
    %99 = vector.broadcast %cst_38 : f32 to vector<16x1xf32>
    %100 = arith.divf %98, %99 : vector<16x1xf32>
    %101 = vector.broadcast %100 : vector<16x1xf32> to vector<16x64xf32>
    %102 = arith.subf %96, %101 : vector<16x64xf32>
    %103 = arith.mulf %102, %102 : vector<16x64xf32>
    %cst_39 = arith.constant dense<0.000000e+00> : vector<16xf32>
    %104 = vector.multi_reduction <add>, %103, %cst_39 [1] : vector<16x64xf32> to vector<16xf32>
    %105 = vector.shape_cast %104 : vector<16xf32> to vector<16x1xf32>
    %cst_40 = arith.constant 6.400000e+01 : f32
    %106 = vector.broadcast %cst_40 : f32 to vector<16x1xf32>
    %107 = arith.divf %105, %106 : vector<16x1xf32>
    %108 = vector.broadcast %100 : vector<16x1xf32> to vector<16x64xf32>
    %109 = arith.subf %96, %108 : vector<16x64xf32>
    %cst_41 = arith.constant 9.99999974E-6 : f32
    %110 = vector.broadcast %cst_41 : f32 to vector<16x1xf32>
    %111 = arith.addf %107, %110 : vector<16x1xf32>
    %112 = math.rsqrt %111 : vector<16x1xf32>
    %113 = vector.broadcast %112 : vector<16x1xf32> to vector<16x64xf32>
    %114 = arith.mulf %109, %113 : vector<16x64xf32>
    %c16 = arith.constant 16 : index
    %c0_42 = arith.constant 0 : index
    %115 = vector.load %arg4[%c16, %c0_42] : memref<40x128xf32, #tpu.memory_space<vmem>>, vector<1x64xf32>
    %116 = vector.broadcast %115 : vector<1x64xf32> to vector<16x64xf32>
    %117 = arith.mulf %114, %116 : vector<16x64xf32>
    %c17 = arith.constant 17 : index
    %c0_43 = arith.constant 0 : index
    %118 = vector.load %arg4[%c17, %c0_43] : memref<40x128xf32, #tpu.memory_space<vmem>>, vector<1x64xf32>
    %119 = vector.broadcast %118 : vector<1x64xf32> to vector<16x64xf32>
    %120 = arith.addf %117, %119 : vector<16x64xf32>
    %121 = arith.truncf %120 : vector<16x64xf32> to vector<16x64xbf16>
    %c1248 = arith.constant 1248 : index
    %c0_44 = arith.constant 0 : index
    %122 = vector.load %arg3[%c1248, %c0_44] : memref<2016x128xbf16, #tpu.memory_space<vmem>>, vector<64x128xbf16>
    %cst_45 = arith.constant dense<0.000000e+00> : vector<16x128xf32>
    %123 = tpu.matmul %121, %122, %cst_45 {dimension_numbers = #tpu.dot_dimension_numbers<[1], [0], [0], [1], [0, 0, 1, 1], [], []>} : vector<16x64xbf16>, vector<64x128xbf16>, vector<16x128xf32> -> vector<16x128xf32>
    %c18 = arith.constant 18 : index
    %c0_46 = arith.constant 0 : index
    %124 = vector.load %arg4[%c18, %c0_46] : memref<40x128xf32, #tpu.memory_space<vmem>>, vector<1x128xf32>
    %125 = vector.broadcast %124 : vector<1x128xf32> to vector<16x128xf32>
    %126 = arith.addf %123, %125 : vector<16x128xf32>
    %cst_47 = arith.constant 0.000000e+00 : f32
    %127 = vector.broadcast %cst_47 : f32 to vector<16x128xf32>
    %128 = arith.maximumf %126, %127 : vector<16x128xf32>
    %129 = arith.truncf %128 : vector<16x128xf32> to vector<16x128xbf16>
    %c1312 = arith.constant 1312 : index
    %c0_48 = arith.constant 0 : index
    %130 = vector.load %arg3[%c1312, %c0_48] : memref<2016x128xbf16, #tpu.memory_space<vmem>>, vector<128x64xbf16>
    %cst_49 = arith.constant dense<0.000000e+00> : vector<16x64xf32>
    %131 = tpu.matmul %129, %130, %cst_49 {dimension_numbers = #tpu.dot_dimension_numbers<[1], [0], [0], [1], [0, 0, 1, 1], [], []>} : vector<16x128xbf16>, vector<128x64xbf16>, vector<16x64xf32> -> vector<16x64xf32>
    %c19 = arith.constant 19 : index
    %c0_50 = arith.constant 0 : index
    %132 = vector.load %arg4[%c19, %c0_50] : memref<40x128xf32, #tpu.memory_space<vmem>>, vector<1x64xf32>
    %133 = vector.broadcast %132 : vector<1x64xf32> to vector<16x64xf32>
    %134 = arith.addf %131, %133 : vector<16x64xf32>
    %135 = arith.addf %134, %120 : vector<16x64xf32>
    %cst_51 = arith.constant dense<0.000000e+00> : vector<16xf32>
    %136 = vector.multi_reduction <add>, %135, %cst_51 [1] : vector<16x64xf32> to vector<16xf32>
    %137 = vector.shape_cast %136 : vector<16xf32> to vector<16x1xf32>
    %cst_52 = arith.constant 6.400000e+01 : f32
    %138 = vector.broadcast %cst_52 : f32 to vector<16x1xf32>
    %139 = arith.divf %137, %138 : vector<16x1xf32>
    %140 = vector.broadcast %139 : vector<16x1xf32> to vector<16x64xf32>
    %141 = arith.subf %135, %140 : vector<16x64xf32>
    %142 = arith.mulf %141, %141 : vector<16x64xf32>
    %cst_53 = arith.constant dense<0.000000e+00> : vector<16xf32>
    %143 = vector.multi_reduction <add>, %142, %cst_53 [1] : vector<16x64xf32> to vector<16xf32>
    %144 = vector.shape_cast %143 : vector<16xf32> to vector<16x1xf32>
    %cst_54 = arith.constant 6.400000e+01 : f32
    %145 = vector.broadcast %cst_54 : f32 to vector<16x1xf32>
    %146 = arith.divf %144, %145 : vector<16x1xf32>
    %147 = vector.broadcast %139 : vector<16x1xf32> to vector<16x64xf32>
    %148 = arith.subf %135, %147 : vector<16x64xf32>
    %cst_55 = arith.constant 9.99999974E-6 : f32
    %149 = vector.broadcast %cst_55 : f32 to vector<16x1xf32>
    %150 = arith.addf %146, %149 : vector<16x1xf32>
    %151 = math.rsqrt %150 : vector<16x1xf32>
    %152 = vector.broadcast %151 : vector<16x1xf32> to vector<16x64xf32>
    %153 = arith.mulf %148, %152 : vector<16x64xf32>
    %c20 = arith.constant 20 : index
    %c0_56 = arith.constant 0 : index
    %154 = vector.load %arg4[%c20, %c0_56] : memref<40x128xf32, #tpu.memory_space<vmem>>, vector<1x64xf32>
    %155 = vector.broadcast %154 : vector<1x64xf32> to vector<16x64xf32>
    %156 = arith.mulf %153, %155 : vector<16x64xf32>
    %c21 = arith.constant 21 : index
    %c0_57 = arith.constant 0 : index
    %157 = vector.load %arg4[%c21, %c0_57] : memref<40x128xf32, #tpu.memory_space<vmem>>, vector<1x64xf32>
    %158 = vector.broadcast %157 : vector<1x64xf32> to vector<16x64xf32>
    %159 = arith.addf %156, %158 : vector<16x64xf32>
    %c544 = arith.constant 544 : index
    %c0_58 = arith.constant 0 : index
    %160 = vector.load %arg3[%c544, %c0_58] : memref<2016x128xbf16, #tpu.memory_space<vmem>>, vector<128x64xbf16>
    %cst_59 = arith.constant dense<0.000000e+00> : vector<16x64xf32>
    %161 = tpu.matmul %8, %160, %cst_59 {dimension_numbers = #tpu.dot_dimension_numbers<[1], [0], [0], [1], [0, 0, 1, 1], [], []>} : vector<16x128xbf16>, vector<128x64xbf16>, vector<16x64xf32> -> vector<16x64xf32>
    %162 = arith.truncf %159 : vector<16x64xf32> to vector<16x64xbf16>
    %c672 = arith.constant 672 : index
    %c0_60 = arith.constant 0 : index
    %163 = vector.load %arg3[%c672, %c0_60] : memref<2016x128xbf16, #tpu.memory_space<vmem>>, vector<64x64xbf16>
    %cst_61 = arith.constant dense<0.000000e+00> : vector<16x64xf32>
    %164 = tpu.matmul %162, %163, %cst_61 {dimension_numbers = #tpu.dot_dimension_numbers<[1], [0], [0], [1], [0, 0, 1, 1], [], []>} : vector<16x64xbf16>, vector<64x64xbf16>, vector<16x64xf32> -> vector<16x64xf32>
    %165 = arith.addf %161, %164 : vector<16x64xf32>
    %c4 = arith.constant 4 : index
    %c0_62 = arith.constant 0 : index
    %166 = vector.load %arg4[%c4, %c0_62] : memref<40x128xf32, #tpu.memory_space<vmem>>, vector<1x64xf32>
    %167 = vector.broadcast %166 : vector<1x64xf32> to vector<16x64xf32>
    %168 = arith.addf %165, %167 : vector<16x64xf32>
    %c736 = arith.constant 736 : index
    %c0_63 = arith.constant 0 : index
    %169 = vector.load %arg3[%c736, %c0_63] : memref<2016x128xbf16, #tpu.memory_space<vmem>>, vector<128x64xbf16>
    %cst_64 = arith.constant dense<0.000000e+00> : vector<16x64xf32>
    %170 = tpu.matmul %8, %169, %cst_64 {dimension_numbers = #tpu.dot_dimension_numbers<[1], [0], [0], [1], [0, 0, 1, 1], [], []>} : vector<16x128xbf16>, vector<128x64xbf16>, vector<16x64xf32> -> vector<16x64xf32>
    %c5 = arith.constant 5 : index
    %c0_65 = arith.constant 0 : index
    %171 = vector.load %arg4[%c5, %c0_65] : memref<40x128xf32, #tpu.memory_space<vmem>>, vector<1x64xf32>
    %172 = vector.broadcast %171 : vector<1x64xf32> to vector<16x64xf32>
    %173 = arith.addf %170, %172 : vector<16x64xf32>
    %174 = arith.truncf %168 : vector<16x64xf32> to vector<16x64xbf16>
    %c1440 = arith.constant 1440 : index
    %c0_66 = arith.constant 0 : index
    %175 = vector.load %arg3[%c1440, %c0_66] : memref<2016x128xbf16, #tpu.memory_space<vmem>>, vector<64x96xbf16>
    %cst_67 = arith.constant dense<0.000000e+00> : vector<16x96xf32>
    %176 = tpu.matmul %174, %175, %cst_67 {dimension_numbers = #tpu.dot_dimension_numbers<[1], [0], [0], [1], [0, 0, 1, 1], [], []>} : vector<16x64xbf16>, vector<64x96xbf16>, vector<16x96xf32> -> vector<16x96xf32>
    %c22 = arith.constant 22 : index
    %c0_68 = arith.constant 0 : index
    %177 = vector.load %arg4[%c22, %c0_68] : memref<40x128xf32, #tpu.memory_space<vmem>>, vector<1x96xf32>
    %178 = vector.broadcast %177 : vector<1x96xf32> to vector<16x96xf32>
    %179 = arith.addf %176, %178 : vector<16x96xf32>
    %180 = arith.truncf %179 : vector<16x96xf32> to vector<16x96xbf16>
    %181 = arith.truncf %173 : vector<16x64xf32> to vector<16x64xbf16>
    %c1504 = arith.constant 1504 : index
    %c0_69 = arith.constant 0 : index
    %182 = vector.load %arg3[%c1504, %c0_69] : memref<2016x128xbf16, #tpu.memory_space<vmem>>, vector<64x96xbf16>
    %cst_70 = arith.constant dense<0.000000e+00> : vector<16x96xf32>
    %183 = tpu.matmul %181, %182, %cst_70 {dimension_numbers = #tpu.dot_dimension_numbers<[1], [0], [0], [1], [0, 0, 1, 1], [], []>} : vector<16x64xbf16>, vector<64x96xbf16>, vector<16x96xf32> -> vector<16x96xf32>
    %c23 = arith.constant 23 : index
    %c0_71 = arith.constant 0 : index
    %184 = vector.load %arg4[%c23, %c0_71] : memref<40x128xf32, #tpu.memory_space<vmem>>, vector<1x96xf32>
    %185 = vector.broadcast %184 : vector<1x96xf32> to vector<16x96xf32>
    %186 = arith.addf %183, %185 : vector<16x96xf32>
    %187 = arith.truncf %186 : vector<16x96xf32> to vector<16x96xbf16>
    %188 = vector.extract_strided_slice %187 {offsets = [0, 0], sizes = [16, 32], strides = [1, 1]} : vector<16x96xbf16> to vector<16x32xbf16>
    %189 = vector.extract_strided_slice %180 {offsets = [0, 32], sizes = [16, 32], strides = [1, 1]} : vector<16x96xbf16> to vector<16x32xbf16>
    %190 = vector.extract_strided_slice %180 {offsets = [0, 64], sizes = [16, 32], strides = [1, 1]} : vector<16x96xbf16> to vector<16x32xbf16>
    %191 = vector.extract_strided_slice %188 {offsets = [0, 0], sizes = [16, 16], strides = [1, 1]} : vector<16x32xbf16> to vector<16x16xbf16>
    %192 = vector.extract_strided_slice %189 {offsets = [0, 0], sizes = [16, 16], strides = [1, 1]} : vector<16x32xbf16> to vector<16x16xbf16>
    %193 = vector.extract_strided_slice %190 {offsets = [0, 0], sizes = [16, 16], strides = [1, 1]} : vector<16x32xbf16> to vector<16x16xbf16>
    %cst_72 = arith.constant dense<0.000000e+00> : vector<16x16xf32>
    %194 = tpu.matmul %191, %192, %cst_72 {dimension_numbers = #tpu.dot_dimension_numbers<[1], [1], [0], [0], [0, 0, 1, 0], [], []>} : vector<16x16xbf16>, vector<16x16xbf16>, vector<16x16xf32> -> vector<16x16xf32>
    %195 = arith.addf %194, %7 : vector<16x16xf32>
    %cst_73 = arith.constant dense<0xFF800000> : vector<16xf32>
    %196 = vector.multi_reduction <maximumf>, %195, %cst_73 [1] : vector<16x16xf32> to vector<16xf32>
    %197 = vector.shape_cast %196 : vector<16xf32> to vector<16x1xf32>
    %198 = vector.broadcast %197 : vector<16x1xf32> to vector<16x16xf32>
    %199 = arith.subf %195, %198 : vector<16x16xf32>
    %200 = math.exp %199 : vector<16x16xf32>
    %cst_74 = arith.constant dense<0.000000e+00> : vector<16xf32>
    %201 = vector.multi_reduction <add>, %200, %cst_74 [1] : vector<16x16xf32> to vector<16xf32>
    %202 = vector.shape_cast %201 : vector<16xf32> to vector<16x1xf32>
    %203 = tpu.reciprocal %202 : vector<16x1xf32> -> vector<16x1xf32>
    %204 = vector.broadcast %203 : vector<16x1xf32> to vector<16x16xf32>
    %205 = arith.mulf %200, %204 : vector<16x16xf32>
    %206 = arith.truncf %205 : vector<16x16xf32> to vector<16x16xbf16>
    %cst_75 = arith.constant dense<0.000000e+00> : vector<16x16xf32>
    %207 = tpu.matmul %206, %193, %cst_75 {dimension_numbers = #tpu.dot_dimension_numbers<[1], [0], [0], [1], [0, 0, 1, 1], [], []>} : vector<16x16xbf16>, vector<16x16xbf16>, vector<16x16xf32> -> vector<16x16xf32>
    %208 = vector.extract_strided_slice %188 {offsets = [0, 16], sizes = [16, 16], strides = [1, 1]} : vector<16x32xbf16> to vector<16x16xbf16>
    %209 = vector.extract_strided_slice %189 {offsets = [0, 16], sizes = [16, 16], strides = [1, 1]} : vector<16x32xbf16> to vector<16x16xbf16>
    %210 = vector.extract_strided_slice %190 {offsets = [0, 16], sizes = [16, 16], strides = [1, 1]} : vector<16x32xbf16> to vector<16x16xbf16>
    %cst_76 = arith.constant dense<0.000000e+00> : vector<16x16xf32>
    %211 = tpu.matmul %208, %209, %cst_76 {dimension_numbers = #tpu.dot_dimension_numbers<[1], [1], [0], [0], [0, 0, 1, 0], [], []>} : vector<16x16xbf16>, vector<16x16xbf16>, vector<16x16xf32> -> vector<16x16xf32>
    %212 = arith.addf %211, %7 : vector<16x16xf32>
    %cst_77 = arith.constant dense<0xFF800000> : vector<16xf32>
    %213 = vector.multi_reduction <maximumf>, %212, %cst_77 [1] : vector<16x16xf32> to vector<16xf32>
    %214 = vector.shape_cast %213 : vector<16xf32> to vector<16x1xf32>
    %215 = vector.broadcast %214 : vector<16x1xf32> to vector<16x16xf32>
    %216 = arith.subf %212, %215 : vector<16x16xf32>
    %217 = math.exp %216 : vector<16x16xf32>
    %cst_78 = arith.constant dense<0.000000e+00> : vector<16xf32>
    %218 = vector.multi_reduction <add>, %217, %cst_78 [1] : vector<16x16xf32> to vector<16xf32>
    %219 = vector.shape_cast %218 : vector<16xf32> to vector<16x1xf32>
    %220 = tpu.reciprocal %219 : vector<16x1xf32> -> vector<16x1xf32>
    %221 = vector.broadcast %220 : vector<16x1xf32> to vector<16x16xf32>
    %222 = arith.mulf %217, %221 : vector<16x16xf32>
    %223 = arith.truncf %222 : vector<16x16xf32> to vector<16x16xbf16>
    %cst_79 = arith.constant dense<0.000000e+00> : vector<16x16xf32>
    %224 = tpu.matmul %223, %210, %cst_79 {dimension_numbers = #tpu.dot_dimension_numbers<[1], [0], [0], [1], [0, 0, 1, 1], [], []>} : vector<16x16xbf16>, vector<16x16xbf16>, vector<16x16xf32> -> vector<16x16xf32>
    %225 = tpu.concatenate %207, %224 in 1 : vector<16x16xf32>, vector<16x16xf32> -> vector<16x32xf32>
    %226 = arith.truncf %225 : vector<16x32xf32> to vector<16x32xbf16>
    %c1568 = arith.constant 1568 : index
    %c0_80 = arith.constant 0 : index
    %227 = vector.load %arg3[%c1568, %c0_80] : memref<2016x128xbf16, #tpu.memory_space<vmem>>, vector<32x64xbf16>
    %cst_81 = arith.constant dense<0.000000e+00> : vector<16x64xf32>
    %228 = tpu.matmul %226, %227, %cst_81 {dimension_numbers = #tpu.dot_dimension_numbers<[1], [0], [0], [1], [0, 0, 1, 1], [], []>} : vector<16x32xbf16>, vector<32x64xbf16>, vector<16x64xf32> -> vector<16x64xf32>
    %c24 = arith.constant 24 : index
    %c0_82 = arith.constant 0 : index
    %229 = vector.load %arg4[%c24, %c0_82] : memref<40x128xf32, #tpu.memory_space<vmem>>, vector<1x64xf32>
    %230 = vector.broadcast %229 : vector<1x64xf32> to vector<16x64xf32>
    %231 = arith.addf %228, %230 : vector<16x64xf32>
    %232 = arith.addf %231, %173 : vector<16x64xf32>
    %cst_83 = arith.constant dense<0.000000e+00> : vector<16xf32>
    %233 = vector.multi_reduction <add>, %232, %cst_83 [1] : vector<16x64xf32> to vector<16xf32>
    %234 = vector.shape_cast %233 : vector<16xf32> to vector<16x1xf32>
    %cst_84 = arith.constant 6.400000e+01 : f32
    %235 = vector.broadcast %cst_84 : f32 to vector<16x1xf32>
    %236 = arith.divf %234, %235 : vector<16x1xf32>
    %237 = vector.broadcast %236 : vector<16x1xf32> to vector<16x64xf32>
    %238 = arith.subf %232, %237 : vector<16x64xf32>
    %239 = arith.mulf %238, %238 : vector<16x64xf32>
    %cst_85 = arith.constant dense<0.000000e+00> : vector<16xf32>
    %240 = vector.multi_reduction <add>, %239, %cst_85 [1] : vector<16x64xf32> to vector<16xf32>
    %241 = vector.shape_cast %240 : vector<16xf32> to vector<16x1xf32>
    %cst_86 = arith.constant 6.400000e+01 : f32
    %242 = vector.broadcast %cst_86 : f32 to vector<16x1xf32>
    %243 = arith.divf %241, %242 : vector<16x1xf32>
    %244 = vector.broadcast %236 : vector<16x1xf32> to vector<16x64xf32>
    %245 = arith.subf %232, %244 : vector<16x64xf32>
    %cst_87 = arith.constant 9.99999974E-6 : f32
    %246 = vector.broadcast %cst_87 : f32 to vector<16x1xf32>
    %247 = arith.addf %243, %246 : vector<16x1xf32>
    %248 = math.rsqrt %247 : vector<16x1xf32>
    %249 = vector.broadcast %248 : vector<16x1xf32> to vector<16x64xf32>
    %250 = arith.mulf %245, %249 : vector<16x64xf32>
    %c25 = arith.constant 25 : index
    %c0_88 = arith.constant 0 : index
    %251 = vector.load %arg4[%c25, %c0_88] : memref<40x128xf32, #tpu.memory_space<vmem>>, vector<1x64xf32>
    %252 = vector.broadcast %251 : vector<1x64xf32> to vector<16x64xf32>
    %253 = arith.mulf %250, %252 : vector<16x64xf32>
    %c26 = arith.constant 26 : index
    %c0_89 = arith.constant 0 : index
    %254 = vector.load %arg4[%c26, %c0_89] : memref<40x128xf32, #tpu.memory_space<vmem>>, vector<1x64xf32>
    %255 = vector.broadcast %254 : vector<1x64xf32> to vector<16x64xf32>
    %256 = arith.addf %253, %255 : vector<16x64xf32>
    %257 = arith.truncf %256 : vector<16x64xf32> to vector<16x64xbf16>
    %c1600 = arith.constant 1600 : index
    %c0_90 = arith.constant 0 : index
    %258 = vector.load %arg3[%c1600, %c0_90] : memref<2016x128xbf16, #tpu.memory_space<vmem>>, vector<64x128xbf16>
    %cst_91 = arith.constant dense<0.000000e+00> : vector<16x128xf32>
    %259 = tpu.matmul %257, %258, %cst_91 {dimension_numbers = #tpu.dot_dimension_numbers<[1], [0], [0], [1], [0, 0, 1, 1], [], []>} : vector<16x64xbf16>, vector<64x128xbf16>, vector<16x128xf32> -> vector<16x128xf32>
    %c27 = arith.constant 27 : index
    %c0_92 = arith.constant 0 : index
    %260 = vector.load %arg4[%c27, %c0_92] : memref<40x128xf32, #tpu.memory_space<vmem>>, vector<1x128xf32>
    %261 = vector.broadcast %260 : vector<1x128xf32> to vector<16x128xf32>
    %262 = arith.addf %259, %261 : vector<16x128xf32>
    %cst_93 = arith.constant 0.000000e+00 : f32
    %263 = vector.broadcast %cst_93 : f32 to vector<16x128xf32>
    %264 = arith.maximumf %262, %263 : vector<16x128xf32>
    %265 = arith.truncf %264 : vector<16x128xf32> to vector<16x128xbf16>
    %c1664 = arith.constant 1664 : index
    %c0_94 = arith.constant 0 : index
    %266 = vector.load %arg3[%c1664, %c0_94] : memref<2016x128xbf16, #tpu.memory_space<vmem>>, vector<128x64xbf16>
    %cst_95 = arith.constant dense<0.000000e+00> : vector<16x64xf32>
    %267 = tpu.matmul %265, %266, %cst_95 {dimension_numbers = #tpu.dot_dimension_numbers<[1], [0], [0], [1], [0, 0, 1, 1], [], []>} : vector<16x128xbf16>, vector<128x64xbf16>, vector<16x64xf32> -> vector<16x64xf32>
    %c28 = arith.constant 28 : index
    %c0_96 = arith.constant 0 : index
    %268 = vector.load %arg4[%c28, %c0_96] : memref<40x128xf32, #tpu.memory_space<vmem>>, vector<1x64xf32>
    %269 = vector.broadcast %268 : vector<1x64xf32> to vector<16x64xf32>
    %270 = arith.addf %267, %269 : vector<16x64xf32>
    %271 = arith.addf %270, %256 : vector<16x64xf32>
    %cst_97 = arith.constant dense<0.000000e+00> : vector<16xf32>
    %272 = vector.multi_reduction <add>, %271, %cst_97 [1] : vector<16x64xf32> to vector<16xf32>
    %273 = vector.shape_cast %272 : vector<16xf32> to vector<16x1xf32>
    %cst_98 = arith.constant 6.400000e+01 : f32
    %274 = vector.broadcast %cst_98 : f32 to vector<16x1xf32>
    %275 = arith.divf %273, %274 : vector<16x1xf32>
    %276 = vector.broadcast %275 : vector<16x1xf32> to vector<16x64xf32>
    %277 = arith.subf %271, %276 : vector<16x64xf32>
    %278 = arith.mulf %277, %277 : vector<16x64xf32>
    %cst_99 = arith.constant dense<0.000000e+00> : vector<16xf32>
    %279 = vector.multi_reduction <add>, %278, %cst_99 [1] : vector<16x64xf32> to vector<16xf32>
    %280 = vector.shape_cast %279 : vector<16xf32> to vector<16x1xf32>
    %cst_100 = arith.constant 6.400000e+01 : f32
    %281 = vector.broadcast %cst_100 : f32 to vector<16x1xf32>
    %282 = arith.divf %280, %281 : vector<16x1xf32>
    %283 = vector.broadcast %275 : vector<16x1xf32> to vector<16x64xf32>
    %284 = arith.subf %271, %283 : vector<16x64xf32>
    %cst_101 = arith.constant 9.99999974E-6 : f32
    %285 = vector.broadcast %cst_101 : f32 to vector<16x1xf32>
    %286 = arith.addf %282, %285 : vector<16x1xf32>
    %287 = math.rsqrt %286 : vector<16x1xf32>
    %288 = vector.broadcast %287 : vector<16x1xf32> to vector<16x64xf32>
    %289 = arith.mulf %284, %288 : vector<16x64xf32>
    %c29 = arith.constant 29 : index
    %c0_102 = arith.constant 0 : index
    %290 = vector.load %arg4[%c29, %c0_102] : memref<40x128xf32, #tpu.memory_space<vmem>>, vector<1x64xf32>
    %291 = vector.broadcast %290 : vector<1x64xf32> to vector<16x64xf32>
    %292 = arith.mulf %289, %291 : vector<16x64xf32>
    %c30 = arith.constant 30 : index
    %c0_103 = arith.constant 0 : index
    %293 = vector.load %arg4[%c30, %c0_103] : memref<40x128xf32, #tpu.memory_space<vmem>>, vector<1x64xf32>
    %294 = vector.broadcast %293 : vector<1x64xf32> to vector<16x64xf32>
    %295 = arith.addf %292, %294 : vector<16x64xf32>
    %296 = vector.extract_strided_slice %180 {offsets = [0, 0], sizes = [16, 32], strides = [1, 1]} : vector<16x96xbf16> to vector<16x32xbf16>
    %297 = vector.extract_strided_slice %187 {offsets = [0, 32], sizes = [16, 32], strides = [1, 1]} : vector<16x96xbf16> to vector<16x32xbf16>
    %298 = vector.extract_strided_slice %187 {offsets = [0, 64], sizes = [16, 32], strides = [1, 1]} : vector<16x96xbf16> to vector<16x32xbf16>
    %299 = vector.extract_strided_slice %296 {offsets = [0, 0], sizes = [16, 16], strides = [1, 1]} : vector<16x32xbf16> to vector<16x16xbf16>
    %300 = vector.extract_strided_slice %297 {offsets = [0, 0], sizes = [16, 16], strides = [1, 1]} : vector<16x32xbf16> to vector<16x16xbf16>
    %301 = vector.extract_strided_slice %298 {offsets = [0, 0], sizes = [16, 16], strides = [1, 1]} : vector<16x32xbf16> to vector<16x16xbf16>
    %cst_104 = arith.constant dense<0.000000e+00> : vector<16x16xf32>
    %302 = tpu.matmul %299, %300, %cst_104 {dimension_numbers = #tpu.dot_dimension_numbers<[1], [1], [0], [0], [0, 0, 1, 0], [], []>} : vector<16x16xbf16>, vector<16x16xbf16>, vector<16x16xf32> -> vector<16x16xf32>
    %303 = arith.addf %302, %7 : vector<16x16xf32>
    %cst_105 = arith.constant dense<0xFF800000> : vector<16xf32>
    %304 = vector.multi_reduction <maximumf>, %303, %cst_105 [1] : vector<16x16xf32> to vector<16xf32>
    %305 = vector.shape_cast %304 : vector<16xf32> to vector<16x1xf32>
    %306 = vector.broadcast %305 : vector<16x1xf32> to vector<16x16xf32>
    %307 = arith.subf %303, %306 : vector<16x16xf32>
    %308 = math.exp %307 : vector<16x16xf32>
    %cst_106 = arith.constant dense<0.000000e+00> : vector<16xf32>
    %309 = vector.multi_reduction <add>, %308, %cst_106 [1] : vector<16x16xf32> to vector<16xf32>
    %310 = vector.shape_cast %309 : vector<16xf32> to vector<16x1xf32>
    %311 = tpu.reciprocal %310 : vector<16x1xf32> -> vector<16x1xf32>
    %312 = vector.broadcast %311 : vector<16x1xf32> to vector<16x16xf32>
    %313 = arith.mulf %308, %312 : vector<16x16xf32>
    %314 = arith.truncf %313 : vector<16x16xf32> to vector<16x16xbf16>
    %cst_107 = arith.constant dense<0.000000e+00> : vector<16x16xf32>
    %315 = tpu.matmul %314, %301, %cst_107 {dimension_numbers = #tpu.dot_dimension_numbers<[1], [0], [0], [1], [0, 0, 1, 1], [], []>} : vector<16x16xbf16>, vector<16x16xbf16>, vector<16x16xf32> -> vector<16x16xf32>
    %316 = vector.extract_strided_slice %296 {offsets = [0, 16], sizes = [16, 16], strides = [1, 1]} : vector<16x32xbf16> to vector<16x16xbf16>
    %317 = vector.extract_strided_slice %297 {offsets = [0, 16], sizes = [16, 16], strides = [1, 1]} : vector<16x32xbf16> to vector<16x16xbf16>
    %318 = vector.extract_strided_slice %298 {offsets = [0, 16], sizes = [16, 16], strides = [1, 1]} : vector<16x32xbf16> to vector<16x16xbf16>
    %cst_108 = arith.constant dense<0.000000e+00> : vector<16x16xf32>
    %319 = tpu.matmul %316, %317, %cst_108 {dimension_numbers = #tpu.dot_dimension_numbers<[1], [1], [0], [0], [0, 0, 1, 0], [], []>} : vector<16x16xbf16>, vector<16x16xbf16>, vector<16x16xf32> -> vector<16x16xf32>
    %320 = arith.addf %319, %7 : vector<16x16xf32>
    %cst_109 = arith.constant dense<0xFF800000> : vector<16xf32>
    %321 = vector.multi_reduction <maximumf>, %320, %cst_109 [1] : vector<16x16xf32> to vector<16xf32>
    %322 = vector.shape_cast %321 : vector<16xf32> to vector<16x1xf32>
    %323 = vector.broadcast %322 : vector<16x1xf32> to vector<16x16xf32>
    %324 = arith.subf %320, %323 : vector<16x16xf32>
    %325 = math.exp %324 : vector<16x16xf32>
    %cst_110 = arith.constant dense<0.000000e+00> : vector<16xf32>
    %326 = vector.multi_reduction <add>, %325, %cst_110 [1] : vector<16x16xf32> to vector<16xf32>
    %327 = vector.shape_cast %326 : vector<16xf32> to vector<16x1xf32>
    %328 = tpu.reciprocal %327 : vector<16x1xf32> -> vector<16x1xf32>
    %329 = vector.broadcast %328 : vector<16x1xf32> to vector<16x16xf32>
    %330 = arith.mulf %325, %329 : vector<16x16xf32>
    %331 = arith.truncf %330 : vector<16x16xf32> to vector<16x16xbf16>
    %cst_111 = arith.constant dense<0.000000e+00> : vector<16x16xf32>
    %332 = tpu.matmul %331, %318, %cst_111 {dimension_numbers = #tpu.dot_dimension_numbers<[1], [0], [0], [1], [0, 0, 1, 1], [], []>} : vector<16x16xbf16>, vector<16x16xbf16>, vector<16x16xf32> -> vector<16x16xf32>
    %333 = tpu.concatenate %315, %332 in 1 : vector<16x16xf32>, vector<16x16xf32> -> vector<16x32xf32>
    %334 = arith.truncf %333 : vector<16x32xf32> to vector<16x32xbf16>
    %c1792 = arith.constant 1792 : index
    %c0_112 = arith.constant 0 : index
    %335 = vector.load %arg3[%c1792, %c0_112] : memref<2016x128xbf16, #tpu.memory_space<vmem>>, vector<32x64xbf16>
    %cst_113 = arith.constant dense<0.000000e+00> : vector<16x64xf32>
    %336 = tpu.matmul %334, %335, %cst_113 {dimension_numbers = #tpu.dot_dimension_numbers<[1], [0], [0], [1], [0, 0, 1, 1], [], []>} : vector<16x32xbf16>, vector<32x64xbf16>, vector<16x64xf32> -> vector<16x64xf32>
    %c31 = arith.constant 31 : index
    %c0_114 = arith.constant 0 : index
    %337 = vector.load %arg4[%c31, %c0_114] : memref<40x128xf32, #tpu.memory_space<vmem>>, vector<1x64xf32>
    %338 = vector.broadcast %337 : vector<1x64xf32> to vector<16x64xf32>
    %339 = arith.addf %336, %338 : vector<16x64xf32>
    %340 = arith.addf %339, %168 : vector<16x64xf32>
    %cst_115 = arith.constant dense<0.000000e+00> : vector<16xf32>
    %341 = vector.multi_reduction <add>, %340, %cst_115 [1] : vector<16x64xf32> to vector<16xf32>
    %342 = vector.shape_cast %341 : vector<16xf32> to vector<16x1xf32>
    %cst_116 = arith.constant 6.400000e+01 : f32
    %343 = vector.broadcast %cst_116 : f32 to vector<16x1xf32>
    %344 = arith.divf %342, %343 : vector<16x1xf32>
    %345 = vector.broadcast %344 : vector<16x1xf32> to vector<16x64xf32>
    %346 = arith.subf %340, %345 : vector<16x64xf32>
    %347 = arith.mulf %346, %346 : vector<16x64xf32>
    %cst_117 = arith.constant dense<0.000000e+00> : vector<16xf32>
    %348 = vector.multi_reduction <add>, %347, %cst_117 [1] : vector<16x64xf32> to vector<16xf32>
    %349 = vector.shape_cast %348 : vector<16xf32> to vector<16x1xf32>
    %cst_118 = arith.constant 6.400000e+01 : f32
    %350 = vector.broadcast %cst_118 : f32 to vector<16x1xf32>
    %351 = arith.divf %349, %350 : vector<16x1xf32>
    %352 = vector.broadcast %344 : vector<16x1xf32> to vector<16x64xf32>
    %353 = arith.subf %340, %352 : vector<16x64xf32>
    %cst_119 = arith.constant 9.99999974E-6 : f32
    %354 = vector.broadcast %cst_119 : f32 to vector<16x1xf32>
    %355 = arith.addf %351, %354 : vector<16x1xf32>
    %356 = math.rsqrt %355 : vector<16x1xf32>
    %357 = vector.broadcast %356 : vector<16x1xf32> to vector<16x64xf32>
    %358 = arith.mulf %353, %357 : vector<16x64xf32>
    %c32 = arith.constant 32 : index
    %c0_120 = arith.constant 0 : index
    %359 = vector.load %arg4[%c32, %c0_120] : memref<40x128xf32, #tpu.memory_space<vmem>>, vector<1x64xf32>
    %360 = vector.broadcast %359 : vector<1x64xf32> to vector<16x64xf32>
    %361 = arith.mulf %358, %360 : vector<16x64xf32>
    %c33 = arith.constant 33 : index
    %c0_121 = arith.constant 0 : index
    %362 = vector.load %arg4[%c33, %c0_121] : memref<40x128xf32, #tpu.memory_space<vmem>>, vector<1x64xf32>
    %363 = vector.broadcast %362 : vector<1x64xf32> to vector<16x64xf32>
    %364 = arith.addf %361, %363 : vector<16x64xf32>
    %365 = arith.truncf %364 : vector<16x64xf32> to vector<16x64xbf16>
    %c1824 = arith.constant 1824 : index
    %c0_122 = arith.constant 0 : index
    %366 = vector.load %arg3[%c1824, %c0_122] : memref<2016x128xbf16, #tpu.memory_space<vmem>>, vector<64x128xbf16>
    %cst_123 = arith.constant dense<0.000000e+00> : vector<16x128xf32>
    %367 = tpu.matmul %365, %366, %cst_123 {dimension_numbers = #tpu.dot_dimension_numbers<[1], [0], [0], [1], [0, 0, 1, 1], [], []>} : vector<16x64xbf16>, vector<64x128xbf16>, vector<16x128xf32> -> vector<16x128xf32>
    %c34 = arith.constant 34 : index
    %c0_124 = arith.constant 0 : index
    %368 = vector.load %arg4[%c34, %c0_124] : memref<40x128xf32, #tpu.memory_space<vmem>>, vector<1x128xf32>
    %369 = vector.broadcast %368 : vector<1x128xf32> to vector<16x128xf32>
    %370 = arith.addf %367, %369 : vector<16x128xf32>
    %cst_125 = arith.constant 0.000000e+00 : f32
    %371 = vector.broadcast %cst_125 : f32 to vector<16x128xf32>
    %372 = arith.maximumf %370, %371 : vector<16x128xf32>
    %373 = arith.truncf %372 : vector<16x128xf32> to vector<16x128xbf16>
    %c1888 = arith.constant 1888 : index
    %c0_126 = arith.constant 0 : index
    %374 = vector.load %arg3[%c1888, %c0_126] : memref<2016x128xbf16, #tpu.memory_space<vmem>>, vector<128x64xbf16>
    %cst_127 = arith.constant dense<0.000000e+00> : vector<16x64xf32>
    %375 = tpu.matmul %373, %374, %cst_127 {dimension_numbers = #tpu.dot_dimension_numbers<[1], [0], [0], [1], [0, 0, 1, 1], [], []>} : vector<16x128xbf16>, vector<128x64xbf16>, vector<16x64xf32> -> vector<16x64xf32>
    %c35 = arith.constant 35 : index
    %c0_128 = arith.constant 0 : index
    %376 = vector.load %arg4[%c35, %c0_128] : memref<40x128xf32, #tpu.memory_space<vmem>>, vector<1x64xf32>
    %377 = vector.broadcast %376 : vector<1x64xf32> to vector<16x64xf32>
    %378 = arith.addf %375, %377 : vector<16x64xf32>
    %379 = arith.addf %378, %364 : vector<16x64xf32>
    %cst_129 = arith.constant dense<0.000000e+00> : vector<16xf32>
    %380 = vector.multi_reduction <add>, %379, %cst_129 [1] : vector<16x64xf32> to vector<16xf32>
    %381 = vector.shape_cast %380 : vector<16xf32> to vector<16x1xf32>
    %cst_130 = arith.constant 6.400000e+01 : f32
    %382 = vector.broadcast %cst_130 : f32 to vector<16x1xf32>
    %383 = arith.divf %381, %382 : vector<16x1xf32>
    %384 = vector.broadcast %383 : vector<16x1xf32> to vector<16x64xf32>
    %385 = arith.subf %379, %384 : vector<16x64xf32>
    %386 = arith.mulf %385, %385 : vector<16x64xf32>
    %cst_131 = arith.constant dense<0.000000e+00> : vector<16xf32>
    %387 = vector.multi_reduction <add>, %386, %cst_131 [1] : vector<16x64xf32> to vector<16xf32>
    %388 = vector.shape_cast %387 : vector<16xf32> to vector<16x1xf32>
    %cst_132 = arith.constant 6.400000e+01 : f32
    %389 = vector.broadcast %cst_132 : f32 to vector<16x1xf32>
    %390 = arith.divf %388, %389 : vector<16x1xf32>
    %391 = vector.broadcast %383 : vector<16x1xf32> to vector<16x64xf32>
    %392 = arith.subf %379, %391 : vector<16x64xf32>
    %cst_133 = arith.constant 9.99999974E-6 : f32
    %393 = vector.broadcast %cst_133 : f32 to vector<16x1xf32>
    %394 = arith.addf %390, %393 : vector<16x1xf32>
    %395 = math.rsqrt %394 : vector<16x1xf32>
    %396 = vector.broadcast %395 : vector<16x1xf32> to vector<16x64xf32>
    %397 = arith.mulf %392, %396 : vector<16x64xf32>
    %c36 = arith.constant 36 : index
    %c0_134 = arith.constant 0 : index
    %398 = vector.load %arg4[%c36, %c0_134] : memref<40x128xf32, #tpu.memory_space<vmem>>, vector<1x64xf32>
    %399 = vector.broadcast %398 : vector<1x64xf32> to vector<16x64xf32>
    %400 = arith.mulf %397, %399 : vector<16x64xf32>
    %c37 = arith.constant 37 : index
    %c0_135 = arith.constant 0 : index
    %401 = vector.load %arg4[%c37, %c0_135] : memref<40x128xf32, #tpu.memory_space<vmem>>, vector<1x64xf32>
    %402 = vector.broadcast %401 : vector<1x64xf32> to vector<16x64xf32>
    %403 = arith.addf %400, %402 : vector<16x64xf32>
    %404 = tpu.concatenate %403, %295 in 1 : vector<16x64xf32>, vector<16x64xf32> -> vector<16x128xf32>
    %c0_136 = arith.constant 0 : index
    %c0_137 = arith.constant 0 : index
    %405 = vector.load %arg5[%c0_136, %c0_137] : memref<16x128xf32, #tpu.memory_space<vmem>>, vector<16x128xf32>
    tpu.vector_store %arg5[%c0_136, %c0_137], %404 {strides = array<i32>} : memref<16x128xf32, #tpu.memory_space<vmem>>, vector<16x128xf32>,
    return
  }
  func.func @transform_0(%arg0: i32, %arg1: memref<2xi32, #tpu.memory_space<smem>>) -> (i32, i32) {
    %c0_i32 = arith.constant 0 : i32
    %c0_i32_0 = arith.constant 0 : i32
    return %arg0, %c0_i32 : i32, i32
  }
  func.func @transform_1(%arg0: i32, %arg1: memref<2xi32, #tpu.memory_space<smem>>) -> (i32, i32) {
    %c0_i32 = arith.constant 0 : i32
    %c0_i32_0 = arith.constant 0 : i32
    %c0_i32_1 = arith.constant 0 : i32
    return %c0_i32, %c0_i32_0 : i32, i32
  }
  func.func @transform_2(%arg0: i32, %arg1: memref<2xi32, #tpu.memory_space<smem>>) -> (i32, i32) {
    %c0_i32 = arith.constant 0 : i32
    %c0_i32_0 = arith.constant 0 : i32
    %c0_i32_1 = arith.constant 0 : i32
    return %c0_i32, %c0_i32_0 : i32, i32
  }
  func.func @transform_3(%arg0: i32, %arg1: memref<2xi32, #tpu.memory_space<smem>>) -> (i32, i32) {
    %c0_i32 = arith.constant 0 : i32
    %c0_i32_0 = arith.constant 0 : i32
    return %arg0, %c0_i32 : i32, i32
  }
}

</mosaic_0001>

<llo_original>
// kernel: tpu_custom_call.1
$region0: #{tpu_custom_call.1}
  #allocation0 [shape = 'u32[]', space=smem, size = 0x4, offset = 0x4, fixed_abs, tag = 'smem constant byte address 0x4 - core index']
  #allocation1 [shape = 'u32[144,128]{1,0:T(1,128)}', space=vmem, size = 0x12000, scoped, tag = 'internal scratch']
  #allocation2 [shape = 's32[1]{0}', space=sflag, size = 0x4, scoped, tag = 'scoped memory for tpu_custom_call.1']
  #allocation3 [shape = 'u8[512]{0}', space=smem, size = 0x200, scoped, tag = 'prefetched SMEM operand 0']
  %s0 = inlined_call_operand.hbm [shape: s32[2], index: 0, kind: input, shape index: {}]
  %s1 = inlined_call_operand.hbm [shape: bf16[32,128], index: 1, kind: input, shape index: {}]
  %s2 = inlined_call_operand.hbm [shape: bf16[2016,128], index: 2, kind: input, shape index: {}]
  %s3 = inlined_call_operand.hbm [shape: f32[40,128], index: 3, kind: input, shape index: {}]
  %s4 = inlined_call_operand.hbm [shape: f32[32,128], index: 4, kind: output, shape index: {}]
  %s5 = sld [smem:[#allocation0]]
  $region57: #{tpu_custom_call.1} parent=0
    _
  %s7 = ssub.s32 1, %s5
  %s8 = scalar_select 0, %s7, %s5
  %10 = dma.hbm_to_smem %s0, 16, [#allocation3], [#allocation2]
  %11 = dma.done [#allocation2], 16
  %12 = sfence
  $region1: #{tpu_custom_call.1} parent=0
    #allocation4 [shape = 'u8[8192]{0}', space=vmem, size = 0x2000, scoped, tag = 'input window, operand 1']
    #allocation5 [shape = 's32[2]{0}', space=sflag, size = 0x8, scoped, tag = 'scoped memory for tpu_custom_call.1']
    #allocation6 [shape = 's32[2]{0}', space=sflag, size = 0x8, scoped, tag = 'scoped memory for tpu_custom_call.1']
    #allocation7 [shape = 'u8[516096]{0}', space=vmem, size = 0x7e000, scoped, tag = 'input window, operand 2, single buffered']
    #allocation8 [shape = 's32[1]{0}', space=sflag, size = 0x4, scoped, tag = 'scoped memory for tpu_custom_call.1']
    #allocation9 [shape = 'u8[20480]{0}', space=vmem, size = 0x5000, scoped, tag = 'input window, operand 3, single buffered']
    #allocation10 [shape = 'u8[16384]{0}', space=vmem, size = 0x4000, scoped, tag = 'output window, operand 0']
    %13 = vsyncpa [#allocation5], 0
    %s14 = scalar_lea.sflag [#allocation5], 1
    %15 = vsyncpa %s14, 0
    %16 = vsyncpa [#allocation8], 0
    %17 = vsyncpa [#allocation6], 0
    %s18 = scalar_lea.sflag [#allocation6], 1
    %19 = vsyncpa %s18, 0
    loop: start=0, step=1, limit=4
    $region2: #{tpu_custom_call.1} parent=1 // loop_pre_header
      _
    $region3: #{tpu_custom_call.1} parent=1 // loop_header
      %s21 = sphi 0, %s25
      %p22 = scmp.ge.s32.totalorder %s21, 4
      %s31 = sphi 0, %s33
      %s34 = sphi 0, %s31
      %s35 = sphi 0, %s34
      %s51 = sphi 0, %s35
      %s55 = sphi 0, %s55
      %s57 = sphi 0, %s55
      %s58 = sphi 0, %s57
      %s72 = sphi 0, %s58
      %s76 = sphi 0, %s76
      %s78 = sphi 0, %s76
      %s79 = sphi 0, %s78
      %s93 = sphi 0, %s79
      %s99 = sphi 0, %s101
      %s102 = sphi 0, %s99
      %s103 = sphi 0, %s102
      %s119 = sphi 0, %s103
    $region4: #{tpu_custom_call.1} parent=1 // loop_header_branch
      %24 = sbr.rel (%p22) target = $region8
    $region5: #{tpu_custom_call.1} parent=1 // loop_body
      %s26 = ssub.s32 %s21, 1
      %s27 = ssub.s32 %s21, 2
      %s28 = sadd.s32 %s21, 1
      %s29 = ssub.s32 %s21, %s28
      %p30 = scmp.eq.s32.totalorder %s29, 0
      %s32 = sadd.s32 %s31, 1
      %s33 = scalar_select %p30, %s31, %s32
      %p36 = pneg %p30
      %p37 = scmp.eq.s32.totalorder %s21, 1
      %p38 = por %p36, %p37
      %p39 = scmp.ne.s32.totalorder %s31, %s34
      %p40 = scmp.eq.s32.totalorder %s21, 0
      %p41 = por %p39, %p40
      %p42 = scmp.ne.s32.totalorder %s31, %s34
      %p43 = scmp.eq.s32.totalorder %s26, 1
      %p44 = por %p42, %p43
      %p45 = scmp.ne.s32.totalorder %s34, %s35
      %p46 = scmp.eq.s32.totalorder %s26, 0
      %p47 = por %p45, %p46
      %p48 = scmp.ne.s32.totalorder %s34, %s35
      %p49 = scmp.eq.s32.totalorder %s27, 1
      %p50 = por %p48, %p49
      %p52 = scmp.ne.s32.totalorder %s35, %s51
      %p53 = scmp.eq.s32.totalorder %s27, 0
      %p54 = por %p52, %p53
      %s56 = sadd.s32 %s55, 1
      %p59 = scmp.eq.s32.totalorder %s21, 1
      %p60 = scmp.ne.s32.totalorder %s55, %s57
      %p61 = scmp.eq.s32.totalorder %s21, 0
      %p62 = por %p60, %p61
      %p63 = scmp.ne.s32.totalorder %s55, %s57
      %p64 = scmp.eq.s32.totalorder %s26, 1
      %p65 = por %p63, %p64
      %p66 = scmp.ne.s32.totalorder %s57, %s58
      %p67 = scmp.eq.s32.totalorder %s26, 0
      %p68 = por %p66, %p67
      %p69 = scmp.ne.s32.totalorder %s57, %s58
      %p70 = scmp.eq.s32.totalorder %s27, 1
      %p71 = por %p69, %p70
      %p73 = scmp.ne.s32.totalorder %s58, %s72
      %p74 = scmp.eq.s32.totalorder %s27, 0
      %p75 = por %p73, %p74
      %s77 = sadd.s32 %s76, 1
      %p80 = scmp.eq.s32.totalorder %s21, 1
      %p81 = scmp.ne.s32.totalorder %s76, %s78
      %p82 = scmp.eq.s32.totalorder %s21, 0
      %p83 = por %p81, %p82
      %p84 = scmp.ne.s32.totalorder %s76, %s78
      %p85 = scmp.eq.s32.totalorder %s26, 1
      %p86 = por %p84, %p85
      %p87 = scmp.ne.s32.totalorder %s78, %s79
      %p88 = scmp.eq.s32.totalorder %s26, 0
      %p89 = por %p87, %p88
      %p90 = scmp.ne.s32.totalorder %s78, %s79
      %p91 = scmp.eq.s32.totalorder %s27, 1
      %p92 = por %p90, %p91
      %p94 = scmp.ne.s32.totalorder %s79, %s93
      %p95 = scmp.eq.s32.totalorder %s27, 0
      %p96 = por %p94, %p95
      %s97 = ssub.s32 %s21, %s28
      %p98 = scmp.eq.s32.totalorder %s97, 0
      %s100 = sadd.s32 %s99, 1
      %s101 = scalar_select %p98, %s99, %s100
      %p104 = pneg %p98
      %p105 = scmp.eq.s32.totalorder %s21, 1
      %p106 = por %p104, %p105
      %p107 = scmp.ne.s32.totalorder %s99, %s102
      %p108 = scmp.eq.s32.totalorder %s21, 0
      %p109 = por %p107, %p108
      %p110 = scmp.ne.s32.totalorder %s99, %s102
      %p111 = scmp.eq.s32.totalorder %s26, 1
      %p112 = por %p110, %p111
      %p113 = scmp.ne.s32.totalorder %s102, %s103
      %p114 = scmp.eq.s32.totalorder %s26, 0
      %p115 = por %p113, %p114
      %p116 = scmp.ne.s32.totalorder %s102, %s103
      %p117 = scmp.eq.s32.totalorder %s27, 1
      %p118 = por %p116, %p117
      %p120 = scmp.ne.s32.totalorder %s103, %s119
      %p121 = scmp.eq.s32.totalorder %s27, 0
      %p122 = por %p120, %p121
      %p123 = scmp.le.s32.totalorder 1, %s21
      %p124 = scmp.lt.s32.totalorder %s21, 3
      %p125 = pnand %p123, %p124
      %p126 = pneg %p125
      // Predicated region
      $region9: #{tpu_custom_call.1} parent=5 // pred_check
        _
      $region10: #{tpu_custom_call.1} parent=5 // pred_check_branch
        %128 = sbr.rel (%p125) target = $region12
      $region11: #{tpu_custom_call.1} parent=5 // pred_region
        %s129 = ssub.s32 %s21, 1
        // Predicated region
        $region13: #{tpu_custom_call.1} parent=11 // pred_check
          %p130 = pneg %p68
        $region14: #{tpu_custom_call.1} parent=11 // pred_check_branch
          %132 = sbr.rel (%p130) target = $region16
        $region15: #{tpu_custom_call.1} parent=11 // pred_region
          %s134 = ssub.s32 16128, 16128
          %135 = vsyncadd [#allocation8], %s134
          %s136 = sshll.u32 [#allocation7], 4
          %s137 = int_to_ptr.vmem [resolvable:$true] %s136
          %142 = dma.hbm_to_vmem [thread:$0]  %s2, 16128, %s137, [#allocation8], 64, 64, 4
        $region16: #{tpu_custom_call.1} parent=11 // pred_fallthru
          _
        // Predicated region
        $region17: #{tpu_custom_call.1} parent=11 // pred_check
          %p143 = pneg %p89
        $region18: #{tpu_custom_call.1} parent=11 // pred_check_branch
          %145 = sbr.rel (%p143) target = $region20
        $region19: #{tpu_custom_call.1} parent=11 // pred_region
          %s147 = ssub.s32 640, 640
          %148 = vsyncadd [#allocation8], %s147
          %s149 = sshll.u32 [#allocation9], 4
          %s150 = int_to_ptr.vmem [resolvable:$true] %s149
          %155 = dma.hbm_to_vmem [thread:$0]  %s3, 640, %s150, [#allocation8], 128, 128, 8
        $region20: #{tpu_custom_call.1} parent=11 // pred_fallthru
          _
      $region12: #{tpu_custom_call.1} parent=5 // pred_fallthru
        _
      %p156 = scmp.lt.s32.totalorder %s21, 2
      // Predicated region
      $region21: #{tpu_custom_call.1} parent=5 // pred_check
        %p157 = pneg %p156
      $region22: #{tpu_custom_call.1} parent=5 // pred_check_branch
        %159 = sbr.rel (%p157) target = $region24
      $region23: #{tpu_custom_call.1} parent=5 // pred_region
        // Predicated region
        $region25: #{tpu_custom_call.1} parent=23 // pred_check
          %p160 = pneg %p41
        $region26: #{tpu_custom_call.1} parent=23 // pred_check_branch
          %162 = sbr.rel (%p160) target = $region28
        $region27: #{tpu_custom_call.1} parent=23 // pred_region
          %s163 = sand.u32 %s31, 1
          %s164 = scalar_lea.sflag [#allocation5], %s163
          %s165 = sand.u32 %s31, 1
          %s166 = smul.addr %s165, 8
          %s167 = scalar_lea.vmem [#allocation4], %s166
          %s168 = smul.u32 2, %s21
          %s170 = ssub.s32 128, 128
          %171 = vsyncadd %s164, %s170
          %s172 = smul.addr %s168, 64
          %s173 = scalar_lea.hbm %s1, %s172
          %s174 = sshll.u32 %s167, 4
          %s175 = int_to_ptr.vmem [resolvable:$true] %s174
          %180 = dma.hbm_to_vmem [thread:$0]  %s173, 128, %s175, %s164, 64, 64, 4
        $region28: #{tpu_custom_call.1} parent=23 // pred_fallthru
          _
      $region24: #{tpu_custom_call.1} parent=5 // pred_fallthru
        _
      %p181 = scmp.le.s32.totalorder 1, %s21
      %p182 = scmp.lt.s32.totalorder %s21, 3
      %p183 = pnand %p181, %p182
      %p184 = pneg %p183
      // Predicated region
      $region29: #{tpu_custom_call.1} parent=5 // pred_check
        _
      $region30: #{tpu_custom_call.1} parent=5 // pred_check_branch
        %186 = sbr.rel (%p183) target = $region32
      $region31: #{tpu_custom_call.1} parent=5 // pred_region
        %s187 = ssub.s32 %s21, 1
        %s188 = sand.u32 %s34, 1
        %s189 = scalar_lea.sflag [#allocation5], %s188
        %s190 = sand.u32 %s34, 1
        %s191 = smul.addr %s190, 8
        %s192 = scalar_lea.vmem [#allocation4], %s191
        // Predicated region
        $region33: #{tpu_custom_call.1} parent=31 // pred_check
          %p193 = pneg %p47
        $region34: #{tpu_custom_call.1} parent=31 // pred_check_branch
          %195 = sbr.rel (%p193) target = $region36
        $region35: #{tpu_custom_call.1} parent=31 // pred_region
          %196 = dma.done %s189, 128
        $region36: #{tpu_custom_call.1} parent=31 // pred_fallthru
          _
        // Predicated region
        $region37: #{tpu_custom_call.1} parent=31 // pred_check
          %p197 = pneg %p68
        $region38: #{tpu_custom_call.1} parent=31 // pred_check_branch
          %199 = sbr.rel (%p197) target = $region40
        $region39: #{tpu_custom_call.1} parent=31 // pred_region
          %200 = dma.done [#allocation8], 16128
        $region40: #{tpu_custom_call.1} parent=31 // pred_fallthru
          _
        // Predicated region
        $region41: #{tpu_custom_call.1} parent=31 // pred_check
          %p201 = pneg %p89
        $region42: #{tpu_custom_call.1} parent=31 // pred_check_branch
          %203 = sbr.rel (%p201) target = $region44
        $region43: #{tpu_custom_call.1} parent=31 // pred_region
          %204 = dma.done [#allocation8], 640
        $region44: #{tpu_custom_call.1} parent=31 // pred_fallthru
          _
        %s205 = sand.u32 %s34, 1
        %s206 = scalar_lea.sflag [#allocation5], %s205
        %s207 = sand.u32 %s34, 1
        %s208 = smul.addr %s207, 8
        %s209 = scalar_lea.vmem [#allocation4], %s208
        %p210 = pneg %p47
        %p211 = pneg %p44
        %p212 = pneg %p68
        %p213 = pneg %p65
        %p214 = pneg %p89
        %p215 = pneg %p86
        %p216 = pneg %p115
        %p217 = pneg %p112
        %s218 = sand.u32 %s102, 1
        %s219 = scalar_lea.sflag [#allocation6], %s218
        %s220 = sand.u32 %s102, 1
        %s221 = smul.addr %s220, 16
        %s222 = scalar_lea.vmem [#allocation10], %s221
        %s223 = smul.u32 2, %s26
        %s224 = smul.u32 2, %s26
        %s226 = sld [smem:[#allocation3 + %s26]]
        %v227 = vlaneseq
        %v228 = vand.u32 %v227, 127
        %v229 = vstv %s226
        %vm230 = vcmp.lt.s32.totalorder %v228, %v229
        %v231 = vsel %vm230, 0.0, -1e+09
        %v232 = vld [vmem:[%s192] sm:$0xf]
        %v233 = vld [vmem:[%s192 + $0x4] sm:$0xf]
        %v234 = vld [vmem:[#allocation7] sm:$0xf]
        %v235 = vld [vmem:[#allocation7 + $0x4] sm:$0xf]
        %v236 = vld [vmem:[#allocation7 + $0x8] sm:$0xf]
        %v237 = vld [vmem:[#allocation7 + $0xc] sm:$0xf]
        %v238 = vld [vmem:[#allocation7 + $0x10] sm:$0xf]
        %v239 = vld [vmem:[#allocation7 + $0x14] sm:$0xf]
        %v240 = vld [vmem:[#allocation7 + $0x18] sm:$0xf]
        %v241 = vld [vmem:[#allocation7 + $0x1c] sm:$0xf]
        %v242 = vld [vmem:[#allocation7 + $0x20] sm:$0xf]
        %v243 = vld [vmem:[#allocation7 + $0x24] sm:$0xf]
        %v244 = vld [vmem:[#allocation7 + $0x28] sm:$0xf]
        %v245 = vld [vmem:[#allocation7 + $0x2c] sm:$0xf]
        %v246 = vld [vmem:[#allocation7 + $0x30] sm:$0xf]
        %v247 = vld [vmem:[#allocation7 + $0x34] sm:$0xf]
        %v248 = vld [vmem:[#allocation7 + $0x38] sm:$0xf]
        %v249 = vld [vmem:[#allocation7 + $0x3c] sm:$0xf]
        %v250 = vld [vmem:[#allocation9] sm:$0x1]
        %v251 = vlaneseq
        %v252 = vshrl.u32 %v251, 7
        %v253 = vsub.s32 0, %v252
        %v254 = vrot.slane %v250, %v253
        %v257 = vunpack.c.l.b16 %v232
        %v258 = vunpack.c.l.b16 %v233
        %v259 = vpack.c.b16 %v258, %v257
        %v277 = vunpack.c.l.b16 %v234
        %v278 = vunpack.c.l.b16 %v235
        %v279 = vunpack.c.l.b16 %v236
        %v280 = vunpack.c.l.b16 %v237
        %v281 = vunpack.c.l.b16 %v238
        %v282 = vunpack.c.l.b16 %v239
        %v283 = vunpack.c.l.b16 %v240
        %v284 = vunpack.c.l.b16 %v241
        %v285 = vunpack.c.l.b16 %v242
        %v286 = vunpack.c.l.b16 %v243
        %v287 = vunpack.c.l.b16 %v244
        %v288 = vunpack.c.l.b16 %v245
        %v289 = vunpack.c.l.b16 %v246
        %v290 = vunpack.c.l.b16 %v247
        %v291 = vunpack.c.l.b16 %v248
        %v292 = vunpack.c.l.b16 %v249
        %v293 = vpack.c.b16 %v278, %v277
        %v294 = vpack.c.b16 %v280, %v279
        %v295 = vpack.c.b16 %v282, %v281
        %v296 = vpack.c.b16 %v284, %v283
        %v297 = vpack.c.b16 %v286, %v285
        %v298 = vpack.c.b16 %v288, %v287
        %v299 = vpack.c.b16 %v290, %v289
        %v300 = vpack.c.b16 %v292, %v291
        %309 = vmatprep.subr.bf16.mxu0 0
        %310 = vmatpush1.bf16.msra.mxu0 %v300
        %311 = vmatprep.subr.bf16.mxu0 0
        %312 = vmatpush1.bf16.msra.mxu0 %v299
        %313 = vmatprep.subr.bf16.mxu0 0
        %314 = vmatpush1.bf16.msra.mxu0 %v298
        %315 = vmatprep.subr.bf16.mxu0 0
        %316 = vmatpush1.bf16.msra.mxu0 %v297
        %317 = vmatprep.subr.bf16.mxu0 0
        %318 = vmatpush1.bf16.msra.mxu0 %v296
        %319 = vmatprep.subr.bf16.mxu0 0
        %320 = vmatpush1.bf16.msra.mxu0 %v295
        %321 = vmatprep.subr.bf16.mxu0 0
        %322 = vmatpush1.bf16.msra.mxu0 %v294
        %323 = vmatprep.subr.bf16.mxu0 0
        %324 = vmatpush1.bf16.msra.mxu0 %v293
        %325 = vmatprep.subr.bf16.mxu0 0
        %326 = vmatpush2.bf16.msra.mxu0 0
        %327 = vmatprep.subr.bf16.mxu0 0
        %328 = vmatpush2.bf16.msra.mxu0 0
        %329 = vmatprep.subr.bf16.mxu0 0
        %330 = vmatpush2.bf16.msra.mxu0 0
        %331 = vmatprep.subr.bf16.mxu0 0
        %332 = vmatpush2.bf16.msra.mxu0 0
        %333 = vmatprep.subr.bf16.mxu0 0
        %334 = vmatpush2.bf16.msra.mxu0 0
        %335 = vmatprep.subr.bf16.mxu0 0
        %336 = vmatpush2.bf16.msra.mxu0 0
        %337 = vmatprep.subr.bf16.mxu0 0
        %338 = vmatpush2.bf16.msra.mxu0 0
        %339 = vmatprep.subr.bf16.mxu0 0
        %340 = vmatpush2.bf16.msra.mxu0 0
        %341 = vmatprep.mubr.bf16.mxu0 0
        %342 = vmatmul.mubr.bf16.gmra.mxu0 %v259
        %v343 = vpop.f32.mrf.mxu0
        %v344 = vadd.f32 %v254, %v343
        %v345 = vpop.f32.mrf.mxu0
        %v346 = vpop.f32.mrf.mxu0
        %v347 = vadd.f32 %v254, %v346
        %v348 = vpop.f32.mrf.mxu0
        %349 = vdwg.mxu0
        %v350 = vmax.f32 %v344, 0.0
        %v351 = vmax.f32 %v347, 0.0
        %v352 = vpack.c.bf16 %v351, %v350
        %v353 = vld [vmem:[#allocation7 + $0x40] sm:$0xf]
        %v354 = vld [vmem:[#allocation7 + $0x44] sm:$0xf]
        %v355 = vld [vmem:[#allocation7 + $0x48] sm:$0xf]
        %v356 = vld [vmem:[#allocation7 + $0x4c] sm:$0xf]
        %v357 = vld [vmem:[#allocation9 + $0x1] sm:$0x1]
        %v358 = vlaneseq
        %v359 = vshrl.u32 %v358, 7
        %v360 = vsub.s32 0, %v359
        %v361 = vrot.slane %v357, %v360
        %v366 = vunpack.c.l.b16 %v353
        %v367 = vunpack.c.l.b16 %v354
        %v368 = vunpack.c.l.b16 %v355
        %v369 = vunpack.c.l.b16 %v356
        %v370 = vpack.c.b16 %v367, %v366
        %v371 = vpack.c.b16 %v369, %v368
        %vm374 = vcmask 261120
        %v376 = vsel %vm374, %v352, 0
        %378 = vmatprep.subr.bf16.mxu0 0
        %379 = vmatpush1.bf16.msra.mxu0 0
        %380 = vmatprep.subr.bf16.mxu0 0
        %381 = vmatpush1.bf16.msra.mxu0 0
        %382 = vmatprep.subr.bf16.mxu0 0
        %383 = vmatpush1.bf16.msra.mxu0 0
        %384 = vmatprep.subr.bf16.mxu0 0
        %385 = vmatpush1.bf16.msra.mxu0 0
        %386 = vmatprep.subr.bf16.mxu0 0
        %387 = vmatpush1.bf16.msra.mxu0 0
        %388 = vmatprep.subr.bf16.mxu0 0
        %389 = vmatpush1.bf16.msra.mxu0 0
        %390 = vmatprep.subr.bf16.mxu0 0
        %391 = vmatpush1.bf16.msra.mxu0 %v371
        %392 = vmatprep.subr.bf16.mxu0 0
        %393 = vmatpush1.bf16.msra.mxu0 %v370
        %394 = vmatprep.subr.bf16.mxu0 0
        %395 = vmatpush2.bf16.msra.mxu0 0
        %396 = vmatprep.subr.bf16.mxu0 0
        %397 = vmatpush2.bf16.msra.mxu0 0
        %398 = vmatprep.subr.bf16.mxu0 0
        %399 = vmatpush2.bf16.msra.mxu0 0
        %400 = vmatprep.subr.bf16.mxu0 0
        %401 = vmatpush2.bf16.msra.mxu0 0
        %402 = vmatprep.subr.bf16.mxu0 0
        %403 = vmatpush2.bf16.msra.mxu0 0
        %404 = vmatprep.subr.bf16.mxu0 0
        %405 = vmatpush2.bf16.msra.mxu0 0
        %406 = vmatprep.subr.bf16.mxu0 0
        %407 = vmatpush2.bf16.msra.mxu0 0
        %408 = vmatprep.subr.bf16.mxu0 0
        %409 = vmatpush2.bf16.msra.mxu0 0
        %410 = vmatprep.mubr.bf16.mxu0 0
        %411 = vmatmul.mubr.bf16.gmra.mxu0 %v376
        %v412 = vpop.f32.mrf.mxu0
        %v413 = vadd.f32 %v361, %v412
        %v414 = vpop.f32.mrf.mxu0
        %v415 = vpop.f32.mrf.mxu0
        %v416 = vadd.f32 %v361, %v415
        %v417 = vpop.f32.mrf.mxu0
        %418 = vdwg.mxu0
        %v419 = vmax.f32 %v413, 0.0
        %v420 = vmax.f32 %v416, 0.0
        %v421 = vld [vmem:[#allocation7 + $0x50] sm:$0xf]
        %v422 = vld [vmem:[#allocation7 + $0x54] sm:$0xf]
        %v423 = vld [vmem:[#allocation7 + $0x58] sm:$0xf]
        %v424 = vld [vmem:[#allocation7 + $0x5c] sm:$0xf]
        %v425 = vld [vmem:[#allocation7 + $0x60] sm:$0xf]
        %v426 = vld [vmem:[#allocation7 + $0x64] sm:$0xf]
        %v427 = vld [vmem:[#allocation7 + $0x68] sm:$0xf]
        %v428 = vld [vmem:[#allocation7 + $0x6c] sm:$0xf]
        %v429 = vld [vmem:[#allocation7 + $0x70] sm:$0xf]
        %v430 = vld [vmem:[#allocation7 + $0x74] sm:$0xf]
        %v431 = vld [vmem:[#allocation7 + $0x78] sm:$0xf]
        %v432 = vld [vmem:[#allocation7 + $0x7c] sm:$0xf]
        %v433 = vld [vmem:[#allocation7 + $0x80] sm:$0xf]
        %v434 = vld [vmem:[#allocation7 + $0x84] sm:$0xf]
        %v435 = vld [vmem:[#allocation7 + $0x88] sm:$0xf]
        %v436 = vld [vmem:[#allocation7 + $0x8c] sm:$0xf]
        %v437 = vpack.c.bf16 %v420, %v419
        %v438 = vld [vmem:[#allocation7 + $0x90] sm:$0xf]
        %v439 = vld [vmem:[#allocation7 + $0x94] sm:$0xf]
        %v440 = vld [vmem:[#allocation7 + $0x98] sm:$0xf]
        %v441 = vld [vmem:[#allocation7 + $0x9c] sm:$0xf]
        %v442 = vld [vmem:[#allocation7 + $0xa0] sm:$0xf]
        %v443 = vld [vmem:[#allocation7 + $0xa4] sm:$0xf]
        %v444 = vld [vmem:[#allocation7 + $0xa8] sm:$0xf]
        %v445 = vld [vmem:[#allocation7 + $0xac] sm:$0xf]
        %v446 = vld [vmem:[#allocation7 + $0xb0] sm:$0xf]
        %v447 = vld [vmem:[#allocation7 + $0xb4] sm:$0xf]
        %v448 = vld [vmem:[#allocation7 + $0xb8] sm:$0xf]
        %v449 = vld [vmem:[#allocation7 + $0xbc] sm:$0xf]
        %v450 = vld [vmem:[#allocation7 + $0xc0] sm:$0xf]
        %v451 = vld [vmem:[#allocation7 + $0xc4] sm:$0xf]
        %v452 = vld [vmem:[#allocation7 + $0xc8] sm:$0xf]
        %v453 = vld [vmem:[#allocation7 + $0xcc] sm:$0xf]
        %v470 = vunpack.c.l.b16 %v438
        %v471 = vunpack.c.l.b16 %v439
        %v472 = vunpack.c.l.b16 %v440
        %v473 = vunpack.c.l.b16 %v441
        %v474 = vunpack.c.l.b16 %v442
        %v475 = vunpack.c.l.b16 %v443
        %v476 = vunpack.c.l.b16 %v444
        %v477 = vunpack.c.l.b16 %v445
        %v478 = vunpack.c.l.b16 %v446
        %v479 = vunpack.c.l.b16 %v447
        %v480 = vunpack.c.l.b16 %v448
        %v481 = vunpack.c.l.b16 %v449
        %v482 = vunpack.c.l.b16 %v450
        %v483 = vunpack.c.l.b16 %v451
        %v484 = vunpack.c.l.b16 %v452
        %v485 = vunpack.c.l.b16 %v453
        %v486 = vpack.c.b16 %v471, %v470
        %v487 = vpack.c.b16 %v473, %v472
        %v488 = vpack.c.b16 %v475, %v474
        %v489 = vpack.c.b16 %v477, %v476
        %v490 = vpack.c.b16 %v479, %v478
        %v491 = vpack.c.b16 %v481, %v480
        %v492 = vpack.c.b16 %v483, %v482
        %v493 = vpack.c.b16 %v485, %v484
        %502 = vmatprep.subr.bf16.mxu0 0
        %503 = vmatpush1.bf16.msra.mxu0 %v493
        %504 = vmatprep.subr.bf16.mxu0 0
        %505 = vmatpush1.bf16.msra.mxu0 %v492
        %506 = vmatprep.subr.bf16.mxu0 0
        %507 = vmatpush1.bf16.msra.mxu0 %v491
        %508 = vmatprep.subr.bf16.mxu0 0
        %509 = vmatpush1.bf16.msra.mxu0 %v490
        %510 = vmatprep.subr.bf16.mxu0 0
        %511 = vmatpush1.bf16.msra.mxu0 %v489
        %512 = vmatprep.subr.bf16.mxu0 0
        %513 = vmatpush1.bf16.msra.mxu0 %v488
        %514 = vmatprep.subr.bf16.mxu0 0
        %515 = vmatpush1.bf16.msra.mxu0 %v487
        %516 = vmatprep.subr.bf16.mxu0 0
        %517 = vmatpush1.bf16.msra.mxu0 %v486
        %518 = vmatprep.subr.bf16.mxu0 0
        %519 = vmatpush2.bf16.msra.mxu0 0
        %520 = vmatprep.subr.bf16.mxu0 0
        %521 = vmatpush2.bf16.msra.mxu0 0
        %522 = vmatprep.subr.bf16.mxu0 0
        %523 = vmatpush2.bf16.msra.mxu0 0
        %524 = vmatprep.subr.bf16.mxu0 0
        %525 = vmatpush2.bf16.msra.mxu0 0
        %526 = vmatprep.subr.bf16.mxu0 0
        %527 = vmatpush2.bf16.msra.mxu0 0
        %528 = vmatprep.subr.bf16.mxu0 0
        %529 = vmatpush2.bf16.msra.mxu0 0
        %530 = vmatprep.subr.bf16.mxu0 0
        %531 = vmatpush2.bf16.msra.mxu0 0
        %532 = vmatprep.subr.bf16.mxu0 0
        %533 = vmatpush2.bf16.msra.mxu0 0
        %534 = vmatprep.mubr.bf16.mxu0 0
        %535 = vmatmul.mubr.bf16.gmra.mxu0 %v437
        %v536 = vpop.f32.mrf.mxu0
        %v537 = vadd.f32 0.0, %v536
        %v538 = vpop.f32.mrf.mxu0
        %v539 = vpop.f32.mrf.mxu0
        %v540 = vadd.f32 0.0, %v539
        %v541 = vpop.f32.mrf.mxu0
        %542 = vdwg.mxu0
        %v559 = vunpack.c.l.b16 %v421
        %v560 = vunpack.c.l.b16 %v422
        %v561 = vunpack.c.l.b16 %v423
        %v562 = vunpack.c.l.b16 %v424
        %v563 = vunpack.c.l.b16 %v425
        %v564 = vunpack.c.l.b16 %v426
        %v565 = vunpack.c.l.b16 %v427
        %v566 = vunpack.c.l.b16 %v428
        %v567 = vunpack.c.l.b16 %v429
        %v568 = vunpack.c.l.b16 %v430
        %v569 = vunpack.c.l.b16 %v431
        %v570 = vunpack.c.l.b16 %v432
        %v571 = vunpack.c.l.b16 %v433
        %v572 = vunpack.c.l.b16 %v434
        %v573 = vunpack.c.l.b16 %v435
        %v574 = vunpack.c.l.b16 %v436
        %v575 = vpack.c.b16 %v560, %v559
        %v576 = vpack.c.b16 %v562, %v561
        %v577 = vpack.c.b16 %v564, %v563
        %v578 = vpack.c.b16 %v566, %v565
        %v579 = vpack.c.b16 %v568, %v567
        %v580 = vpack.c.b16 %v570, %v569
        %v581 = vpack.c.b16 %v572, %v571
        %v582 = vpack.c.b16 %v574, %v573
        %591 = vmatprep.subr.bf16.mxu0 0
        %592 = vmatpush1.bf16.msra.mxu0 %v582
        %593 = vmatprep.subr.bf16.mxu0 0
        %594 = vmatpush1.bf16.msra.mxu0 %v581
        %595 = vmatprep.subr.bf16.mxu0 0
        %596 = vmatpush1.bf16.msra.mxu0 %v580
        %597 = vmatprep.subr.bf16.mxu0 0
        %598 = vmatpush1.bf16.msra.mxu0 %v579
        %599 = vmatprep.subr.bf16.mxu0 0
        %600 = vmatpush1.bf16.msra.mxu0 %v578
        %601 = vmatprep.subr.bf16.mxu0 0
        %602 = vmatpush1.bf16.msra.mxu0 %v577
        %603 = vmatprep.subr.bf16.mxu0 0
        %604 = vmatpush1.bf16.msra.mxu0 %v576
        %605 = vmatprep.subr.bf16.mxu0 0
        %606 = vmatpush1.bf16.msra.mxu0 %v575
        %607 = vmatprep.subr.bf16.mxu0 0
        %608 = vmatpush2.bf16.msra.mxu0 0
        %609 = vmatprep.subr.bf16.mxu0 0
        %610 = vmatpush2.bf16.msra.mxu0 0
        %611 = vmatprep.subr.bf16.mxu0 0
        %612 = vmatpush2.bf16.msra.mxu0 0
        %613 = vmatprep.subr.bf16.mxu0 0
        %614 = vmatpush2.bf16.msra.mxu0 0
        %615 = vmatprep.subr.bf16.mxu0 0
        %616 = vmatpush2.bf16.msra.mxu0 0
        %617 = vmatprep.subr.bf16.mxu0 0
        %618 = vmatpush2.bf16.msra.mxu0 0
        %619 = vmatprep.subr.bf16.mxu0 0
        %620 = vmatpush2.bf16.msra.mxu0 0
        %621 = vmatprep.subr.bf16.mxu0 0
        %622 = vmatpush2.bf16.msra.mxu0 0
        %623 = vmatprep.mubr.bf16.mxu0 0
        %624 = vmatmul.mubr.bf16.gmra.mxu0 %v259
        %v625 = vpop.f32.mrf.mxu0
        %v626 = vadd.f32 %v537, %v625
        %v627 = vpop.f32.mrf.mxu0
        %v628 = vpop.f32.mrf.mxu0
        %v629 = vadd.f32 %v540, %v628
        %v630 = vpop.f32.mrf.mxu0
        %631 = vdwg.mxu0
        %v632 = vld [vmem:[#allocation9 + $0x2] sm:$0x1]
        %v633 = vlaneseq
        %v634 = vshrl.u32 %v633, 7
        %v635 = vsub.s32 0, %v634
        %v636 = vrot.slane %v632, %v635
        %v637 = vadd.f32 %v626, %v636
        %v638 = vadd.f32 %v629, %v636
        %v639 = vld [vmem:[#allocation7 + $0xd0] sm:$0xf]
        %v640 = vld [vmem:[#allocation7 + $0xd4] sm:$0xf]
        %v641 = vld [vmem:[#allocation7 + $0xd8] sm:$0xf]
        %v642 = vld [vmem:[#allocation7 + $0xdc] sm:$0xf]
        %v643 = vld [vmem:[#allocation7 + $0xe0] sm:$0xf]
        %v644 = vld [vmem:[#allocation7 + $0xe4] sm:$0xf]
        %v645 = vld [vmem:[#allocation7 + $0xe8] sm:$0xf]
        %v646 = vld [vmem:[#allocation7 + $0xec] sm:$0xf]
        %v647 = vld [vmem:[#allocation7 + $0xf0] sm:$0xf]
        %v648 = vld [vmem:[#allocation7 + $0xf4] sm:$0xf]
        %v649 = vld [vmem:[#allocation7 + $0xf8] sm:$0xf]
        %v650 = vld [vmem:[#allocation7 + $0xfc] sm:$0xf]
        %v651 = vld [vmem:[#allocation7 + $0x100] sm:$0xf]
        %v652 = vld [vmem:[#allocation7 + $0x104] sm:$0xf]
        %v653 = vld [vmem:[#allocation7 + $0x108] sm:$0xf]
        %v654 = vld [vmem:[#allocation7 + $0x10c] sm:$0xf]
        %v655 = vld [vmem:[#allocation9 + $0x3] sm:$0x1]
        %v656 = vlaneseq
        %v657 = vshrl.u32 %v656, 7
        %v658 = vsub.s32 0, %v657
        %v659 = vrot.slane %v655, %v658
        %v676 = vunpack.c.l.b16 %v639
        %v677 = vunpack.c.l.b16 %v640
        %v678 = vunpack.c.l.b16 %v641
        %v679 = vunpack.c.l.b16 %v642
        %v680 = vunpack.c.l.b16 %v643
        %v681 = vunpack.c.l.b16 %v644
        %v682 = vunpack.c.l.b16 %v645
        %v683 = vunpack.c.l.b16 %v646
        %v684 = vunpack.c.l.b16 %v647
        %v685 = vunpack.c.l.b16 %v648
        %v686 = vunpack.c.l.b16 %v649
        %v687 = vunpack.c.l.b16 %v650
        %v688 = vunpack.c.l.b16 %v651
        %v689 = vunpack.c.l.b16 %v652
        %v690 = vunpack.c.l.b16 %v653
        %v691 = vunpack.c.l.b16 %v654
        %v692 = vpack.c.b16 %v677, %v676
        %v693 = vpack.c.b16 %v679, %v678
        %v694 = vpack.c.b16 %v681, %v680
        %v695 = vpack.c.b16 %v683, %v682
        %v696 = vpack.c.b16 %v685, %v684
        %v697 = vpack.c.b16 %v687, %v686
        %v698 = vpack.c.b16 %v689, %v688
        %v699 = vpack.c.b16 %v691, %v690
        %708 = vmatprep.subr.bf16.mxu0 0
        %709 = vmatpush1.bf16.msra.mxu0 %v699
        %710 = vmatprep.subr.bf16.mxu0 0
        %711 = vmatpush1.bf16.msra.mxu0 %v698
        %712 = vmatprep.subr.bf16.mxu0 0
        %713 = vmatpush1.bf16.msra.mxu0 %v697
        %714 = vmatprep.subr.bf16.mxu0 0
        %715 = vmatpush1.bf16.msra.mxu0 %v696
        %716 = vmatprep.subr.bf16.mxu0 0
        %717 = vmatpush1.bf16.msra.mxu0 %v695
        %718 = vmatprep.subr.bf16.mxu0 0
        %719 = vmatpush1.bf16.msra.mxu0 %v694
        %720 = vmatprep.subr.bf16.mxu0 0
        %721 = vmatpush1.bf16.msra.mxu0 %v693
        %722 = vmatprep.subr.bf16.mxu0 0
        %723 = vmatpush1.bf16.msra.mxu0 %v692
        %724 = vmatprep.subr.bf16.mxu0 0
        %725 = vmatpush2.bf16.msra.mxu0 0
        %726 = vmatprep.subr.bf16.mxu0 0
        %727 = vmatpush2.bf16.msra.mxu0 0
        %728 = vmatprep.subr.bf16.mxu0 0
        %729 = vmatpush2.bf16.msra.mxu0 0
        %730 = vmatprep.subr.bf16.mxu0 0
        %731 = vmatpush2.bf16.msra.mxu0 0
        %732 = vmatprep.subr.bf16.mxu0 0
        %733 = vmatpush2.bf16.msra.mxu0 0
        %734 = vmatprep.subr.bf16.mxu0 0
        %735 = vmatpush2.bf16.msra.mxu0 0
        %736 = vmatprep.subr.bf16.mxu0 0
        %737 = vmatpush2.bf16.msra.mxu0 0
        %738 = vmatprep.subr.bf16.mxu0 0
        %739 = vmatpush2.bf16.msra.mxu0 0
        %740 = vmatprep.mubr.bf16.mxu0 0
        %741 = vmatmul.mubr.bf16.gmra.mxu0 %v259
        %v742 = vpop.f32.mrf.mxu0
        %v743 = vadd.f32 %v659, %v742
        %v744 = vpop.f32.mrf.mxu0
        %v745 = vpop.f32.mrf.mxu0
        %v746 = vadd.f32 %v659, %v745
        %v747 = vpop.f32.mrf.mxu0
        %748 = vdwg.mxu0
        %v749 = vpack.c.bf16 %v638, %v637
        %v750 = vld [vmem:[#allocation7 + $0x1b0] sm:$0xf]
        %v751 = vld [vmem:[#allocation7 + $0x1b4] sm:$0xf]
        %v752 = vld [vmem:[#allocation7 + $0x1b8] sm:$0xf]
        %v753 = vld [vmem:[#allocation7 + $0x1bc] sm:$0xf]
        %v754 = vld [vmem:[#allocation7 + $0x1c0] sm:$0xf]
        %v755 = vld [vmem:[#allocation7 + $0x1c4] sm:$0xf]
        %v756 = vld [vmem:[#allocation7 + $0x1c8] sm:$0xf]
        %v757 = vld [vmem:[#allocation7 + $0x1cc] sm:$0xf]
        %v758 = vld [vmem:[#allocation9 + $0x6] sm:$0x1]
        %v759 = vlaneseq
        %v760 = vshrl.u32 %v759, 7
        %v761 = vsub.s32 0, %v760
        %v762 = vrot.slane %v758, %v761
        %v771 = vunpack.c.l.b16 %v750
        %v772 = vunpack.c.l.b16 %v751
        %v773 = vunpack.c.l.b16 %v752
        %v774 = vunpack.c.l.b16 %v753
        %v775 = vunpack.c.l.b16 %v754
        %v776 = vunpack.c.l.b16 %v755
        %v777 = vunpack.c.l.b16 %v756
        %v778 = vunpack.c.l.b16 %v757
        %v779 = vpack.c.b16 %v772, %v771
        %v780 = vpack.c.b16 %v774, %v773
        %v781 = vpack.c.b16 %v776, %v775
        %v782 = vpack.c.b16 %v778, %v777
        %vm787 = vcmask 523264
        %v789 = vsel %vm787, %v749, 0
        %791 = vmatprep.subr.bf16.mxu0 0
        %792 = vmatpush1.bf16.msra.mxu0 0
        %793 = vmatprep.subr.bf16.mxu0 0
        %794 = vmatpush1.bf16.msra.mxu0 0
        %795 = vmatprep.subr.bf16.mxu0 0
        %796 = vmatpush1.bf16.msra.mxu0 0
        %797 = vmatprep.subr.bf16.mxu0 0
        %798 = vmatpush1.bf16.msra.mxu0 0
        %799 = vmatprep.subr.bf16.mxu0 0
        %800 = vmatpush1.bf16.msra.mxu0 %v782
        %801 = vmatprep.subr.bf16.mxu0 0
        %802 = vmatpush1.bf16.msra.mxu0 %v781
        %803 = vmatprep.subr.bf16.mxu0 0
        %804 = vmatpush1.bf16.msra.mxu0 %v780
        %805 = vmatprep.subr.bf16.mxu0 0
        %806 = vmatpush1.bf16.msra.mxu0 %v779
        %807 = vmatprep.subr.bf16.mxu0 0
        %808 = vmatpush2.bf16.msra.mxu0 0
        %809 = vmatprep.subr.bf16.mxu0 0
        %810 = vmatpush2.bf16.msra.mxu0 0
        %811 = vmatprep.subr.bf16.mxu0 0
        %812 = vmatpush2.bf16.msra.mxu0 0
        %813 = vmatprep.subr.bf16.mxu0 0
        %814 = vmatpush2.bf16.msra.mxu0 0
        %815 = vmatprep.subr.bf16.mxu0 0
        %816 = vmatpush2.bf16.msra.mxu0 0
        %817 = vmatprep.subr.bf16.mxu0 0
        %818 = vmatpush2.bf16.msra.mxu0 0
        %819 = vmatprep.subr.bf16.mxu0 0
        %820 = vmatpush2.bf16.msra.mxu0 0
        %821 = vmatprep.subr.bf16.mxu0 0
        %822 = vmatpush2.bf16.msra.mxu0 0
        %823 = vmatprep.mubr.bf16.mxu0 0
        %824 = vmatmul.mubr.bf16.gmra.mxu0 %v789
        %v825 = vpop.f32.mrf.mxu0
        %v826 = vadd.f32 %v762, %v825
        %v827 = vpop.f32.mrf.mxu0
        %v828 = vpop.f32.mrf.mxu0
        %v829 = vadd.f32 %v762, %v828
        %v830 = vpop.f32.mrf.mxu0
        %831 = vdwg.mxu0
        %v832 = vpack.c.bf16 %v829, %v826
        %v833 = vpack.c.bf16 %v746, %v743
        %v834 = vld [vmem:[#allocation7 + $0x1d0] sm:$0xf]
        %v835 = vld [vmem:[#allocation7 + $0x1d4] sm:$0xf]
        %v836 = vld [vmem:[#allocation7 + $0x1d8] sm:$0xf]
        %v837 = vld [vmem:[#allocation7 + $0x1dc] sm:$0xf]
        %v838 = vld [vmem:[#allocation7 + $0x1e0] sm:$0xf]
        %v839 = vld [vmem:[#allocation7 + $0x1e4] sm:$0xf]
        %v840 = vld [vmem:[#allocation7 + $0x1e8] sm:$0xf]
        %v841 = vld [vmem:[#allocation7 + $0x1ec] sm:$0xf]
        %v842 = vld [vmem:[#allocation9 + $0x7] sm:$0x1]
        %v843 = vlaneseq
        %v844 = vshrl.u32 %v843, 7
        %v845 = vsub.s32 0, %v844
        %v846 = vrot.slane %v842, %v845
        %v855 = vunpack.c.l.b16 %v834
        %v856 = vunpack.c.l.b16 %v835
        %v857 = vunpack.c.l.b16 %v836
        %v858 = vunpack.c.l.b16 %v837
        %v859 = vunpack.c.l.b16 %v838
        %v860 = vunpack.c.l.b16 %v839
        %v861 = vunpack.c.l.b16 %v840
        %v862 = vunpack.c.l.b16 %v841
        %v863 = vpack.c.b16 %v856, %v855
        %v864 = vpack.c.b16 %v858, %v857
        %v865 = vpack.c.b16 %v860, %v859
        %v866 = vpack.c.b16 %v862, %v861
        %v872 = vsel %vm787, %v833, 0
        %874 = vmatprep.subr.bf16.mxu0 0
        %875 = vmatpush1.bf16.msra.mxu0 0
        %876 = vmatprep.subr.bf16.mxu0 0
        %877 = vmatpush1.bf16.msra.mxu0 0
        %878 = vmatprep.subr.bf16.mxu0 0
        %879 = vmatpush1.bf16.msra.mxu0 0
        %880 = vmatprep.subr.bf16.mxu0 0
        %881 = vmatpush1.bf16.msra.mxu0 0
        %882 = vmatprep.subr.bf16.mxu0 0
        %883 = vmatpush1.bf16.msra.mxu0 %v866
        %884 = vmatprep.subr.bf16.mxu0 0
        %885 = vmatpush1.bf16.msra.mxu0 %v865
        %886 = vmatprep.subr.bf16.mxu0 0
        %887 = vmatpush1.bf16.msra.mxu0 %v864
        %888 = vmatprep.subr.bf16.mxu0 0
        %889 = vmatpush1.bf16.msra.mxu0 %v863
        %890 = vmatprep.subr.bf16.mxu0 0
        %891 = vmatpush2.bf16.msra.mxu0 0
        %892 = vmatprep.subr.bf16.mxu0 0
        %893 = vmatpush2.bf16.msra.mxu0 0
        %894 = vmatprep.subr.bf16.mxu0 0
        %895 = vmatpush2.bf16.msra.mxu0 0
        %896 = vmatprep.subr.bf16.mxu0 0
        %897 = vmatpush2.bf16.msra.mxu0 0
        %898 = vmatprep.subr.bf16.mxu0 0
        %899 = vmatpush2.bf16.msra.mxu0 0
        %900 = vmatprep.subr.bf16.mxu0 0
        %901 = vmatpush2.bf16.msra.mxu0 0
        %902 = vmatprep.subr.bf16.mxu0 0
        %903 = vmatpush2.bf16.msra.mxu0 0
        %904 = vmatprep.subr.bf16.mxu0 0
        %905 = vmatpush2.bf16.msra.mxu0 0
        %906 = vmatprep.mubr.bf16.mxu0 0
        %907 = vmatmul.mubr.bf16.gmra.mxu0 %v872
        %v908 = vpop.f32.mrf.mxu0
        %v909 = vadd.f32 %v846, %v908
        %v910 = vpop.f32.mrf.mxu0
        %v911 = vpop.f32.mrf.mxu0
        %v912 = vadd.f32 %v846, %v911
        %v913 = vpop.f32.mrf.mxu0
        %914 = vdwg.mxu0
        %v915 = vpack.c.bf16 %v912, %v909
        %917 = vrot.lane.b32.xlu0 %v915, 96
        %v918 = vpop.permute.xlu0 %917
        %vm919 = vcmask 130048
        %v921 = vsel %vm919, %v832, 0
        %v924 = vsel %vm919, %v918, 0
        %926 = vmatprep.subr.bf16.mxu0 0
        %927 = vmatpush1.bf16.xpose.msra.mxu0 0
        %928 = vmatprep.subr.bf16.mxu0 0
        %929 = vmatpush1.bf16.xpose.msra.mxu0 0
        %930 = vmatprep.subr.bf16.mxu0 0
        %931 = vmatpush1.bf16.xpose.msra.mxu0 0
        %932 = vmatprep.subr.bf16.mxu0 0
        %933 = vmatpush1.bf16.xpose.msra.mxu0 0
        %934 = vmatprep.subr.bf16.mxu0 0
        %935 = vmatpush1.bf16.xpose.msra.mxu0 0
        %936 = vmatprep.subr.bf16.mxu0 0
        %937 = vmatpush1.bf16.xpose.msra.mxu0 0
        %938 = vmatprep.subr.bf16.mxu0 0
        %939 = vmatpush1.bf16.xpose.msra.mxu0 0
        %940 = vmatprep.subr.bf16.mxu0 0
        %941 = vmatpush1.bf16.xpose.msra.mxu0 %v924
        %942 = vmatprep.subr.bf16.mxu0 0
        %943 = vmatpush2.bf16.xpose.msra.mxu0 0
        %944 = vmatprep.subr.bf16.mxu0 0
        %945 = vmatpush2.bf16.xpose.msra.mxu0 0
        %946 = vmatprep.subr.bf16.mxu0 0
        %947 = vmatpush2.bf16.xpose.msra.mxu0 0
        %948 = vmatprep.subr.bf16.mxu0 0
        %949 = vmatpush2.bf16.xpose.msra.mxu0 0
        %950 = vmatprep.subr.bf16.mxu0 0
        %951 = vmatpush2.bf16.xpose.msra.mxu0 0
        %952 = vmatprep.subr.bf16.mxu0 0
        %953 = vmatpush2.bf16.xpose.msra.mxu0 0
        %954 = vmatprep.subr.bf16.mxu0 0
        %955 = vmatpush2.bf16.xpose.msra.mxu0 0
        %956 = vmatprep.subr.bf16.mxu0 0
        %957 = vmatpush2.bf16.xpose.msra.mxu0 0
        %958 = vmatprep.mubr.bf16.mxu0 0
        %959 = vmatmul.mubr.bf16.gmra.mxu0 %v921
        %v960 = vpop.f32.mrf.mxu0
        %v961 = vadd.f32 %v231, %v960
        %v962 = vpop.f32.mrf.mxu0
        %v963 = vpop.f32.mrf.mxu0
        %v964 = vadd.f32 %v231, %v963
        %v965 = vpop.f32.mrf.mxu0
        %966 = vdwg.mxu0
        %v967 = vsel %vm919, %v961, -inf
        %968 = vmax.xlane.f32.xlu0 %v967
        %v969 = vpop.xlane.xlu0 %968
        %v970 = vsel %vm919, %v964, -inf
        %971 = vmax.xlane.f32.xlu0 %v970
        %v972 = vpop.xlane.xlu0 %971
        %v973 = vsub.f32 %v961, %v969
        %v974 = vsub.f32 %v964, %v972
        %v975 = vmul.f32 %v973, 1.442695
        %v976 = vpow.pop %v975
        %v977 = vmul.f32 %v974, 1.442695
        %v978 = vpow.pop %v977
        %v979 = vsel %vm919, %v976, 0.0
        %980 = vadd.xlane.f32.xlu0 %v979
        %v981 = vpop.xlane.xlu0 %980
        %v982 = vsel %vm919, %v978, 0.0
        %983 = vadd.xlane.f32.xlu0 %v982
        %v984 = vpop.xlane.xlu0 %983
        %v985 = vrcp.pop %v981
        %v986 = vrcp.pop %v984
        %v987 = vmul.f32 %v976, %v985
        %v988 = vmul.f32 %v978, %v986
        %v989 = vpack.c.bf16 %v988, %v987
        %990 = vrot.lane.b32.xlu0 %v915, 64
        %v991 = vpop.permute.xlu0 %990
        %v994 = vsel %vm919, %v989, 0
        %996 = vmatprep.subr.bf16.mxu0 0
        %997 = vmatpush1.bf16.msra.mxu0 0
        %998 = vmatprep.subr.bf16.mxu0 0
        %999 = vmatpush1.bf16.msra.mxu0 0
        %1000 = vmatprep.subr.bf16.mxu0 0
        %1001 = vmatpush1.bf16.msra.mxu0 0
        %1002 = vmatprep.subr.bf16.mxu0 0
        %1003 = vmatpush1.bf16.msra.mxu0 0
        %1004 = vmatprep.subr.bf16.mxu0 0
        %1005 = vmatpush1.bf16.msra.mxu0 0
        %1006 = vmatprep.subr.bf16.mxu0 0
        %1007 = vmatpush1.bf16.msra.mxu0 0
        %1008 = vmatprep.subr.bf16.mxu0 0
        %1009 = vmatpush1.bf16.msra.mxu0 0
        %1010 = vmatprep.subr.bf16.mxu0 0
        %1011 = vmatpush1.bf16.msra.mxu0 %v991
        %1012 = vmatprep.subr.bf16.mxu0 0
        %1013 = vmatpush2.bf16.msra.mxu0 0
        %1014 = vmatprep.subr.bf16.mxu0 0
        %1015 = vmatpush2.bf16.msra.mxu0 0
        %1016 = vmatprep.subr.bf16.mxu0 0
        %1017 = vmatpush2.bf16.msra.mxu0 0
        %1018 = vmatprep.subr.bf16.mxu0 0
        %1019 = vmatpush2.bf16.msra.mxu0 0
        %1020 = vmatprep.subr.bf16.mxu0 0
        %1021 = vmatpush2.bf16.msra.mxu0 0
        %1022 = vmatprep.subr.bf16.mxu0 0
        %1023 = vmatpush2.bf16.msra.mxu0 0
        %1024 = vmatprep.subr.bf16.mxu0 0
        %1025 = vmatpush2.bf16.msra.mxu0 0
        %1026 = vmatprep.subr.bf16.mxu0 0
        %1027 = vmatpush2.bf16.msra.mxu0 0
        %1028 = vmatprep.mubr.bf16.mxu0 0
        %1029 = vmatmul.mubr.bf16.gmra.mxu0 %v994
        %v1030 = vpop.f32.mrf.mxu0
        %v1031 = vadd.f32 0.0, %v1030
        %v1032 = vpop.f32.mrf.mxu0
        %v1033 = vpop.f32.mrf.mxu0
        %v1034 = vadd.f32 0.0, %v1033
        %v1035 = vpop.f32.mrf.mxu0
        %1036 = vdwg.mxu0
        %1038 = vrot.lane.b32.xlu0 %v832, 112
        %v1039 = vpop.permute.xlu0 %1038
        %1040 = vrot.lane.b32.xlu0 %v915, 80
        %v1041 = vpop.permute.xlu0 %1040
        %v1043 = vsel %vm919, %v1039, 0
        %v1046 = vsel %vm919, %v1041, 0
        %1048 = vmatprep.subr.bf16.mxu0 0
        %1049 = vmatpush1.bf16.xpose.msra.mxu0 0
        %1050 = vmatprep.subr.bf16.mxu0 0
        %1051 = vmatpush1.bf16.xpose.msra.mxu0 0
        %1052 = vmatprep.subr.bf16.mxu0 0
        %1053 = vmatpush1.bf16.xpose.msra.mxu0 0
        %1054 = vmatprep.subr.bf16.mxu0 0
        %1055 = vmatpush1.bf16.xpose.msra.mxu0 0
        %1056 = vmatprep.subr.bf16.mxu0 0
        %1057 = vmatpush1.bf16.xpose.msra.mxu0 0
        %1058 = vmatprep.subr.bf16.mxu0 0
        %1059 = vmatpush1.bf16.xpose.msra.mxu0 0
        %1060 = vmatprep.subr.bf16.mxu0 0
        %1061 = vmatpush1.bf16.xpose.msra.mxu0 0
        %1062 = vmatprep.subr.bf16.mxu0 0
        %1063 = vmatpush1.bf16.xpose.msra.mxu0 %v1046
        %1064 = vmatprep.subr.bf16.mxu0 0
        %1065 = vmatpush2.bf16.xpose.msra.mxu0 0
        %1066 = vmatprep.subr.bf16.mxu0 0
        %1067 = vmatpush2.bf16.xpose.msra.mxu0 0
        %1068 = vmatprep.subr.bf16.mxu0 0
        %1069 = vmatpush2.bf16.xpose.msra.mxu0 0
        %1070 = vmatprep.subr.bf16.mxu0 0
        %1071 = vmatpush2.bf16.xpose.msra.mxu0 0
        %1072 = vmatprep.subr.bf16.mxu0 0
        %1073 = vmatpush2.bf16.xpose.msra.mxu0 0
        %1074 = vmatprep.subr.bf16.mxu0 0
        %1075 = vmatpush2.bf16.xpose.msra.mxu0 0
        %1076 = vmatprep.subr.bf16.mxu0 0
        %1077 = vmatpush2.bf16.xpose.msra.mxu0 0
        %1078 = vmatprep.subr.bf16.mxu0 0
        %1079 = vmatpush2.bf16.xpose.msra.mxu0 0
        %1080 = vmatprep.mubr.bf16.mxu0 0
        %1081 = vmatmul.mubr.bf16.gmra.mxu0 %v1043
        %v1082 = vpop.f32.mrf.mxu0
        %v1083 = vadd.f32 %v231, %v1082
        %v1084 = vpop.f32.mrf.mxu0
        %v1085 = vpop.f32.mrf.mxu0
        %v1086 = vadd.f32 %v231, %v1085
        %v1087 = vpop.f32.mrf.mxu0
        %1088 = vdwg.mxu0
        %v1089 = vsel %vm919, %v1083, -inf
        %1090 = vmax.xlane.f32.xlu0 %v1089
        %v1091 = vpop.xlane.xlu0 %1090
        %v1092 = vsel %vm919, %v1086, -inf
        %1093 = vmax.xlane.f32.xlu0 %v1092
        %v1094 = vpop.xlane.xlu0 %1093
        %v1095 = vsub.f32 %v1083, %v1091
        %v1096 = vsub.f32 %v1086, %v1094
        %v1097 = vmul.f32 %v1095, 1.442695
        %v1098 = vpow.pop %v1097
        %v1099 = vmul.f32 %v1096, 1.442695
        %v1100 = vpow.pop %v1099
        %v1101 = vsel %vm919, %v1098, 0.0
        %1102 = vadd.xlane.f32.xlu0 %v1101
        %v1103 = vpop.xlane.xlu0 %1102
        %v1104 = vsel %vm919, %v1100, 0.0
        %1105 = vadd.xlane.f32.xlu0 %v1104
        %v1106 = vpop.xlane.xlu0 %1105
        %v1107 = vrcp.pop %v1103
        %v1108 = vrcp.pop %v1106
        %v1109 = vmul.f32 %v1098, %v1107
        %v1110 = vmul.f32 %v1100, %v1108
        %v1111 = vpack.c.bf16 %v1110, %v1109
        %1112 = vrot.lane.b32.xlu0 %v915, 48
        %v1113 = vpop.permute.xlu0 %1112
        %v1116 = vsel %vm919, %v1111, 0
        %1118 = vmatprep.subr.bf16.mxu0 0
        %1119 = vmatpush1.bf16.msra.mxu0 0
        %1120 = vmatprep.subr.bf16.mxu0 0
        %1121 = vmatpush1.bf16.msra.mxu0 0
        %1122 = vmatprep.subr.bf16.mxu0 0
        %1123 = vmatpush1.bf16.msra.mxu0 0
        %1124 = vmatprep.subr.bf16.mxu0 0
        %1125 = vmatpush1.bf16.msra.mxu0 0
        %1126 = vmatprep.subr.bf16.mxu0 0
        %1127 = vmatpush1.bf16.msra.mxu0 0
        %1128 = vmatprep.subr.bf16.mxu0 0
        %1129 = vmatpush1.bf16.msra.mxu0 0
        %1130 = vmatprep.subr.bf16.mxu0 0
        %1131 = vmatpush1.bf16.msra.mxu0 0
        %1132 = vmatprep.subr.bf16.mxu0 0
        %1133 = vmatpush1.bf16.msra.mxu0 %v1113
        %1134 = vmatprep.subr.bf16.mxu0 0
        %1135 = vmatpush2.bf16.msra.mxu0 0
        %1136 = vmatprep.subr.bf16.mxu0 0
        %1137 = vmatpush2.bf16.msra.mxu0 0
        %1138 = vmatprep.subr.bf16.mxu0 0
        %1139 = vmatpush2.bf16.msra.mxu0 0
        %1140 = vmatprep.subr.bf16.mxu0 0
        %1141 = vmatpush2.bf16.msra.mxu0 0
        %1142 = vmatprep.subr.bf16.mxu0 0
        %1143 = vmatpush2.bf16.msra.mxu0 0
        %1144 = vmatprep.subr.bf16.mxu0 0
        %1145 = vmatpush2.bf16.msra.mxu0 0
        %1146 = vmatprep.subr.bf16.mxu0 0
        %1147 = vmatpush2.bf16.msra.mxu0 0
        %1148 = vmatprep.subr.bf16.mxu0 0
        %1149 = vmatpush2.bf16.msra.mxu0 0
        %1150 = vmatprep.mubr.bf16.mxu0 0
        %1151 = vmatmul.mubr.bf16.gmra.mxu0 %v1116
        %v1152 = vpop.f32.mrf.mxu0
        %v1153 = vadd.f32 0.0, %v1152
        %v1154 = vpop.f32.mrf.mxu0
        %v1155 = vpop.f32.mrf.mxu0
        %v1156 = vadd.f32 0.0, %v1155
        %v1157 = vpop.f32.mrf.mxu0
        %1158 = vdwg.mxu0
        %1161 = vrot.lane.b32.xlu0 %v1153, 16
        %v1162 = vpop.permute.xlu0 %1161
        %1163 = vrot.lane.b32.xlu0 %v1156, 16
        %v1164 = vpop.permute.xlu0 %1163
        %v1167 = vsel %vm919, %v1031, %v1162
        %v1168 = vsel %vm919, %v1034, %v1164
        %v1169 = vpack.c.bf16 %v1168, %v1167
        %v1170 = vld [vmem:[#allocation7 + $0x260] sm:$0xf]
        %v1171 = vld [vmem:[#allocation7 + $0x264] sm:$0xf]
        %v1172 = vld [vmem:[#allocation7 + $0x268] sm:$0xf]
        %v1173 = vld [vmem:[#allocation7 + $0x26c] sm:$0xf]
        %v1174 = vld [vmem:[#allocation9 + $0xf] sm:$0x1]
        %v1175 = vlaneseq
        %v1176 = vshrl.u32 %v1175, 7
        %v1177 = vsub.s32 0, %v1176
        %v1178 = vrot.slane %v1174, %v1177
        %v1183 = vunpack.c.l.b16 %v1170
        %v1184 = vunpack.c.l.b16 %v1171
        %v1185 = vunpack.c.l.b16 %v1172
        %v1186 = vunpack.c.l.b16 %v1173
        %v1187 = vpack.c.b16 %v1184, %v1183
        %v1188 = vpack.c.b16 %v1186, %v1185
        %v1192 = vsel %vm374, %v1169, 0
        %1194 = vmatprep.subr.bf16.mxu0 0
        %1195 = vmatpush1.bf16.msra.mxu0 0
        %1196 = vmatprep.subr.bf16.mxu0 0
        %1197 = vmatpush1.bf16.msra.mxu0 0
        %1198 = vmatprep.subr.bf16.mxu0 0
        %1199 = vmatpush1.bf16.msra.mxu0 0
        %1200 = vmatprep.subr.bf16.mxu0 0
        %1201 = vmatpush1.bf16.msra.mxu0 0
        %1202 = vmatprep.subr.bf16.mxu0 0
        %1203 = vmatpush1.bf16.msra.mxu0 0
        %1204 = vmatprep.subr.bf16.mxu0 0
        %1205 = vmatpush1.bf16.msra.mxu0 0
        %1206 = vmatprep.subr.bf16.mxu0 0
        %1207 = vmatpush1.bf16.msra.mxu0 %v1188
        %1208 = vmatprep.subr.bf16.mxu0 0
        %1209 = vmatpush1.bf16.msra.mxu0 %v1187
        %1210 = vmatprep.subr.bf16.mxu0 0
        %1211 = vmatpush2.bf16.msra.mxu0 0
        %1212 = vmatprep.subr.bf16.mxu0 0
        %1213 = vmatpush2.bf16.msra.mxu0 0
        %1214 = vmatprep.subr.bf16.mxu0 0
        %1215 = vmatpush2.bf16.msra.mxu0 0
        %1216 = vmatprep.subr.bf16.mxu0 0
        %1217 = vmatpush2.bf16.msra.mxu0 0
        %1218 = vmatprep.subr.bf16.mxu0 0
        %1219 = vmatpush2.bf16.msra.mxu0 0
        %1220 = vmatprep.subr.bf16.mxu0 0
        %1221 = vmatpush2.bf16.msra.mxu0 0
        %1222 = vmatprep.subr.bf16.mxu0 0
        %1223 = vmatpush2.bf16.msra.mxu0 0
        %1224 = vmatprep.subr.bf16.mxu0 0
        %1225 = vmatpush2.bf16.msra.mxu0 0
        %1226 = vmatprep.mubr.bf16.mxu0 0
        %1227 = vmatmul.mubr.bf16.gmra.mxu0 %v1192
        %v1228 = vpop.f32.mrf.mxu0
        %v1229 = vadd.f32 %v1178, %v1228
        %v1230 = vpop.f32.mrf.mxu0
        %v1231 = vpop.f32.mrf.mxu0
        %v1232 = vadd.f32 %v1178, %v1231
        %v1233 = vpop.f32.mrf.mxu0
        %1234 = vdwg.mxu0
        %v1235 = vadd.f32 %v1229, %v637
        %v1236 = vadd.f32 %v1232, %v638
        %v1237 = vsel %vm787, %v1235, 0.0
        %1238 = vadd.xlane.f32.xlu0 %v1237
        %v1239 = vpop.xlane.xlu0 %1238
        %v1240 = vsel %vm787, %v1236, 0.0
        %1241 = vadd.xlane.f32.xlu0 %v1240
        %v1242 = vpop.xlane.xlu0 %1241
        %v1243 = vrcp.pop 64.0
        %v1244 = vmul.f32 %v1239, %v1243
        %v1245 = vmul.f32 %v1242, %v1243
        %v1246 = vsub.f32 %v1235, %v1244
        %v1247 = vsub.f32 %v1236, %v1245
        %v1248 = vmul.f32 %v1246, %v1246
        %v1249 = vmul.f32 %v1247, %v1247
        %v1250 = vsel %vm787, %v1248, 0.0
        %1251 = vadd.xlane.f32.xlu0 %v1250
        %v1252 = vpop.xlane.xlu0 %1251
        %v1253 = vsel %vm787, %v1249, 0.0
        %1254 = vadd.xlane.f32.xlu0 %v1253
        %v1255 = vpop.xlane.xlu0 %1254
        %v1256 = vmul.f32 %v1252, %v1243
        %v1257 = vmul.f32 %v1255, %v1243
        %v1258 = vadd.f32 %v1256, 1e-05
        %v1259 = vadd.f32 %v1257, 1e-05
        %v1260 = vrsqrt.pop %v1258
        %v1261 = vrsqrt.pop %v1259
        %v1262 = vmul.f32 %v1246, %v1260
        %v1263 = vmul.f32 %v1247, %v1261
        %v1264 = vld [vmem:[#allocation9 + $0x10] sm:$0x1]
        %v1265 = vlaneseq
        %v1266 = vshrl.u32 %v1265, 7
        %v1267 = vsub.s32 0, %v1266
        %v1268 = vrot.slane %v1264, %v1267
        %v1269 = vmul.f32 %v1262, %v1268
        %v1270 = vmul.f32 %v1263, %v1268
        %v1271 = vld [vmem:[#allocation9 + $0x11] sm:$0x1]
        %v1272 = vlaneseq
        %v1273 = vshrl.u32 %v1272, 7
        %v1274 = vsub.s32 0, %v1273
        %v1275 = vrot.slane %v1271, %v1274
        %v1276 = vadd.f32 %v1269, %v1275
        %v1277 = vadd.f32 %v1270, %v1275
        %v1278 = vpack.c.bf16 %v1277, %v1276
        %v1279 = vld [vmem:[#allocation7 + $0x270] sm:$0xf]
        %v1280 = vld [vmem:[#allocation7 + $0x274] sm:$0xf]
        %v1281 = vld [vmem:[#allocation7 + $0x278] sm:$0xf]
        %v1282 = vld [vmem:[#allocation7 + $0x27c] sm:$0xf]
        %v1283 = vld [vmem:[#allocation7 + $0x280] sm:$0xf]
        %v1284 = vld [vmem:[#allocation7 + $0x284] sm:$0xf]
        %v1285 = vld [vmem:[#allocation7 + $0x288] sm:$0xf]
        %v1286 = vld [vmem:[#allocation7 + $0x28c] sm:$0xf]
        %v1287 = vld [vmem:[#allocation9 + $0x12] sm:$0x1]
        %v1288 = vlaneseq
        %v1289 = vshrl.u32 %v1288, 7
        %v1290 = vsub.s32 0, %v1289
        %v1291 = vrot.slane %v1287, %v1290
        %v1300 = vunpack.c.l.b16 %v1279
        %v1301 = vunpack.c.l.b16 %v1280
        %v1302 = vunpack.c.l.b16 %v1281
        %v1303 = vunpack.c.l.b16 %v1282
        %v1304 = vunpack.c.l.b16 %v1283
        %v1305 = vunpack.c.l.b16 %v1284
        %v1306 = vunpack.c.l.b16 %v1285
        %v1307 = vunpack.c.l.b16 %v1286
        %v1308 = vpack.c.b16 %v1301, %v1300
        %v1309 = vpack.c.b16 %v1303, %v1302
        %v1310 = vpack.c.b16 %v1305, %v1304
        %v1311 = vpack.c.b16 %v1307, %v1306
        %v1317 = vsel %vm787, %v1278, 0
        %1319 = vmatprep.subr.bf16.mxu0 0
        %1320 = vmatpush1.bf16.msra.mxu0 0
        %1321 = vmatprep.subr.bf16.mxu0 0
        %1322 = vmatpush1.bf16.msra.mxu0 0
        %1323 = vmatprep.subr.bf16.mxu0 0
        %1324 = vmatpush1.bf16.msra.mxu0 0
        %1325 = vmatprep.subr.bf16.mxu0 0
        %1326 = vmatpush1.bf16.msra.mxu0 0
        %1327 = vmatprep.subr.bf16.mxu0 0
        %1328 = vmatpush1.bf16.msra.mxu0 %v1311
        %1329 = vmatprep.subr.bf16.mxu0 0
        %1330 = vmatpush1.bf16.msra.mxu0 %v1310
        %1331 = vmatprep.subr.bf16.mxu0 0
        %1332 = vmatpush1.bf16.msra.mxu0 %v1309
        %1333 = vmatprep.subr.bf16.mxu0 0
        %1334 = vmatpush1.bf16.msra.mxu0 %v1308
        %1335 = vmatprep.subr.bf16.mxu0 0
        %1336 = vmatpush2.bf16.msra.mxu0 0
        %1337 = vmatprep.subr.bf16.mxu0 0
        %1338 = vmatpush2.bf16.msra.mxu0 0
        %1339 = vmatprep.subr.bf16.mxu0 0
        %1340 = vmatpush2.bf16.msra.mxu0 0
        %1341 = vmatprep.subr.bf16.mxu0 0
        %1342 = vmatpush2.bf16.msra.mxu0 0
        %1343 = vmatprep.subr.bf16.mxu0 0
        %1344 = vmatpush2.bf16.msra.mxu0 0
        %1345 = vmatprep.subr.bf16.mxu0 0
        %1346 = vmatpush2.bf16.msra.mxu0 0
        %1347 = vmatprep.subr.bf16.mxu0 0
        %1348 = vmatpush2.bf16.msra.mxu0 0
        %1349 = vmatprep.subr.bf16.mxu0 0
        %1350 = vmatpush2.bf16.msra.mxu0 0
        %1351 = vmatprep.mubr.bf16.mxu0 0
        %1352 = vmatmul.mubr.bf16.gmra.mxu0 %v1317
        %v1353 = vpop.f32.mrf.mxu0
        %v1354 = vadd.f32 %v1291, %v1353
        %v1355 = vpop.f32.mrf.mxu0
        %v1356 = vpop.f32.mrf.mxu0
        %v1357 = vadd.f32 %v1291, %v1356
        %v1358 = vpop.f32.mrf.mxu0
        %1359 = vdwg.mxu0
        %v1360 = vmax.f32 %v1354, 0.0
        %v1361 = vmax.f32 %v1357, 0.0
        %v1362 = vpack.c.bf16 %v1361, %v1360
        %v1363 = vld [vmem:[#allocation7 + $0x290] sm:$0xf]
        %v1364 = vld [vmem:[#allocation7 + $0x294] sm:$0xf]
        %v1365 = vld [vmem:[#allocation7 + $0x298] sm:$0xf]
        %v1366 = vld [vmem:[#allocation7 + $0x29c] sm:$0xf]
        %v1367 = vld [vmem:[#allocation7 + $0x2a0] sm:$0xf]
        %v1368 = vld [vmem:[#allocation7 + $0x2a4] sm:$0xf]
        %v1369 = vld [vmem:[#allocation7 + $0x2a8] sm:$0xf]
        %v1370 = vld [vmem:[#allocation7 + $0x2ac] sm:$0xf]
        %v1371 = vld [vmem:[#allocation7 + $0x2b0] sm:$0xf]
        %v1372 = vld [vmem:[#allocation7 + $0x2b4] sm:$0xf]
        %v1373 = vld [vmem:[#allocation7 + $0x2b8] sm:$0xf]
        %v1374 = vld [vmem:[#allocation7 + $0x2bc] sm:$0xf]
        %v1375 = vld [vmem:[#allocation7 + $0x2c0] sm:$0xf]
        %v1376 = vld [vmem:[#allocation7 + $0x2c4] sm:$0xf]
        %v1377 = vld [vmem:[#allocation7 + $0x2c8] sm:$0xf]
        %v1378 = vld [vmem:[#allocation7 + $0x2cc] sm:$0xf]
        %v1379 = vld [vmem:[#allocation9 + $0x13] sm:$0x1]
        %v1380 = vlaneseq
        %v1381 = vshrl.u32 %v1380, 7
        %v1382 = vsub.s32 0, %v1381
        %v1383 = vrot.slane %v1379, %v1382
        %v1400 = vunpack.c.l.b16 %v1363
        %v1401 = vunpack.c.l.b16 %v1364
        %v1402 = vunpack.c.l.b16 %v1365
        %v1403 = vunpack.c.l.b16 %v1366
        %v1404 = vunpack.c.l.b16 %v1367
        %v1405 = vunpack.c.l.b16 %v1368
        %v1406 = vunpack.c.l.b16 %v1369
        %v1407 = vunpack.c.l.b16 %v1370
        %v1408 = vunpack.c.l.b16 %v1371
        %v1409 = vunpack.c.l.b16 %v1372
        %v1410 = vunpack.c.l.b16 %v1373
        %v1411 = vunpack.c.l.b16 %v1374
        %v1412 = vunpack.c.l.b16 %v1375
        %v1413 = vunpack.c.l.b16 %v1376
        %v1414 = vunpack.c.l.b16 %v1377
        %v1415 = vunpack.c.l.b16 %v1378
        %v1416 = vpack.c.b16 %v1401, %v1400
        %v1417 = vpack.c.b16 %v1403, %v1402
        %v1418 = vpack.c.b16 %v1405, %v1404
        %v1419 = vpack.c.b16 %v1407, %v1406
        %v1420 = vpack.c.b16 %v1409, %v1408
        %v1421 = vpack.c.b16 %v1411, %v1410
        %v1422 = vpack.c.b16 %v1413, %v1412
        %v1423 = vpack.c.b16 %v1415, %v1414
        %1432 = vmatprep.subr.bf16.mxu0 0
        %1433 = vmatpush1.bf16.msra.mxu0 %v1423
        %1434 = vmatprep.subr.bf16.mxu0 0
        %1435 = vmatpush1.bf16.msra.mxu0 %v1422
        %1436 = vmatprep.subr.bf16.mxu0 0
        %1437 = vmatpush1.bf16.msra.mxu0 %v1421
        %1438 = vmatprep.subr.bf16.mxu0 0
        %1439 = vmatpush1.bf16.msra.mxu0 %v1420
        %1440 = vmatprep.subr.bf16.mxu0 0
        %1441 = vmatpush1.bf16.msra.mxu0 %v1419
        %1442 = vmatprep.subr.bf16.mxu0 0
        %1443 = vmatpush1.bf16.msra.mxu0 %v1418
        %1444 = vmatprep.subr.bf16.mxu0 0
        %1445 = vmatpush1.bf16.msra.mxu0 %v1417
        %1446 = vmatprep.subr.bf16.mxu0 0
        %1447 = vmatpush1.bf16.msra.mxu0 %v1416
        %1448 = vmatprep.subr.bf16.mxu0 0
        %1449 = vmatpush2.bf16.msra.mxu0 0
        %1450 = vmatprep.subr.bf16.mxu0 0
        %1451 = vmatpush2.bf16.msra.mxu0 0
        %1452 = vmatprep.subr.bf16.mxu0 0
        %1453 = vmatpush2.bf16.msra.mxu0 0
        %1454 = vmatprep.subr.bf16.mxu0 0
        %1455 = vmatpush2.bf16.msra.mxu0 0
        %1456 = vmatprep.subr.bf16.mxu0 0
        %1457 = vmatpush2.bf16.msra.mxu0 0
        %1458 = vmatprep.subr.bf16.mxu0 0
        %1459 = vmatpush2.bf16.msra.mxu0 0
        %1460 = vmatprep.subr.bf16.mxu0 0
        %1461 = vmatpush2.bf16.msra.mxu0 0
        %1462 = vmatprep.subr.bf16.mxu0 0
        %1463 = vmatpush2.bf16.msra.mxu0 0
        %1464 = vmatprep.mubr.bf16.mxu0 0
        %1465 = vmatmul.mubr.bf16.gmra.mxu0 %v1362
        %v1466 = vpop.f32.mrf.mxu0
        %v1467 = vadd.f32 %v1383, %v1466
        %v1468 = vpop.f32.mrf.mxu0
        %v1469 = vpop.f32.mrf.mxu0
        %v1470 = vadd.f32 %v1383, %v1469
        %v1471 = vpop.f32.mrf.mxu0
        %1472 = vdwg.mxu0
        %v1473 = vadd.f32 %v1467, %v1276
        %v1474 = vadd.f32 %v1470, %v1277
        %v1475 = vsel %vm787, %v1473, 0.0
        %1476 = vadd.xlane.f32.xlu0 %v1475
        %v1477 = vpop.xlane.xlu0 %1476
        %v1478 = vsel %vm787, %v1474, 0.0
        %1479 = vadd.xlane.f32.xlu0 %v1478
        %v1480 = vpop.xlane.xlu0 %1479
        %v1481 = vmul.f32 %v1477, %v1243
        %v1482 = vmul.f32 %v1480, %v1243
        %v1483 = vsub.f32 %v1473, %v1481
        %v1484 = vsub.f32 %v1474, %v1482
        %v1485 = vmul.f32 %v1483, %v1483
        %v1486 = vmul.f32 %v1484, %v1484
        %v1487 = vsel %vm787, %v1485, 0.0
        %1488 = vadd.xlane.f32.xlu0 %v1487
        %v1489 = vpop.xlane.xlu0 %1488
        %v1490 = vsel %vm787, %v1486, 0.0
        %1491 = vadd.xlane.f32.xlu0 %v1490
        %v1492 = vpop.xlane.xlu0 %1491
        %v1493 = vmul.f32 %v1489, %v1243
        %v1494 = vmul.f32 %v1492, %v1243
        %v1495 = vadd.f32 %v1493, 1e-05
        %v1496 = vadd.f32 %v1494, 1e-05
        %v1497 = vrsqrt.pop %v1495
        %v1498 = vrsqrt.pop %v1496
        %v1499 = vmul.f32 %v1483, %v1497
        %v1500 = vmul.f32 %v1484, %v1498
        %v1501 = vld [vmem:[#allocation9 + $0x14] sm:$0x1]
        %v1502 = vlaneseq
        %v1503 = vshrl.u32 %v1502, 7
        %v1504 = vsub.s32 0, %v1503
        %v1505 = vrot.slane %v1501, %v1504
        %v1506 = vmul.f32 %v1499, %v1505
        %v1507 = vmul.f32 %v1500, %v1505
        %v1508 = vld [vmem:[#allocation9 + $0x15] sm:$0x1]
        %v1509 = vlaneseq
        %v1510 = vshrl.u32 %v1509, 7
        %v1511 = vsub.s32 0, %v1510
        %v1512 = vrot.slane %v1508, %v1511
        %v1513 = vadd.f32 %v1506, %v1512
        %v1514 = vadd.f32 %v1507, %v1512
        %v1515 = vld [vmem:[#allocation7 + $0x110] sm:$0xf]
        %v1516 = vld [vmem:[#allocation7 + $0x114] sm:$0xf]
        %v1517 = vld [vmem:[#allocation7 + $0x118] sm:$0xf]
        %v1518 = vld [vmem:[#allocation7 + $0x11c] sm:$0xf]
        %v1519 = vld [vmem:[#allocation7 + $0x120] sm:$0xf]
        %v1520 = vld [vmem:[#allocation7 + $0x124] sm:$0xf]
        %v1521 = vld [vmem:[#allocation7 + $0x128] sm:$0xf]
        %v1522 = vld [vmem:[#allocation7 + $0x12c] sm:$0xf]
        %v1523 = vld [vmem:[#allocation7 + $0x130] sm:$0xf]
        %v1524 = vld [vmem:[#allocation7 + $0x134] sm:$0xf]
        %v1525 = vld [vmem:[#allocation7 + $0x138] sm:$0xf]
        %v1526 = vld [vmem:[#allocation7 + $0x13c] sm:$0xf]
        %v1527 = vld [vmem:[#allocation7 + $0x140] sm:$0xf]
        %v1528 = vld [vmem:[#allocation7 + $0x144] sm:$0xf]
        %v1529 = vld [vmem:[#allocation7 + $0x148] sm:$0xf]
        %v1530 = vld [vmem:[#allocation7 + $0x14c] sm:$0xf]
        %v1531 = vpack.c.bf16 %v1514, %v1513
        %v1532 = vld [vmem:[#allocation7 + $0x150] sm:$0xf]
        %v1533 = vld [vmem:[#allocation7 + $0x154] sm:$0xf]
        %v1534 = vld [vmem:[#allocation7 + $0x158] sm:$0xf]
        %v1535 = vld [vmem:[#allocation7 + $0x15c] sm:$0xf]
        %v1536 = vld [vmem:[#allocation7 + $0x160] sm:$0xf]
        %v1537 = vld [vmem:[#allocation7 + $0x164] sm:$0xf]
        %v1538 = vld [vmem:[#allocation7 + $0x168] sm:$0xf]
        %v1539 = vld [vmem:[#allocation7 + $0x16c] sm:$0xf]
        %v1548 = vunpack.c.l.b16 %v1532
        %v1549 = vunpack.c.l.b16 %v1533
        %v1550 = vunpack.c.l.b16 %v1534
        %v1551 = vunpack.c.l.b16 %v1535
        %v1552 = vunpack.c.l.b16 %v1536
        %v1553 = vunpack.c.l.b16 %v1537
        %v1554 = vunpack.c.l.b16 %v1538
        %v1555 = vunpack.c.l.b16 %v1539
        %v1556 = vpack.c.b16 %v1549, %v1548
        %v1557 = vpack.c.b16 %v1551, %v1550
        %v1558 = vpack.c.b16 %v1553, %v1552
        %v1559 = vpack.c.b16 %v1555, %v1554
        %v1565 = vsel %vm787, %v1531, 0
        %1567 = vmatprep.subr.bf16.mxu0 0
        %1568 = vmatpush1.bf16.msra.mxu0 0
        %1569 = vmatprep.subr.bf16.mxu0 0
        %1570 = vmatpush1.bf16.msra.mxu0 0
        %1571 = vmatprep.subr.bf16.mxu0 0
        %1572 = vmatpush1.bf16.msra.mxu0 0
        %1573 = vmatprep.subr.bf16.mxu0 0
        %1574 = vmatpush1.bf16.msra.mxu0 0
        %1575 = vmatprep.subr.bf16.mxu0 0
        %1576 = vmatpush1.bf16.msra.mxu0 %v1559
        %1577 = vmatprep.subr.bf16.mxu0 0
        %1578 = vmatpush1.bf16.msra.mxu0 %v1558
        %1579 = vmatprep.subr.bf16.mxu0 0
        %1580 = vmatpush1.bf16.msra.mxu0 %v1557
        %1581 = vmatprep.subr.bf16.mxu0 0
        %1582 = vmatpush1.bf16.msra.mxu0 %v1556
        %1583 = vmatprep.subr.bf16.mxu0 0
        %1584 = vmatpush2.bf16.msra.mxu0 0
        %1585 = vmatprep.subr.bf16.mxu0 0
        %1586 = vmatpush2.bf16.msra.mxu0 0
        %1587 = vmatprep.subr.bf16.mxu0 0
        %1588 = vmatpush2.bf16.msra.mxu0 0
        %1589 = vmatprep.subr.bf16.mxu0 0
        %1590 = vmatpush2.bf16.msra.mxu0 0
        %1591 = vmatprep.subr.bf16.mxu0 0
        %1592 = vmatpush2.bf16.msra.mxu0 0
        %1593 = vmatprep.subr.bf16.mxu0 0
        %1594 = vmatpush2.bf16.msra.mxu0 0
        %1595 = vmatprep.subr.bf16.mxu0 0
        %1596 = vmatpush2.bf16.msra.mxu0 0
        %1597 = vmatprep.subr.bf16.mxu0 0
        %1598 = vmatpush2.bf16.msra.mxu0 0
        %1599 = vmatprep.mubr.bf16.mxu0 0
        %1600 = vmatmul.mubr.bf16.gmra.mxu0 %v1565
        %v1601 = vpop.f32.mrf.mxu0
        %v1602 = vadd.f32 0.0, %v1601
        %v1603 = vpop.f32.mrf.mxu0
        %v1604 = vpop.f32.mrf.mxu0
        %v1605 = vadd.f32 0.0, %v1604
        %v1606 = vpop.f32.mrf.mxu0
        %1607 = vdwg.mxu0
        %v1624 = vunpack.c.l.b16 %v1515
        %v1625 = vunpack.c.l.b16 %v1516
        %v1626 = vunpack.c.l.b16 %v1517
        %v1627 = vunpack.c.l.b16 %v1518
        %v1628 = vunpack.c.l.b16 %v1519
        %v1629 = vunpack.c.l.b16 %v1520
        %v1630 = vunpack.c.l.b16 %v1521
        %v1631 = vunpack.c.l.b16 %v1522
        %v1632 = vunpack.c.l.b16 %v1523
        %v1633 = vunpack.c.l.b16 %v1524
        %v1634 = vunpack.c.l.b16 %v1525
        %v1635 = vunpack.c.l.b16 %v1526
        %v1636 = vunpack.c.l.b16 %v1527
        %v1637 = vunpack.c.l.b16 %v1528
        %v1638 = vunpack.c.l.b16 %v1529
        %v1639 = vunpack.c.l.b16 %v1530
        %v1640 = vpack.c.b16 %v1625, %v1624
        %v1641 = vpack.c.b16 %v1627, %v1626
        %v1642 = vpack.c.b16 %v1629, %v1628
        %v1643 = vpack.c.b16 %v1631, %v1630
        %v1644 = vpack.c.b16 %v1633, %v1632
        %v1645 = vpack.c.b16 %v1635, %v1634
        %v1646 = vpack.c.b16 %v1637, %v1636
        %v1647 = vpack.c.b16 %v1639, %v1638
        %1656 = vmatprep.subr.bf16.mxu0 0
        %1657 = vmatpush1.bf16.msra.mxu0 %v1647
        %1658 = vmatprep.subr.bf16.mxu0 0
        %1659 = vmatpush1.bf16.msra.mxu0 %v1646
        %1660 = vmatprep.subr.bf16.mxu0 0
        %1661 = vmatpush1.bf16.msra.mxu0 %v1645
        %1662 = vmatprep.subr.bf16.mxu0 0
        %1663 = vmatpush1.bf16.msra.mxu0 %v1644
        %1664 = vmatprep.subr.bf16.mxu0 0
        %1665 = vmatpush1.bf16.msra.mxu0 %v1643
        %1666 = vmatprep.subr.bf16.mxu0 0
        %1667 = vmatpush1.bf16.msra.mxu0 %v1642
        %1668 = vmatprep.subr.bf16.mxu0 0
        %1669 = vmatpush1.bf16.msra.mxu0 %v1641
        %1670 = vmatprep.subr.bf16.mxu0 0
        %1671 = vmatpush1.bf16.msra.mxu0 %v1640
        %1672 = vmatprep.subr.bf16.mxu0 0
        %1673 = vmatpush2.bf16.msra.mxu0 0
        %1674 = vmatprep.subr.bf16.mxu0 0
        %1675 = vmatpush2.bf16.msra.mxu0 0
        %1676 = vmatprep.subr.bf16.mxu0 0
        %1677 = vmatpush2.bf16.msra.mxu0 0
        %1678 = vmatprep.subr.bf16.mxu0 0
        %1679 = vmatpush2.bf16.msra.mxu0 0
        %1680 = vmatprep.subr.bf16.mxu0 0
        %1681 = vmatpush2.bf16.msra.mxu0 0
        %1682 = vmatprep.subr.bf16.mxu0 0
        %1683 = vmatpush2.bf16.msra.mxu0 0
        %1684 = vmatprep.subr.bf16.mxu0 0
        %1685 = vmatpush2.bf16.msra.mxu0 0
        %1686 = vmatprep.subr.bf16.mxu0 0
        %1687 = vmatpush2.bf16.msra.mxu0 0
        %1688 = vmatprep.mubr.bf16.mxu0 0
        %1689 = vmatmul.mubr.bf16.gmra.mxu0 %v259
        %v1690 = vpop.f32.mrf.mxu0
        %v1691 = vadd.f32 %v1602, %v1690
        %v1692 = vpop.f32.mrf.mxu0
        %v1693 = vpop.f32.mrf.mxu0
        %v1694 = vadd.f32 %v1605, %v1693
        %v1695 = vpop.f32.mrf.mxu0
        %1696 = vdwg.mxu0
        %v1697 = vld [vmem:[#allocation9 + $0x4] sm:$0x1]
        %v1698 = vlaneseq
        %v1699 = vshrl.u32 %v1698, 7
        %v1700 = vsub.s32 0, %v1699
        %v1701 = vrot.slane %v1697, %v1700
        %v1702 = vadd.f32 %v1691, %v1701
        %v1703 = vadd.f32 %v1694, %v1701
        %v1704 = vld [vmem:[#allocation7 + $0x170] sm:$0xf]
        %v1705 = vld [vmem:[#allocation7 + $0x174] sm:$0xf]
        %v1706 = vld [vmem:[#allocation7 + $0x178] sm:$0xf]
        %v1707 = vld [vmem:[#allocation7 + $0x17c] sm:$0xf]
        %v1708 = vld [vmem:[#allocation7 + $0x180] sm:$0xf]
        %v1709 = vld [vmem:[#allocation7 + $0x184] sm:$0xf]
        %v1710 = vld [vmem:[#allocation7 + $0x188] sm:$0xf]
        %v1711 = vld [vmem:[#allocation7 + $0x18c] sm:$0xf]
        %v1712 = vld [vmem:[#allocation7 + $0x190] sm:$0xf]
        %v1713 = vld [vmem:[#allocation7 + $0x194] sm:$0xf]
        %v1714 = vld [vmem:[#allocation7 + $0x198] sm:$0xf]
        %v1715 = vld [vmem:[#allocation7 + $0x19c] sm:$0xf]
        %v1716 = vld [vmem:[#allocation7 + $0x1a0] sm:$0xf]
        %v1717 = vld [vmem:[#allocation7 + $0x1a4] sm:$0xf]
        %v1718 = vld [vmem:[#allocation7 + $0x1a8] sm:$0xf]
        %v1719 = vld [vmem:[#allocation7 + $0x1ac] sm:$0xf]
        %v1720 = vld [vmem:[#allocation9 + $0x5] sm:$0x1]
        %v1721 = vlaneseq
        %v1722 = vshrl.u32 %v1721, 7
        %v1723 = vsub.s32 0, %v1722
        %v1724 = vrot.slane %v1720, %v1723
        %v1741 = vunpack.c.l.b16 %v1704
        %v1742 = vunpack.c.l.b16 %v1705
        %v1743 = vunpack.c.l.b16 %v1706
        %v1744 = vunpack.c.l.b16 %v1707
        %v1745 = vunpack.c.l.b16 %v1708
        %v1746 = vunpack.c.l.b16 %v1709
        %v1747 = vunpack.c.l.b16 %v1710
        %v1748 = vunpack.c.l.b16 %v1711
        %v1749 = vunpack.c.l.b16 %v1712
        %v1750 = vunpack.c.l.b16 %v1713
        %v1751 = vunpack.c.l.b16 %v1714
        %v1752 = vunpack.c.l.b16 %v1715
        %v1753 = vunpack.c.l.b16 %v1716
        %v1754 = vunpack.c.l.b16 %v1717
        %v1755 = vunpack.c.l.b16 %v1718
        %v1756 = vunpack.c.l.b16 %v1719
        %v1757 = vpack.c.b16 %v1742, %v1741
        %v1758 = vpack.c.b16 %v1744, %v1743
        %v1759 = vpack.c.b16 %v1746, %v1745
        %v1760 = vpack.c.b16 %v1748, %v1747
        %v1761 = vpack.c.b16 %v1750, %v1749
        %v1762 = vpack.c.b16 %v1752, %v1751
        %v1763 = vpack.c.b16 %v1754, %v1753
        %v1764 = vpack.c.b16 %v1756, %v1755
        %1773 = vmatprep.subr.bf16.mxu0 0
        %1774 = vmatpush1.bf16.msra.mxu0 %v1764
        %1775 = vmatprep.subr.bf16.mxu0 0
        %1776 = vmatpush1.bf16.msra.mxu0 %v1763
        %1777 = vmatprep.subr.bf16.mxu0 0
        %1778 = vmatpush1.bf16.msra.mxu0 %v1762
        %1779 = vmatprep.subr.bf16.mxu0 0
        %1780 = vmatpush1.bf16.msra.mxu0 %v1761
        %1781 = vmatprep.subr.bf16.mxu0 0
        %1782 = vmatpush1.bf16.msra.mxu0 %v1760
        %1783 = vmatprep.subr.bf16.mxu0 0
        %1784 = vmatpush1.bf16.msra.mxu0 %v1759
        %1785 = vmatprep.subr.bf16.mxu0 0
        %1786 = vmatpush1.bf16.msra.mxu0 %v1758
        %1787 = vmatprep.subr.bf16.mxu0 0
        %1788 = vmatpush1.bf16.msra.mxu0 %v1757
        %1789 = vmatprep.subr.bf16.mxu0 0
        %1790 = vmatpush2.bf16.msra.mxu0 0
        %1791 = vmatprep.subr.bf16.mxu0 0
        %1792 = vmatpush2.bf16.msra.mxu0 0
        %1793 = vmatprep.subr.bf16.mxu0 0
        %1794 = vmatpush2.bf16.msra.mxu0 0
        %1795 = vmatprep.subr.bf16.mxu0 0
        %1796 = vmatpush2.bf16.msra.mxu0 0
        %1797 = vmatprep.subr.bf16.mxu0 0
        %1798 = vmatpush2.bf16.msra.mxu0 0
        %1799 = vmatprep.subr.bf16.mxu0 0
        %1800 = vmatpush2.bf16.msra.mxu0 0
        %1801 = vmatprep.subr.bf16.mxu0 0
        %1802 = vmatpush2.bf16.msra.mxu0 0
        %1803 = vmatprep.subr.bf16.mxu0 0
        %1804 = vmatpush2.bf16.msra.mxu0 0
        %1805 = vmatprep.mubr.bf16.mxu0 0
        %1806 = vmatmul.mubr.bf16.gmra.mxu0 %v259
        %v1807 = vpop.f32.mrf.mxu0
        %v1808 = vadd.f32 %v1724, %v1807
        %v1809 = vpop.f32.mrf.mxu0
        %v1810 = vpop.f32.mrf.mxu0
        %v1811 = vadd.f32 %v1724, %v1810
        %v1812 = vpop.f32.mrf.mxu0
        %1813 = vdwg.mxu0
        %v1814 = vpack.c.bf16 %v1703, %v1702
        %v1815 = vld [vmem:[#allocation7 + $0x2d0] sm:$0xf]
        %v1816 = vld [vmem:[#allocation7 + $0x2d4] sm:$0xf]
        %v1817 = vld [vmem:[#allocation7 + $0x2d8] sm:$0xf]
        %v1818 = vld [vmem:[#allocation7 + $0x2dc] sm:$0xf]
        %v1819 = vld [vmem:[#allocation7 + $0x2e0] sm:$0xf]
        %v1820 = vld [vmem:[#allocation7 + $0x2e4] sm:$0xf]
        %v1821 = vld [vmem:[#allocation7 + $0x2e8] sm:$0xf]
        %v1822 = vld [vmem:[#allocation7 + $0x2ec] sm:$0xf]
        %v1823 = vld [vmem:[#allocation9 + $0x16] sm:$0x1]
        %v1824 = vlaneseq
        %v1825 = vshrl.u32 %v1824, 7
        %v1826 = vsub.s32 0, %v1825
        %v1827 = vrot.slane %v1823, %v1826
        %v1836 = vunpack.c.l.b16 %v1815
        %v1837 = vunpack.c.l.b16 %v1816
        %v1838 = vunpack.c.l.b16 %v1817
        %v1839 = vunpack.c.l.b16 %v1818
        %v1840 = vunpack.c.l.b16 %v1819
        %v1841 = vunpack.c.l.b16 %v1820
        %v1842 = vunpack.c.l.b16 %v1821
        %v1843 = vunpack.c.l.b16 %v1822
        %v1844 = vpack.c.b16 %v1837, %v1836
        %v1845 = vpack.c.b16 %v1839, %v1838
        %v1846 = vpack.c.b16 %v1841, %v1840
        %v1847 = vpack.c.b16 %v1843, %v1842
        %v1853 = vsel %vm787, %v1814, 0
        %1855 = vmatprep.subr.bf16.mxu0 0
        %1856 = vmatpush1.bf16.msra.mxu0 0
        %1857 = vmatprep.subr.bf16.mxu0 0
        %1858 = vmatpush1.bf16.msra.mxu0 0
        %1859 = vmatprep.subr.bf16.mxu0 0
        %1860 = vmatpush1.bf16.msra.mxu0 0
        %1861 = vmatprep.subr.bf16.mxu0 0
        %1862 = vmatpush1.bf16.msra.mxu0 0
        %1863 = vmatprep.subr.bf16.mxu0 0
        %1864 = vmatpush1.bf16.msra.mxu0 %v1847
        %1865 = vmatprep.subr.bf16.mxu0 0
        %1866 = vmatpush1.bf16.msra.mxu0 %v1846
        %1867 = vmatprep.subr.bf16.mxu0 0
        %1868 = vmatpush1.bf16.msra.mxu0 %v1845
        %1869 = vmatprep.subr.bf16.mxu0 0
        %1870 = vmatpush1.bf16.msra.mxu0 %v1844
        %1871 = vmatprep.subr.bf16.mxu0 0
        %1872 = vmatpush2.bf16.msra.mxu0 0
        %1873 = vmatprep.subr.bf16.mxu0 0
        %1874 = vmatpush2.bf16.msra.mxu0 0
        %1875 = vmatprep.subr.bf16.mxu0 0
        %1876 = vmatpush2.bf16.msra.mxu0 0
        %1877 = vmatprep.subr.bf16.mxu0 0
        %1878 = vmatpush2.bf16.msra.mxu0 0
        %1879 = vmatprep.subr.bf16.mxu0 0
        %1880 = vmatpush2.bf16.msra.mxu0 0
        %1881 = vmatprep.subr.bf16.mxu0 0
        %1882 = vmatpush2.bf16.msra.mxu0 0
        %1883 = vmatprep.subr.bf16.mxu0 0
        %1884 = vmatpush2.bf16.msra.mxu0 0
        %1885 = vmatprep.subr.bf16.mxu0 0
        %1886 = vmatpush2.bf16.msra.mxu0 0
        %1887 = vmatprep.mubr.bf16.mxu0 0
        %1888 = vmatmul.mubr.bf16.gmra.mxu0 %v1853
        %v1889 = vpop.f32.mrf.mxu0
        %v1890 = vadd.f32 %v1827, %v1889
        %v1891 = vpop.f32.mrf.mxu0
        %v1892 = vpop.f32.mrf.mxu0
        %v1893 = vadd.f32 %v1827, %v1892
        %v1894 = vpop.f32.mrf.mxu0
        %1895 = vdwg.mxu0
        %v1896 = vpack.c.bf16 %v1893, %v1890
        %v1897 = vpack.c.bf16 %v1811, %v1808
        %v1898 = vld [vmem:[#allocation7 + $0x2f0] sm:$0xf]
        %v1899 = vld [vmem:[#allocation7 + $0x2f4] sm:$0xf]
        %v1900 = vld [vmem:[#allocation7 + $0x2f8] sm:$0xf]
        %v1901 = vld [vmem:[#allocation7 + $0x2fc] sm:$0xf]
        %v1902 = vld [vmem:[#allocation7 + $0x300] sm:$0xf]
        %v1903 = vld [vmem:[#allocation7 + $0x304] sm:$0xf]
        %v1904 = vld [vmem:[#allocation7 + $0x308] sm:$0xf]
        %v1905 = vld [vmem:[#allocation7 + $0x30c] sm:$0xf]
        %v1906 = vld [vmem:[#allocation9 + $0x17] sm:$0x1]
        %v1907 = vlaneseq
        %v1908 = vshrl.u32 %v1907, 7
        %v1909 = vsub.s32 0, %v1908
        %v1910 = vrot.slane %v1906, %v1909
        %v1919 = vunpack.c.l.b16 %v1898
        %v1920 = vunpack.c.l.b16 %v1899
        %v1921 = vunpack.c.l.b16 %v1900
        %v1922 = vunpack.c.l.b16 %v1901
        %v1923 = vunpack.c.l.b16 %v1902
        %v1924 = vunpack.c.l.b16 %v1903
        %v1925 = vunpack.c.l.b16 %v1904
        %v1926 = vunpack.c.l.b16 %v1905
        %v1927 = vpack.c.b16 %v1920, %v1919
        %v1928 = vpack.c.b16 %v1922, %v1921
        %v1929 = vpack.c.b16 %v1924, %v1923
        %v1930 = vpack.c.b16 %v1926, %v1925
        %v1936 = vsel %vm787, %v1897, 0
        %1938 = vmatprep.subr.bf16.mxu0 0
        %1939 = vmatpush1.bf16.msra.mxu0 0
        %1940 = vmatprep.subr.bf16.mxu0 0
        %1941 = vmatpush1.bf16.msra.mxu0 0
        %1942 = vmatprep.subr.bf16.mxu0 0
        %1943 = vmatpush1.bf16.msra.mxu0 0
        %1944 = vmatprep.subr.bf16.mxu0 0
        %1945 = vmatpush1.bf16.msra.mxu0 0
        %1946 = vmatprep.subr.bf16.mxu0 0
        %1947 = vmatpush1.bf16.msra.mxu0 %v1930
        %1948 = vmatprep.subr.bf16.mxu0 0
        %1949 = vmatpush1.bf16.msra.mxu0 %v1929
        %1950 = vmatprep.subr.bf16.mxu0 0
        %1951 = vmatpush1.bf16.msra.mxu0 %v1928
        %1952 = vmatprep.subr.bf16.mxu0 0
        %1953 = vmatpush1.bf16.msra.mxu0 %v1927
        %1954 = vmatprep.subr.bf16.mxu0 0
        %1955 = vmatpush2.bf16.msra.mxu0 0
        %1956 = vmatprep.subr.bf16.mxu0 0
        %1957 = vmatpush2.bf16.msra.mxu0 0
        %1958 = vmatprep.subr.bf16.mxu0 0
        %1959 = vmatpush2.bf16.msra.mxu0 0
        %1960 = vmatprep.subr.bf16.mxu0 0
        %1961 = vmatpush2.bf16.msra.mxu0 0
        %1962 = vmatprep.subr.bf16.mxu0 0
        %1963 = vmatpush2.bf16.msra.mxu0 0
        %1964 = vmatprep.subr.bf16.mxu0 0
        %1965 = vmatpush2.bf16.msra.mxu0 0
        %1966 = vmatprep.subr.bf16.mxu0 0
        %1967 = vmatpush2.bf16.msra.mxu0 0
        %1968 = vmatprep.subr.bf16.mxu0 0
        %1969 = vmatpush2.bf16.msra.mxu0 0
        %1970 = vmatprep.mubr.bf16.mxu0 0
        %1971 = vmatmul.mubr.bf16.gmra.mxu0 %v1936
        %v1972 = vpop.f32.mrf.mxu0
        %v1973 = vadd.f32 %v1910, %v1972
        %v1974 = vpop.f32.mrf.mxu0
        %v1975 = vpop.f32.mrf.mxu0
        %v1976 = vadd.f32 %v1910, %v1975
        %v1977 = vpop.f32.mrf.mxu0
        %1978 = vdwg.mxu0
        %v1979 = vpack.c.bf16 %v1976, %v1973
        %1981 = vrot.lane.b32.xlu0 %v1896, 96
        %v1982 = vpop.permute.xlu0 %1981
        %v1984 = vsel %vm919, %v1979, 0
        %v1987 = vsel %vm919, %v1982, 0
        %1989 = vmatprep.subr.bf16.mxu0 0
        %1990 = vmatpush1.bf16.xpose.msra.mxu0 0
        %1991 = vmatprep.subr.bf16.mxu0 0
        %1992 = vmatpush1.bf16.xpose.msra.mxu0 0
        %1993 = vmatprep.subr.bf16.mxu0 0
        %1994 = vmatpush1.bf16.xpose.msra.mxu0 0
        %1995 = vmatprep.subr.bf16.mxu0 0
        %1996 = vmatpush1.bf16.xpose.msra.mxu0 0
        %1997 = vmatprep.subr.bf16.mxu0 0
        %1998 = vmatpush1.bf16.xpose.msra.mxu0 0
        %1999 = vmatprep.subr.bf16.mxu0 0
        %2000 = vmatpush1.bf16.xpose.msra.mxu0 0
        %2001 = vmatprep.subr.bf16.mxu0 0
        %2002 = vmatpush1.bf16.xpose.msra.mxu0 0
        %2003 = vmatprep.subr.bf16.mxu0 0
        %2004 = vmatpush1.bf16.xpose.msra.mxu0 %v1987
        %2005 = vmatprep.subr.bf16.mxu0 0
        %2006 = vmatpush2.bf16.xpose.msra.mxu0 0
        %2007 = vmatprep.subr.bf16.mxu0 0
        %2008 = vmatpush2.bf16.xpose.msra.mxu0 0
        %2009 = vmatprep.subr.bf16.mxu0 0
        %2010 = vmatpush2.bf16.xpose.msra.mxu0 0
        %2011 = vmatprep.subr.bf16.mxu0 0
        %2012 = vmatpush2.bf16.xpose.msra.mxu0 0
        %2013 = vmatprep.subr.bf16.mxu0 0
        %2014 = vmatpush2.bf16.xpose.msra.mxu0 0
        %2015 = vmatprep.subr.bf16.mxu0 0
        %2016 = vmatpush2.bf16.xpose.msra.mxu0 0
        %2017 = vmatprep.subr.bf16.mxu0 0
        %2018 = vmatpush2.bf16.xpose.msra.mxu0 0
        %2019 = vmatprep.subr.bf16.mxu0 0
        %2020 = vmatpush2.bf16.xpose.msra.mxu0 0
        %2021 = vmatprep.mubr.bf16.mxu0 0
        %2022 = vmatmul.mubr.bf16.gmra.mxu0 %v1984
        %v2023 = vpop.f32.mrf.mxu0
        %v2024 = vadd.f32 %v231, %v2023
        %v2025 = vpop.f32.mrf.mxu0
        %v2026 = vpop.f32.mrf.mxu0
        %v2027 = vadd.f32 %v231, %v2026
        %v2028 = vpop.f32.mrf.mxu0
        %2029 = vdwg.mxu0
        %v2030 = vsel %vm919, %v2024, -inf
        %2031 = vmax.xlane.f32.xlu0 %v2030
        %v2032 = vpop.xlane.xlu0 %2031
        %v2033 = vsel %vm919, %v2027, -inf
        %2034 = vmax.xlane.f32.xlu0 %v2033
        %v2035 = vpop.xlane.xlu0 %2034
        %v2036 = vsub.f32 %v2024, %v2032
        %v2037 = vsub.f32 %v2027, %v2035
        %v2038 = vmul.f32 %v2036, 1.442695
        %v2039 = vpow.pop %v2038
        %v2040 = vmul.f32 %v2037, 1.442695
        %v2041 = vpow.pop %v2040
        %v2042 = vsel %vm919, %v2039, 0.0
        %2043 = vadd.xlane.f32.xlu0 %v2042
        %v2044 = vpop.xlane.xlu0 %2043
        %v2045 = vsel %vm919, %v2041, 0.0
        %2046 = vadd.xlane.f32.xlu0 %v2045
        %v2047 = vpop.xlane.xlu0 %2046
        %v2048 = vrcp.pop %v2044
        %v2049 = vrcp.pop %v2047
        %v2050 = vmul.f32 %v2039, %v2048
        %v2051 = vmul.f32 %v2041, %v2049
        %v2052 = vpack.c.bf16 %v2051, %v2050
        %2053 = vrot.lane.b32.xlu0 %v1896, 64
        %v2054 = vpop.permute.xlu0 %2053
        %v2057 = vsel %vm919, %v2052, 0
        %2059 = vmatprep.subr.bf16.mxu0 0
        %2060 = vmatpush1.bf16.msra.mxu0 0
        %2061 = vmatprep.subr.bf16.mxu0 0
        %2062 = vmatpush1.bf16.msra.mxu0 0
        %2063 = vmatprep.subr.bf16.mxu0 0
        %2064 = vmatpush1.bf16.msra.mxu0 0
        %2065 = vmatprep.subr.bf16.mxu0 0
        %2066 = vmatpush1.bf16.msra.mxu0 0
        %2067 = vmatprep.subr.bf16.mxu0 0
        %2068 = vmatpush1.bf16.msra.mxu0 0
        %2069 = vmatprep.subr.bf16.mxu0 0
        %2070 = vmatpush1.bf16.msra.mxu0 0
        %2071 = vmatprep.subr.bf16.mxu0 0
        %2072 = vmatpush1.bf16.msra.mxu0 0
        %2073 = vmatprep.subr.bf16.mxu0 0
        %2074 = vmatpush1.bf16.msra.mxu0 %v2054
        %2075 = vmatprep.subr.bf16.mxu0 0
        %2076 = vmatpush2.bf16.msra.mxu0 0
        %2077 = vmatprep.subr.bf16.mxu0 0
        %2078 = vmatpush2.bf16.msra.mxu0 0
        %2079 = vmatprep.subr.bf16.mxu0 0
        %2080 = vmatpush2.bf16.msra.mxu0 0
        %2081 = vmatprep.subr.bf16.mxu0 0
        %2082 = vmatpush2.bf16.msra.mxu0 0
        %2083 = vmatprep.subr.bf16.mxu0 0
        %2084 = vmatpush2.bf16.msra.mxu0 0
        %2085 = vmatprep.subr.bf16.mxu0 0
        %2086 = vmatpush2.bf16.msra.mxu0 0
        %2087 = vmatprep.subr.bf16.mxu0 0
        %2088 = vmatpush2.bf16.msra.mxu0 0
        %2089 = vmatprep.subr.bf16.mxu0 0
        %2090 = vmatpush2.bf16.msra.mxu0 0
        %2091 = vmatprep.mubr.bf16.mxu0 0
        %2092 = vmatmul.mubr.bf16.gmra.mxu0 %v2057
        %v2093 = vpop.f32.mrf.mxu0
        %v2094 = vadd.f32 0.0, %v2093
        %v2095 = vpop.f32.mrf.mxu0
        %v2096 = vpop.f32.mrf.mxu0
        %v2097 = vadd.f32 0.0, %v2096
        %v2098 = vpop.f32.mrf.mxu0
        %2099 = vdwg.mxu0
        %2101 = vrot.lane.b32.xlu0 %v1979, 112
        %v2102 = vpop.permute.xlu0 %2101
        %2103 = vrot.lane.b32.xlu0 %v1896, 80
        %v2104 = vpop.permute.xlu0 %2103
        %v2106 = vsel %vm919, %v2102, 0
        %v2109 = vsel %vm919, %v2104, 0
        %2111 = vmatprep.subr.bf16.mxu0 0
        %2112 = vmatpush1.bf16.xpose.msra.mxu0 0
        %2113 = vmatprep.subr.bf16.mxu0 0
        %2114 = vmatpush1.bf16.xpose.msra.mxu0 0
        %2115 = vmatprep.subr.bf16.mxu0 0
        %2116 = vmatpush1.bf16.xpose.msra.mxu0 0
        %2117 = vmatprep.subr.bf16.mxu0 0
        %2118 = vmatpush1.bf16.xpose.msra.mxu0 0
        %2119 = vmatprep.subr.bf16.mxu0 0
        %2120 = vmatpush1.bf16.xpose.msra.mxu0 0
        %2121 = vmatprep.subr.bf16.mxu0 0
        %2122 = vmatpush1.bf16.xpose.msra.mxu0 0
        %2123 = vmatprep.subr.bf16.mxu0 0
        %2124 = vmatpush1.bf16.xpose.msra.mxu0 0
        %2125 = vmatprep.subr.bf16.mxu0 0
        %2126 = vmatpush1.bf16.xpose.msra.mxu0 %v2109
        %2127 = vmatprep.subr.bf16.mxu0 0
        %2128 = vmatpush2.bf16.xpose.msra.mxu0 0
        %2129 = vmatprep.subr.bf16.mxu0 0
        %2130 = vmatpush2.bf16.xpose.msra.mxu0 0
        %2131 = vmatprep.subr.bf16.mxu0 0
        %2132 = vmatpush2.bf16.xpose.msra.mxu0 0
        %2133 = vmatprep.subr.bf16.mxu0 0
        %2134 = vmatpush2.bf16.xpose.msra.mxu0 0
        %2135 = vmatprep.subr.bf16.mxu0 0
        %2136 = vmatpush2.bf16.xpose.msra.mxu0 0
        %2137 = vmatprep.subr.bf16.mxu0 0
        %2138 = vmatpush2.bf16.xpose.msra.mxu0 0
        %2139 = vmatprep.subr.bf16.mxu0 0
        %2140 = vmatpush2.bf16.xpose.msra.mxu0 0
        %2141 = vmatprep.subr.bf16.mxu0 0
        %2142 = vmatpush2.bf16.xpose.msra.mxu0 0
        %2143 = vmatprep.mubr.bf16.mxu0 0
        %2144 = vmatmul.mubr.bf16.gmra.mxu0 %v2106
        %v2145 = vpop.f32.mrf.mxu0
        %v2146 = vadd.f32 %v231, %v2145
        %v2147 = vpop.f32.mrf.mxu0
        %v2148 = vpop.f32.mrf.mxu0
        %v2149 = vadd.f32 %v231, %v2148
        %v2150 = vpop.f32.mrf.mxu0
        %2151 = vdwg.mxu0
        %v2152 = vsel %vm919, %v2146, -inf
        %2153 = vmax.xlane.f32.xlu0 %v2152
        %v2154 = vpop.xlane.xlu0 %2153
        %v2155 = vsel %vm919, %v2149, -inf
        %2156 = vmax.xlane.f32.xlu0 %v2155
        %v2157 = vpop.xlane.xlu0 %2156
        %v2158 = vsub.f32 %v2146, %v2154
        %v2159 = vsub.f32 %v2149, %v2157
        %v2160 = vmul.f32 %v2158, 1.442695
        %v2161 = vpow.pop %v2160
        %v2162 = vmul.f32 %v2159, 1.442695
        %v2163 = vpow.pop %v2162
        %v2164 = vsel %vm919, %v2161, 0.0
        %2165 = vadd.xlane.f32.xlu0 %v2164
        %v2166 = vpop.xlane.xlu0 %2165
        %v2167 = vsel %vm919, %v2163, 0.0
        %2168 = vadd.xlane.f32.xlu0 %v2167
        %v2169 = vpop.xlane.xlu0 %2168
        %v2170 = vrcp.pop %v2166
        %v2171 = vrcp.pop %v2169
        %v2172 = vmul.f32 %v2161, %v2170
        %v2173 = vmul.f32 %v2163, %v2171
        %v2174 = vpack.c.bf16 %v2173, %v2172
        %2175 = vrot.lane.b32.xlu0 %v1896, 48
        %v2176 = vpop.permute.xlu0 %2175
        %v2179 = vsel %vm919, %v2174, 0
        %2181 = vmatprep.subr.bf16.mxu0 0
        %2182 = vmatpush1.bf16.msra.mxu0 0
        %2183 = vmatprep.subr.bf16.mxu0 0
        %2184 = vmatpush1.bf16.msra.mxu0 0
        %2185 = vmatprep.subr.bf16.mxu0 0
        %2186 = vmatpush1.bf16.msra.mxu0 0
        %2187 = vmatprep.subr.bf16.mxu0 0
        %2188 = vmatpush1.bf16.msra.mxu0 0
        %2189 = vmatprep.subr.bf16.mxu0 0
        %2190 = vmatpush1.bf16.msra.mxu0 0
        %2191 = vmatprep.subr.bf16.mxu0 0
        %2192 = vmatpush1.bf16.msra.mxu0 0
        %2193 = vmatprep.subr.bf16.mxu0 0
        %2194 = vmatpush1.bf16.msra.mxu0 0
        %2195 = vmatprep.subr.bf16.mxu0 0
        %2196 = vmatpush1.bf16.msra.mxu0 %v2176
        %2197 = vmatprep.subr.bf16.mxu0 0
        %2198 = vmatpush2.bf16.msra.mxu0 0
        %2199 = vmatprep.subr.bf16.mxu0 0
        %2200 = vmatpush2.bf16.msra.mxu0 0
        %2201 = vmatprep.subr.bf16.mxu0 0
        %2202 = vmatpush2.bf16.msra.mxu0 0
        %2203 = vmatprep.subr.bf16.mxu0 0
        %2204 = vmatpush2.bf16.msra.mxu0 0
        %2205 = vmatprep.subr.bf16.mxu0 0
        %2206 = vmatpush2.bf16.msra.mxu0 0
        %2207 = vmatprep.subr.bf16.mxu0 0
        %2208 = vmatpush2.bf16.msra.mxu0 0
        %2209 = vmatprep.subr.bf16.mxu0 0
        %2210 = vmatpush2.bf16.msra.mxu0 0
        %2211 = vmatprep.subr.bf16.mxu0 0
        %2212 = vmatpush2.bf16.msra.mxu0 0
        %2213 = vmatprep.mubr.bf16.mxu0 0
        %2214 = vmatmul.mubr.bf16.gmra.mxu0 %v2179
        %v2215 = vpop.f32.mrf.mxu0
        %v2216 = vadd.f32 0.0, %v2215
        %v2217 = vpop.f32.mrf.mxu0
        %v2218 = vpop.f32.mrf.mxu0
        %v2219 = vadd.f32 0.0, %v2218
        %v2220 = vpop.f32.mrf.mxu0
        %2221 = vdwg.mxu0
        %2224 = vrot.lane.b32.xlu0 %v2216, 16
        %v2225 = vpop.permute.xlu0 %2224
        %2226 = vrot.lane.b32.xlu0 %v2219, 16
        %v2227 = vpop.permute.xlu0 %2226
        %v2230 = vsel %vm919, %v2094, %v2225
        %v2231 = vsel %vm919, %v2097, %v2227
        %v2232 = vpack.c.bf16 %v2231, %v2230
        %v2233 = vld [vmem:[#allocation7 + $0x310] sm:$0xf]
        %v2234 = vld [vmem:[#allocation7 + $0x314] sm:$0xf]
        %v2235 = vld [vmem:[#allocation7 + $0x318] sm:$0xf]
        %v2236 = vld [vmem:[#allocation7 + $0x31c] sm:$0xf]
        %v2237 = vld [vmem:[#allocation9 + $0x18] sm:$0x1]
        %v2238 = vlaneseq
        %v2239 = vshrl.u32 %v2238, 7
        %v2240 = vsub.s32 0, %v2239
        %v2241 = vrot.slane %v2237, %v2240
        %v2246 = vunpack.c.l.b16 %v2233
        %v2247 = vunpack.c.l.b16 %v2234
        %v2248 = vunpack.c.l.b16 %v2235
        %v2249 = vunpack.c.l.b16 %v2236
        %v2250 = vpack.c.b16 %v2247, %v2246
        %v2251 = vpack.c.b16 %v2249, %v2248
        %v2255 = vsel %vm374, %v2232, 0
        %2257 = vmatprep.subr.bf16.mxu0 0
        %2258 = vmatpush1.bf16.msra.mxu0 0
        %2259 = vmatprep.subr.bf16.mxu0 0
        %2260 = vmatpush1.bf16.msra.mxu0 0
        %2261 = vmatprep.subr.bf16.mxu0 0
        %2262 = vmatpush1.bf16.msra.mxu0 0
        %2263 = vmatprep.subr.bf16.mxu0 0
        %2264 = vmatpush1.bf16.msra.mxu0 0
        %2265 = vmatprep.subr.bf16.mxu0 0
        %2266 = vmatpush1.bf16.msra.mxu0 0
        %2267 = vmatprep.subr.bf16.mxu0 0
        %2268 = vmatpush1.bf16.msra.mxu0 0
        %2269 = vmatprep.subr.bf16.mxu0 0
        %2270 = vmatpush1.bf16.msra.mxu0 %v2251
        %2271 = vmatprep.subr.bf16.mxu0 0
        %2272 = vmatpush1.bf16.msra.mxu0 %v2250
        %2273 = vmatprep.subr.bf16.mxu0 0
        %2274 = vmatpush2.bf16.msra.mxu0 0
        %2275 = vmatprep.subr.bf16.mxu0 0
        %2276 = vmatpush2.bf16.msra.mxu0 0
        %2277 = vmatprep.subr.bf16.mxu0 0
        %2278 = vmatpush2.bf16.msra.mxu0 0
        %2279 = vmatprep.subr.bf16.mxu0 0
        %2280 = vmatpush2.bf16.msra.mxu0 0
        %2281 = vmatprep.subr.bf16.mxu0 0
        %2282 = vmatpush2.bf16.msra.mxu0 0
        %2283 = vmatprep.subr.bf16.mxu0 0
        %2284 = vmatpush2.bf16.msra.mxu0 0
        %2285 = vmatprep.subr.bf16.mxu0 0
        %2286 = vmatpush2.bf16.msra.mxu0 0
        %2287 = vmatprep.subr.bf16.mxu0 0
        %2288 = vmatpush2.bf16.msra.mxu0 0
        %2289 = vmatprep.mubr.bf16.mxu0 0
        %2290 = vmatmul.mubr.bf16.gmra.mxu0 %v2255
        %v2291 = vpop.f32.mrf.mxu0
        %v2292 = vadd.f32 %v2241, %v2291
        %v2293 = vpop.f32.mrf.mxu0
        %v2294 = vpop.f32.mrf.mxu0
        %v2295 = vadd.f32 %v2241, %v2294
        %v2296 = vpop.f32.mrf.mxu0
        %2297 = vdwg.mxu0
        %v2298 = vadd.f32 %v2292, %v1808
        %v2299 = vadd.f32 %v2295, %v1811
        %v2300 = vsel %vm787, %v2298, 0.0
        %2301 = vadd.xlane.f32.xlu0 %v2300
        %v2302 = vpop.xlane.xlu0 %2301
        %v2303 = vsel %vm787, %v2299, 0.0
        %2304 = vadd.xlane.f32.xlu0 %v2303
        %v2305 = vpop.xlane.xlu0 %2304
        %v2306 = vmul.f32 %v2302, %v1243
        %v2307 = vmul.f32 %v2305, %v1243
        %v2308 = vsub.f32 %v2298, %v2306
        %v2309 = vsub.f32 %v2299, %v2307
        %v2310 = vmul.f32 %v2308, %v2308
        %v2311 = vmul.f32 %v2309, %v2309
        %v2312 = vsel %vm787, %v2310, 0.0
        %2313 = vadd.xlane.f32.xlu0 %v2312
        %v2314 = vpop.xlane.xlu0 %2313
        %v2315 = vsel %vm787, %v2311, 0.0
        %2316 = vadd.xlane.f32.xlu0 %v2315
        %v2317 = vpop.xlane.xlu0 %2316
        %v2318 = vmul.f32 %v2314, %v1243
        %v2319 = vmul.f32 %v2317, %v1243
        %v2320 = vadd.f32 %v2318, 1e-05
        %v2321 = vadd.f32 %v2319, 1e-05
        %v2322 = vrsqrt.pop %v2320
        %v2323 = vrsqrt.pop %v2321
        %v2324 = vmul.f32 %v2308, %v2322
        %v2325 = vmul.f32 %v2309, %v2323
        %v2326 = vld [vmem:[#allocation9 + $0x19] sm:$0x1]
        %v2327 = vlaneseq
        %v2328 = vshrl.u32 %v2327, 7
        %v2329 = vsub.s32 0, %v2328
        %v2330 = vrot.slane %v2326, %v2329
        %v2331 = vmul.f32 %v2324, %v2330
        %v2332 = vmul.f32 %v2325, %v2330
        %v2333 = vld [vmem:[#allocation9 + $0x1a] sm:$0x1]
        %v2334 = vlaneseq
        %v2335 = vshrl.u32 %v2334, 7
        %v2336 = vsub.s32 0, %v2335
        %v2337 = vrot.slane %v2333, %v2336
        %v2338 = vadd.f32 %v2331, %v2337
        %v2339 = vadd.f32 %v2332, %v2337
        %v2340 = vpack.c.bf16 %v2339, %v2338
        %v2341 = vld [vmem:[#allocation7 + $0x320] sm:$0xf]
        %v2342 = vld [vmem:[#allocation7 + $0x324] sm:$0xf]
        %v2343 = vld [vmem:[#allocation7 + $0x328] sm:$0xf]
        %v2344 = vld [vmem:[#allocation7 + $0x32c] sm:$0xf]
        %v2345 = vld [vmem:[#allocation7 + $0x330] sm:$0xf]
        %v2346 = vld [vmem:[#allocation7 + $0x334] sm:$0xf]
        %v2347 = vld [vmem:[#allocation7 + $0x338] sm:$0xf]
        %v2348 = vld [vmem:[#allocation7 + $0x33c] sm:$0xf]
        %v2349 = vld [vmem:[#allocation9 + $0x1b] sm:$0x1]
        %v2350 = vlaneseq
        %v2351 = vshrl.u32 %v2350, 7
        %v2352 = vsub.s32 0, %v2351
        %v2353 = vrot.slane %v2349, %v2352
        %v2362 = vunpack.c.l.b16 %v2341
        %v2363 = vunpack.c.l.b16 %v2342
        %v2364 = vunpack.c.l.b16 %v2343
        %v2365 = vunpack.c.l.b16 %v2344
        %v2366 = vunpack.c.l.b16 %v2345
        %v2367 = vunpack.c.l.b16 %v2346
        %v2368 = vunpack.c.l.b16 %v2347
        %v2369 = vunpack.c.l.b16 %v2348
        %v2370 = vpack.c.b16 %v2363, %v2362
        %v2371 = vpack.c.b16 %v2365, %v2364
        %v2372 = vpack.c.b16 %v2367, %v2366
        %v2373 = vpack.c.b16 %v2369, %v2368
        %v2379 = vsel %vm787, %v2340, 0
        %2381 = vmatprep.subr.bf16.mxu0 0
        %2382 = vmatpush1.bf16.msra.mxu0 0
        %2383 = vmatprep.subr.bf16.mxu0 0
        %2384 = vmatpush1.bf16.msra.mxu0 0
        %2385 = vmatprep.subr.bf16.mxu0 0
        %2386 = vmatpush1.bf16.msra.mxu0 0
        %2387 = vmatprep.subr.bf16.mxu0 0
        %2388 = vmatpush1.bf16.msra.mxu0 0
        %2389 = vmatprep.subr.bf16.mxu0 0
        %2390 = vmatpush1.bf16.msra.mxu0 %v2373
        %2391 = vmatprep.subr.bf16.mxu0 0
        %2392 = vmatpush1.bf16.msra.mxu0 %v2372
        %2393 = vmatprep.subr.bf16.mxu0 0
        %2394 = vmatpush1.bf16.msra.mxu0 %v2371
        %2395 = vmatprep.subr.bf16.mxu0 0
        %2396 = vmatpush1.bf16.msra.mxu0 %v2370
        %2397 = vmatprep.subr.bf16.mxu0 0
        %2398 = vmatpush2.bf16.msra.mxu0 0
        %2399 = vmatprep.subr.bf16.mxu0 0
        %2400 = vmatpush2.bf16.msra.mxu0 0
        %2401 = vmatprep.subr.bf16.mxu0 0
        %2402 = vmatpush2.bf16.msra.mxu0 0
        %2403 = vmatprep.subr.bf16.mxu0 0
        %2404 = vmatpush2.bf16.msra.mxu0 0
        %2405 = vmatprep.subr.bf16.mxu0 0
        %2406 = vmatpush2.bf16.msra.mxu0 0
        %2407 = vmatprep.subr.bf16.mxu0 0
        %2408 = vmatpush2.bf16.msra.mxu0 0
        %2409 = vmatprep.subr.bf16.mxu0 0
        %2410 = vmatpush2.bf16.msra.mxu0 0
        %2411 = vmatprep.subr.bf16.mxu0 0
        %2412 = vmatpush2.bf16.msra.mxu0 0
        %2413 = vmatprep.mubr.bf16.mxu0 0
        %2414 = vmatmul.mubr.bf16.gmra.mxu0 %v2379
        %v2415 = vpop.f32.mrf.mxu0
        %v2416 = vadd.f32 %v2353, %v2415
        %v2417 = vpop.f32.mrf.mxu0
        %v2418 = vpop.f32.mrf.mxu0
        %v2419 = vadd.f32 %v2353, %v2418
        %v2420 = vpop.f32.mrf.mxu0
        %2421 = vdwg.mxu0
        %v2422 = vmax.f32 %v2416, 0.0
        %v2423 = vmax.f32 %v2419, 0.0
        %v2424 = vpack.c.bf16 %v2423, %v2422
        %v2425 = vld [vmem:[#allocation7 + $0x340] sm:$0xf]
        %v2426 = vld [vmem:[#allocation7 + $0x344] sm:$0xf]
        %v2427 = vld [vmem:[#allocation7 + $0x348] sm:$0xf]
        %v2428 = vld [vmem:[#allocation7 + $0x34c] sm:$0xf]
        %v2429 = vld [vmem:[#allocation7 + $0x350] sm:$0xf]
        %v2430 = vld [vmem:[#allocation7 + $0x354] sm:$0xf]
        %v2431 = vld [vmem:[#allocation7 + $0x358] sm:$0xf]
        %v2432 = vld [vmem:[#allocation7 + $0x35c] sm:$0xf]
        %v2433 = vld [vmem:[#allocation7 + $0x360] sm:$0xf]
        %v2434 = vld [vmem:[#allocation7 + $0x364] sm:$0xf]
        %v2435 = vld [vmem:[#allocation7 + $0x368] sm:$0xf]
        %v2436 = vld [vmem:[#allocation7 + $0x36c] sm:$0xf]
        %v2437 = vld [vmem:[#allocation7 + $0x370] sm:$0xf]
        %v2438 = vld [vmem:[#allocation7 + $0x374] sm:$0xf]
        %v2439 = vld [vmem:[#allocation7 + $0x378] sm:$0xf]
        %v2440 = vld [vmem:[#allocation7 + $0x37c] sm:$0xf]
        %v2441 = vld [vmem:[#allocation9 + $0x1c] sm:$0x1]
        %v2442 = vlaneseq
        %v2443 = vshrl.u32 %v2442, 7
        %v2444 = vsub.s32 0, %v2443
        %v2445 = vrot.slane %v2441, %v2444
        %v2462 = vunpack.c.l.b16 %v2425
        %v2463 = vunpack.c.l.b16 %v2426
        %v2464 = vunpack.c.l.b16 %v2427
        %v2465 = vunpack.c.l.b16 %v2428
        %v2466 = vunpack.c.l.b16 %v2429
        %v2467 = vunpack.c.l.b16 %v2430
        %v2468 = vunpack.c.l.b16 %v2431
        %v2469 = vunpack.c.l.b16 %v2432
        %v2470 = vunpack.c.l.b16 %v2433
        %v2471 = vunpack.c.l.b16 %v2434
        %v2472 = vunpack.c.l.b16 %v2435
        %v2473 = vunpack.c.l.b16 %v2436
        %v2474 = vunpack.c.l.b16 %v2437
        %v2475 = vunpack.c.l.b16 %v2438
        %v2476 = vunpack.c.l.b16 %v2439
        %v2477 = vunpack.c.l.b16 %v2440
        %v2478 = vpack.c.b16 %v2463, %v2462
        %v2479 = vpack.c.b16 %v2465, %v2464
        %v2480 = vpack.c.b16 %v2467, %v2466
        %v2481 = vpack.c.b16 %v2469, %v2468
        %v2482 = vpack.c.b16 %v2471, %v2470
        %v2483 = vpack.c.b16 %v2473, %v2472
        %v2484 = vpack.c.b16 %v2475, %v2474
        %v2485 = vpack.c.b16 %v2477, %v2476
        %2494 = vmatprep.subr.bf16.mxu0 0
        %2495 = vmatpush1.bf16.msra.mxu0 %v2485
        %2496 = vmatprep.subr.bf16.mxu0 0
        %2497 = vmatpush1.bf16.msra.mxu0 %v2484
        %2498 = vmatprep.subr.bf16.mxu0 0
        %2499 = vmatpush1.bf16.msra.mxu0 %v2483
        %2500 = vmatprep.subr.bf16.mxu0 0
        %2501 = vmatpush1.bf16.msra.mxu0 %v2482
        %2502 = vmatprep.subr.bf16.mxu0 0
        %2503 = vmatpush1.bf16.msra.mxu0 %v2481
        %2504 = vmatprep.subr.bf16.mxu0 0
        %2505 = vmatpush1.bf16.msra.mxu0 %v2480
        %2506 = vmatprep.subr.bf16.mxu0 0
        %2507 = vmatpush1.bf16.msra.mxu0 %v2479
        %2508 = vmatprep.subr.bf16.mxu0 0
        %2509 = vmatpush1.bf16.msra.mxu0 %v2478
        %2510 = vmatprep.subr.bf16.mxu0 0
        %2511 = vmatpush2.bf16.msra.mxu0 0
        %2512 = vmatprep.subr.bf16.mxu0 0
        %2513 = vmatpush2.bf16.msra.mxu0 0
        %2514 = vmatprep.subr.bf16.mxu0 0
        %2515 = vmatpush2.bf16.msra.mxu0 0
        %2516 = vmatprep.subr.bf16.mxu0 0
        %2517 = vmatpush2.bf16.msra.mxu0 0
        %2518 = vmatprep.subr.bf16.mxu0 0
        %2519 = vmatpush2.bf16.msra.mxu0 0
        %2520 = vmatprep.subr.bf16.mxu0 0
        %2521 = vmatpush2.bf16.msra.mxu0 0
        %2522 = vmatprep.subr.bf16.mxu0 0
        %2523 = vmatpush2.bf16.msra.mxu0 0
        %2524 = vmatprep.subr.bf16.mxu0 0
        %2525 = vmatpush2.bf16.msra.mxu0 0
        %2526 = vmatprep.mubr.bf16.mxu0 0
        %2527 = vmatmul.mubr.bf16.gmra.mxu0 %v2424
        %v2528 = vpop.f32.mrf.mxu0
        %v2529 = vadd.f32 %v2445, %v2528
        %v2530 = vpop.f32.mrf.mxu0
        %v2531 = vpop.f32.mrf.mxu0
        %v2532 = vadd.f32 %v2445, %v2531
        %v2533 = vpop.f32.mrf.mxu0
        %2534 = vdwg.mxu0
        %v2535 = vadd.f32 %v2529, %v2338
        %v2536 = vadd.f32 %v2532, %v2339
        %v2537 = vsel %vm787, %v2535, 0.0
        %2538 = vadd.xlane.f32.xlu0 %v2537
        %v2539 = vpop.xlane.xlu0 %2538
        %v2540 = vsel %vm787, %v2536, 0.0
        %2541 = vadd.xlane.f32.xlu0 %v2540
        %v2542 = vpop.xlane.xlu0 %2541
        %v2543 = vmul.f32 %v2539, %v1243
        %v2544 = vmul.f32 %v2542, %v1243
        %v2545 = vsub.f32 %v2535, %v2543
        %v2546 = vsub.f32 %v2536, %v2544
        %v2547 = vmul.f32 %v2545, %v2545
        %v2548 = vmul.f32 %v2546, %v2546
        %v2549 = vsel %vm787, %v2547, 0.0
        %2550 = vadd.xlane.f32.xlu0 %v2549
        %v2551 = vpop.xlane.xlu0 %2550
        %v2552 = vsel %vm787, %v2548, 0.0
        %2553 = vadd.xlane.f32.xlu0 %v2552
        %v2554 = vpop.xlane.xlu0 %2553
        %v2555 = vmul.f32 %v2551, %v1243
        %v2556 = vmul.f32 %v2554, %v1243
        %v2557 = vadd.f32 %v2555, 1e-05
        %v2558 = vadd.f32 %v2556, 1e-05
        %v2559 = vrsqrt.pop %v2557
        %v2560 = vrsqrt.pop %v2558
        %v2561 = vmul.f32 %v2545, %v2559
        %v2562 = vmul.f32 %v2546, %v2560
        %v2563 = vld [vmem:[#allocation9 + $0x1d] sm:$0x1]
        %v2564 = vlaneseq
        %v2565 = vshrl.u32 %v2564, 7
        %v2566 = vsub.s32 0, %v2565
        %v2567 = vrot.slane %v2563, %v2566
        %v2568 = vmul.f32 %v2561, %v2567
        %v2569 = vmul.f32 %v2562, %v2567
        %v2570 = vld [vmem:[#allocation9 + $0x1e] sm:$0x1]
        %v2571 = vlaneseq
        %v2572 = vshrl.u32 %v2571, 7
        %v2573 = vsub.s32 0, %v2572
        %v2574 = vrot.slane %v2570, %v2573
        %v2575 = vadd.f32 %v2568, %v2574
        %v2576 = vadd.f32 %v2569, %v2574
        %2577 = vrot.lane.b32.xlu0 %v1979, 96
        %v2578 = vpop.permute.xlu0 %2577
        %v2580 = vsel %vm919, %v1896, 0
        %v2583 = vsel %vm919, %v2578, 0
        %2585 = vmatprep.subr.bf16.mxu0 0
        %2586 = vmatpush1.bf16.xpose.msra.mxu0 0
        %2587 = vmatprep.subr.bf16.mxu0 0
        %2588 = vmatpush1.bf16.xpose.msra.mxu0 0
        %2589 = vmatprep.subr.bf16.mxu0 0
        %2590 = vmatpush1.bf16.xpose.msra.mxu0 0
        %2591 = vmatprep.subr.bf16.mxu0 0
        %2592 = vmatpush1.bf16.xpose.msra.mxu0 0
        %2593 = vmatprep.subr.bf16.mxu0 0
        %2594 = vmatpush1.bf16.xpose.msra.mxu0 0
        %2595 = vmatprep.subr.bf16.mxu0 0
        %2596 = vmatpush1.bf16.xpose.msra.mxu0 0
        %2597 = vmatprep.subr.bf16.mxu0 0
        %2598 = vmatpush1.bf16.xpose.msra.mxu0 0
        %2599 = vmatprep.subr.bf16.mxu0 0
        %2600 = vmatpush1.bf16.xpose.msra.mxu0 %v2583
        %2601 = vmatprep.subr.bf16.mxu0 0
        %2602 = vmatpush2.bf16.xpose.msra.mxu0 0
        %2603 = vmatprep.subr.bf16.mxu0 0
        %2604 = vmatpush2.bf16.xpose.msra.mxu0 0
        %2605 = vmatprep.subr.bf16.mxu0 0
        %2606 = vmatpush2.bf16.xpose.msra.mxu0 0
        %2607 = vmatprep.subr.bf16.mxu0 0
        %2608 = vmatpush2.bf16.xpose.msra.mxu0 0
        %2609 = vmatprep.subr.bf16.mxu0 0
        %2610 = vmatpush2.bf16.xpose.msra.mxu0 0
        %2611 = vmatprep.subr.bf16.mxu0 0
        %2612 = vmatpush2.bf16.xpose.msra.mxu0 0
        %2613 = vmatprep.subr.bf16.mxu0 0
        %2614 = vmatpush2.bf16.xpose.msra.mxu0 0
        %2615 = vmatprep.subr.bf16.mxu0 0
        %2616 = vmatpush2.bf16.xpose.msra.mxu0 0
        %2617 = vmatprep.mubr.bf16.mxu0 0
        %2618 = vmatmul.mubr.bf16.gmra.mxu0 %v2580
        %v2619 = vpop.f32.mrf.mxu0
        %v2620 = vadd.f32 %v231, %v2619
        %v2621 = vpop.f32.mrf.mxu0
        %v2622 = vpop.f32.mrf.mxu0
        %v2623 = vadd.f32 %v231, %v2622
        %v2624 = vpop.f32.mrf.mxu0
        %2625 = vdwg.mxu0
        %v2626 = vsel %vm919, %v2620, -inf
        %2627 = vmax.xlane.f32.xlu0 %v2626
        %v2628 = vpop.xlane.xlu0 %2627
        %v2629 = vsel %vm919, %v2623, -inf
        %2630 = vmax.xlane.f32.xlu0 %v2629
        %v2631 = vpop.xlane.xlu0 %2630
        %v2632 = vsub.f32 %v2620, %v2628
        %v2633 = vsub.f32 %v2623, %v2631
        %v2634 = vmul.f32 %v2632, 1.442695
        %v2635 = vpow.pop %v2634
        %v2636 = vmul.f32 %v2633, 1.442695
        %v2637 = vpow.pop %v2636
        %v2638 = vsel %vm919, %v2635, 0.0
        %2639 = vadd.xlane.f32.xlu0 %v2638
        %v2640 = vpop.xlane.xlu0 %2639
        %v2641 = vsel %vm919, %v2637, 0.0
        %2642 = vadd.xlane.f32.xlu0 %v2641
        %v2643 = vpop.xlane.xlu0 %2642
        %v2644 = vrcp.pop %v2640
        %v2645 = vrcp.pop %v2643
        %v2646 = vmul.f32 %v2635, %v2644
        %v2647 = vmul.f32 %v2637, %v2645
        %v2648 = vpack.c.bf16 %v2647, %v2646
        %2649 = vrot.lane.b32.xlu0 %v1979, 64
        %v2650 = vpop.permute.xlu0 %2649
        %v2653 = vsel %vm919, %v2648, 0
        %2655 = vmatprep.subr.bf16.mxu0 0
        %2656 = vmatpush1.bf16.msra.mxu0 0
        %2657 = vmatprep.subr.bf16.mxu0 0
        %2658 = vmatpush1.bf16.msra.mxu0 0
        %2659 = vmatprep.subr.bf16.mxu0 0
        %2660 = vmatpush1.bf16.msra.mxu0 0
        %2661 = vmatprep.subr.bf16.mxu0 0
        %2662 = vmatpush1.bf16.msra.mxu0 0
        %2663 = vmatprep.subr.bf16.mxu0 0
        %2664 = vmatpush1.bf16.msra.mxu0 0
        %2665 = vmatprep.subr.bf16.mxu0 0
        %2666 = vmatpush1.bf16.msra.mxu0 0
        %2667 = vmatprep.subr.bf16.mxu0 0
        %2668 = vmatpush1.bf16.msra.mxu0 0
        %2669 = vmatprep.subr.bf16.mxu0 0
        %2670 = vmatpush1.bf16.msra.mxu0 %v2650
        %2671 = vmatprep.subr.bf16.mxu0 0
        %2672 = vmatpush2.bf16.msra.mxu0 0
        %2673 = vmatprep.subr.bf16.mxu0 0
        %2674 = vmatpush2.bf16.msra.mxu0 0
        %2675 = vmatprep.subr.bf16.mxu0 0
        %2676 = vmatpush2.bf16.msra.mxu0 0
        %2677 = vmatprep.subr.bf16.mxu0 0
        %2678 = vmatpush2.bf16.msra.mxu0 0
        %2679 = vmatprep.subr.bf16.mxu0 0
        %2680 = vmatpush2.bf16.msra.mxu0 0
        %2681 = vmatprep.subr.bf16.mxu0 0
        %2682 = vmatpush2.bf16.msra.mxu0 0
        %2683 = vmatprep.subr.bf16.mxu0 0
        %2684 = vmatpush2.bf16.msra.mxu0 0
        %2685 = vmatprep.subr.bf16.mxu0 0
        %2686 = vmatpush2.bf16.msra.mxu0 0
        %2687 = vmatprep.mubr.bf16.mxu0 0
        %2688 = vmatmul.mubr.bf16.gmra.mxu0 %v2653
        %v2689 = vpop.f32.mrf.mxu0
        %v2690 = vadd.f32 0.0, %v2689
        %v2691 = vpop.f32.mrf.mxu0
        %v2692 = vpop.f32.mrf.mxu0
        %v2693 = vadd.f32 0.0, %v2692
        %v2694 = vpop.f32.mrf.mxu0
        %2695 = vdwg.mxu0
        %2696 = vrot.lane.b32.xlu0 %v1896, 112
        %v2697 = vpop.permute.xlu0 %2696
        %2698 = vrot.lane.b32.xlu0 %v1979, 80
        %v2699 = vpop.permute.xlu0 %2698
        %v2701 = vsel %vm919, %v2697, 0
        %v2704 = vsel %vm919, %v2699, 0
        %2706 = vmatprep.subr.bf16.mxu0 0
        %2707 = vmatpush1.bf16.xpose.msra.mxu0 0
        %2708 = vmatprep.subr.bf16.mxu0 0
        %2709 = vmatpush1.bf16.xpose.msra.mxu0 0
        %2710 = vmatprep.subr.bf16.mxu0 0
        %2711 = vmatpush1.bf16.xpose.msra.mxu0 0
        %2712 = vmatprep.subr.bf16.mxu0 0
        %2713 = vmatpush1.bf16.xpose.msra.mxu0 0
        %2714 = vmatprep.subr.bf16.mxu0 0
        %2715 = vmatpush1.bf16.xpose.msra.mxu0 0
        %2716 = vmatprep.subr.bf16.mxu0 0
        %2717 = vmatpush1.bf16.xpose.msra.mxu0 0
        %2718 = vmatprep.subr.bf16.mxu0 0
        %2719 = vmatpush1.bf16.xpose.msra.mxu0 0
        %2720 = vmatprep.subr.bf16.mxu0 0
        %2721 = vmatpush1.bf16.xpose.msra.mxu0 %v2704
        %2722 = vmatprep.subr.bf16.mxu0 0
        %2723 = vmatpush2.bf16.xpose.msra.mxu0 0
        %2724 = vmatprep.subr.bf16.mxu0 0
        %2725 = vmatpush2.bf16.xpose.msra.mxu0 0
        %2726 = vmatprep.subr.bf16.mxu0 0
        %2727 = vmatpush2.bf16.xpose.msra.mxu0 0
        %2728 = vmatprep.subr.bf16.mxu0 0
        %2729 = vmatpush2.bf16.xpose.msra.mxu0 0
        %2730 = vmatprep.subr.bf16.mxu0 0
        %2731 = vmatpush2.bf16.xpose.msra.mxu0 0
        %2732 = vmatprep.subr.bf16.mxu0 0
        %2733 = vmatpush2.bf16.xpose.msra.mxu0 0
        %2734 = vmatprep.subr.bf16.mxu0 0
        %2735 = vmatpush2.bf16.xpose.msra.mxu0 0
        %2736 = vmatprep.subr.bf16.mxu0 0
        %2737 = vmatpush2.bf16.xpose.msra.mxu0 0
        %2738 = vmatprep.mubr.bf16.mxu0 0
        %2739 = vmatmul.mubr.bf16.gmra.mxu0 %v2701
        %v2740 = vpop.f32.mrf.mxu0
        %v2741 = vadd.f32 %v231, %v2740
        %v2742 = vpop.f32.mrf.mxu0
        %v2743 = vpop.f32.mrf.mxu0
        %v2744 = vadd.f32 %v231, %v2743
        %v2745 = vpop.f32.mrf.mxu0
        %2746 = vdwg.mxu0
        %v2747 = vsel %vm919, %v2741, -inf
        %2748 = vmax.xlane.f32.xlu0 %v2747
        %v2749 = vpop.xlane.xlu0 %2748
        %v2750 = vsel %vm919, %v2744, -inf
        %2751 = vmax.xlane.f32.xlu0 %v2750
        %v2752 = vpop.xlane.xlu0 %2751
        %v2753 = vsub.f32 %v2741, %v2749
        %v2754 = vsub.f32 %v2744, %v2752
        %v2755 = vmul.f32 %v2753, 1.442695
        %v2756 = vpow.pop %v2755
        %v2757 = vmul.f32 %v2754, 1.442695
        %v2758 = vpow.pop %v2757
        %v2759 = vsel %vm919, %v2756, 0.0
        %2760 = vadd.xlane.f32.xlu0 %v2759
        %v2761 = vpop.xlane.xlu0 %2760
        %v2762 = vsel %vm919, %v2758, 0.0
        %2763 = vadd.xlane.f32.xlu0 %v2762
        %v2764 = vpop.xlane.xlu0 %2763
        %v2765 = vrcp.pop %v2761
        %v2766 = vrcp.pop %v2764
        %v2767 = vmul.f32 %v2756, %v2765
        %v2768 = vmul.f32 %v2758, %v2766
        %v2769 = vpack.c.bf16 %v2768, %v2767
        %2770 = vrot.lane.b32.xlu0 %v1979, 48
        %v2771 = vpop.permute.xlu0 %2770
        %v2774 = vsel %vm919, %v2769, 0
        %2776 = vmatprep.subr.bf16.mxu0 0
        %2777 = vmatpush1.bf16.msra.mxu0 0
        %2778 = vmatprep.subr.bf16.mxu0 0
        %2779 = vmatpush1.bf16.msra.mxu0 0
        %2780 = vmatprep.subr.bf16.mxu0 0
        %2781 = vmatpush1.bf16.msra.mxu0 0
        %2782 = vmatprep.subr.bf16.mxu0 0
        %2783 = vmatpush1.bf16.msra.mxu0 0
        %2784 = vmatprep.subr.bf16.mxu0 0
        %2785 = vmatpush1.bf16.msra.mxu0 0
        %2786 = vmatprep.subr.bf16.mxu0 0
        %2787 = vmatpush1.bf16.msra.mxu0 0
        %2788 = vmatprep.subr.bf16.mxu0 0
        %2789 = vmatpush1.bf16.msra.mxu0 0
        %2790 = vmatprep.subr.bf16.mxu0 0
        %2791 = vmatpush1.bf16.msra.mxu0 %v2771
        %2792 = vmatprep.subr.bf16.mxu0 0
        %2793 = vmatpush2.bf16.msra.mxu0 0
        %2794 = vmatprep.subr.bf16.mxu0 0
        %2795 = vmatpush2.bf16.msra.mxu0 0
        %2796 = vmatprep.subr.bf16.mxu0 0
        %2797 = vmatpush2.bf16.msra.mxu0 0
        %2798 = vmatprep.subr.bf16.mxu0 0
        %2799 = vmatpush2.bf16.msra.mxu0 0
        %2800 = vmatprep.subr.bf16.mxu0 0
        %2801 = vmatpush2.bf16.msra.mxu0 0
        %2802 = vmatprep.subr.bf16.mxu0 0
        %2803 = vmatpush2.bf16.msra.mxu0 0
        %2804 = vmatprep.subr.bf16.mxu0 0
        %2805 = vmatpush2.bf16.msra.mxu0 0
        %2806 = vmatprep.subr.bf16.mxu0 0
        %2807 = vmatpush2.bf16.msra.mxu0 0
        %2808 = vmatprep.mubr.bf16.mxu0 0
        %2809 = vmatmul.mubr.bf16.gmra.mxu0 %v2774
        %v2810 = vpop.f32.mrf.mxu0
        %v2811 = vadd.f32 0.0, %v2810
        %v2812 = vpop.f32.mrf.mxu0
        %v2813 = vpop.f32.mrf.mxu0
        %v2814 = vadd.f32 0.0, %v2813
        %v2815 = vpop.f32.mrf.mxu0
        %2816 = vdwg.mxu0
        %2819 = vrot.lane.b32.xlu0 %v2811, 16
        %v2820 = vpop.permute.xlu0 %2819
        %2821 = vrot.lane.b32.xlu0 %v2814, 16
        %v2822 = vpop.permute.xlu0 %2821
        %v2825 = vsel %vm919, %v2690, %v2820
        %v2826 = vsel %vm919, %v2693, %v2822
        %v2827 = vpack.c.bf16 %v2826, %v2825
        %v2828 = vld [vmem:[#allocation7 + $0x380] sm:$0xf]
        %v2829 = vld [vmem:[#allocation7 + $0x384] sm:$0xf]
        %v2830 = vld [vmem:[#allocation7 + $0x388] sm:$0xf]
        %v2831 = vld [vmem:[#allocation7 + $0x38c] sm:$0xf]
        %v2832 = vld [vmem:[#allocation9 + $0x1f] sm:$0x1]
        %v2833 = vlaneseq
        %v2834 = vshrl.u32 %v2833, 7
        %v2835 = vsub.s32 0, %v2834
        %v2836 = vrot.slane %v2832, %v2835
        %v2841 = vunpack.c.l.b16 %v2828
        %v2842 = vunpack.c.l.b16 %v2829
        %v2843 = vunpack.c.l.b16 %v2830
        %v2844 = vunpack.c.l.b16 %v2831
        %v2845 = vpack.c.b16 %v2842, %v2841
        %v2846 = vpack.c.b16 %v2844, %v2843
        %v2850 = vsel %vm374, %v2827, 0
        %2852 = vmatprep.subr.bf16.mxu0 0
        %2853 = vmatpush1.bf16.msra.mxu0 0
        %2854 = vmatprep.subr.bf16.mxu0 0
        %2855 = vmatpush1.bf16.msra.mxu0 0
        %2856 = vmatprep.subr.bf16.mxu0 0
        %2857 = vmatpush1.bf16.msra.mxu0 0
        %2858 = vmatprep.subr.bf16.mxu0 0
        %2859 = vmatpush1.bf16.msra.mxu0 0
        %2860 = vmatprep.subr.bf16.mxu0 0
        %2861 = vmatpush1.bf16.msra.mxu0 0
        %2862 = vmatprep.subr.bf16.mxu0 0
        %2863 = vmatpush1.bf16.msra.mxu0 0
        %2864 = vmatprep.subr.bf16.mxu0 0
        %2865 = vmatpush1.bf16.msra.mxu0 %v2846
        %2866 = vmatprep.subr.bf16.mxu0 0
        %2867 = vmatpush1.bf16.msra.mxu0 %v2845
        %2868 = vmatprep.subr.bf16.mxu0 0
        %2869 = vmatpush2.bf16.msra.mxu0 0
        %2870 = vmatprep.subr.bf16.mxu0 0
        %2871 = vmatpush2.bf16.msra.mxu0 0
        %2872 = vmatprep.subr.bf16.mxu0 0
        %2873 = vmatpush2.bf16.msra.mxu0 0
        %2874 = vmatprep.subr.bf16.mxu0 0
        %2875 = vmatpush2.bf16.msra.mxu0 0
        %2876 = vmatprep.subr.bf16.mxu0 0
        %2877 = vmatpush2.bf16.msra.mxu0 0
        %2878 = vmatprep.subr.bf16.mxu0 0
        %2879 = vmatpush2.bf16.msra.mxu0 0
        %2880 = vmatprep.subr.bf16.mxu0 0
        %2881 = vmatpush2.bf16.msra.mxu0 0
        %2882 = vmatprep.subr.bf16.mxu0 0
        %2883 = vmatpush2.bf16.msra.mxu0 0
        %2884 = vmatprep.mubr.bf16.mxu0 0
        %2885 = vmatmul.mubr.bf16.gmra.mxu0 %v2850
        %v2886 = vpop.f32.mrf.mxu0
        %v2887 = vadd.f32 %v2836, %v2886
        %v2888 = vpop.f32.mrf.mxu0
        %v2889 = vpop.f32.mrf.mxu0
        %v2890 = vadd.f32 %v2836, %v2889
        %v2891 = vpop.f32.mrf.mxu0
        %2892 = vdwg.mxu0
        %v2893 = vadd.f32 %v2887, %v1702
        %v2894 = vadd.f32 %v2890, %v1703
        %v2895 = vsel %vm787, %v2893, 0.0
        %2896 = vadd.xlane.f32.xlu0 %v2895
        %v2897 = vpop.xlane.xlu0 %2896
        %v2898 = vsel %vm787, %v2894, 0.0
        %2899 = vadd.xlane.f32.xlu0 %v2898
        %v2900 = vpop.xlane.xlu0 %2899
        %v2901 = vmul.f32 %v2897, %v1243
        %v2902 = vmul.f32 %v2900, %v1243
        %v2903 = vsub.f32 %v2893, %v2901
        %v2904 = vsub.f32 %v2894, %v2902
        %v2905 = vmul.f32 %v2903, %v2903
        %v2906 = vmul.f32 %v2904, %v2904
        %v2907 = vsel %vm787, %v2905, 0.0
        %2908 = vadd.xlane.f32.xlu0 %v2907
        %v2909 = vpop.xlane.xlu0 %2908
        %v2910 = vsel %vm787, %v2906, 0.0
        %2911 = vadd.xlane.f32.xlu0 %v2910
        %v2912 = vpop.xlane.xlu0 %2911
        %v2913 = vmul.f32 %v2909, %v1243
        %v2914 = vmul.f32 %v2912, %v1243
        %v2915 = vadd.f32 %v2913, 1e-05
        %v2916 = vadd.f32 %v2914, 1e-05
        %v2917 = vrsqrt.pop %v2915
        %v2918 = vrsqrt.pop %v2916
        %v2919 = vmul.f32 %v2903, %v2917
        %v2920 = vmul.f32 %v2904, %v2918
        %v2921 = vld [vmem:[#allocation9 + $0x20] sm:$0x1]
        %v2922 = vlaneseq
        %v2923 = vshrl.u32 %v2922, 7
        %v2924 = vsub.s32 0, %v2923
        %v2925 = vrot.slane %v2921, %v2924
        %v2926 = vmul.f32 %v2919, %v2925
        %v2927 = vmul.f32 %v2920, %v2925
        %v2928 = vld [vmem:[#allocation9 + $0x21] sm:$0x1]
        %v2929 = vlaneseq
        %v2930 = vshrl.u32 %v2929, 7
        %v2931 = vsub.s32 0, %v2930
        %v2932 = vrot.slane %v2928, %v2931
        %v2933 = vadd.f32 %v2926, %v2932
        %v2934 = vadd.f32 %v2927, %v2932
        %v2935 = vpack.c.bf16 %v2934, %v2933
        %v2936 = vld [vmem:[#allocation7 + $0x390] sm:$0xf]
        %v2937 = vld [vmem:[#allocation7 + $0x394] sm:$0xf]
        %v2938 = vld [vmem:[#allocation7 + $0x398] sm:$0xf]
        %v2939 = vld [vmem:[#allocation7 + $0x39c] sm:$0xf]
        %v2940 = vld [vmem:[#allocation7 + $0x3a0] sm:$0xf]
        %v2941 = vld [vmem:[#allocation7 + $0x3a4] sm:$0xf]
        %v2942 = vld [vmem:[#allocation7 + $0x3a8] sm:$0xf]
        %v2943 = vld [vmem:[#allocation7 + $0x3ac] sm:$0xf]
        %v2944 = vld [vmem:[#allocation9 + $0x22] sm:$0x1]
        %v2945 = vlaneseq
        %v2946 = vshrl.u32 %v2945, 7
        %v2947 = vsub.s32 0, %v2946
        %v2948 = vrot.slane %v2944, %v2947
        %v2957 = vunpack.c.l.b16 %v2936
        %v2958 = vunpack.c.l.b16 %v2937
        %v2959 = vunpack.c.l.b16 %v2938
        %v2960 = vunpack.c.l.b16 %v2939
        %v2961 = vunpack.c.l.b16 %v2940
        %v2962 = vunpack.c.l.b16 %v2941
        %v2963 = vunpack.c.l.b16 %v2942
        %v2964 = vunpack.c.l.b16 %v2943
        %v2965 = vpack.c.b16 %v2958, %v2957
        %v2966 = vpack.c.b16 %v2960, %v2959
        %v2967 = vpack.c.b16 %v2962, %v2961
        %v2968 = vpack.c.b16 %v2964, %v2963
        %v2974 = vsel %vm787, %v2935, 0
        %2976 = vmatprep.subr.bf16.mxu0 0
        %2977 = vmatpush1.bf16.msra.mxu0 0
        %2978 = vmatprep.subr.bf16.mxu0 0
        %2979 = vmatpush1.bf16.msra.mxu0 0
        %2980 = vmatprep.subr.bf16.mxu0 0
        %2981 = vmatpush1.bf16.msra.mxu0 0
        %2982 = vmatprep.subr.bf16.mxu0 0
        %2983 = vmatpush1.bf16.msra.mxu0 0
        %2984 = vmatprep.subr.bf16.mxu0 0
        %2985 = vmatpush1.bf16.msra.mxu0 %v2968
        %2986 = vmatprep.subr.bf16.mxu0 0
        %2987 = vmatpush1.bf16.msra.mxu0 %v2967
        %2988 = vmatprep.subr.bf16.mxu0 0
        %2989 = vmatpush1.bf16.msra.mxu0 %v2966
        %2990 = vmatprep.subr.bf16.mxu0 0
        %2991 = vmatpush1.bf16.msra.mxu0 %v2965
        %2992 = vmatprep.subr.bf16.mxu0 0
        %2993 = vmatpush2.bf16.msra.mxu0 0
        %2994 = vmatprep.subr.bf16.mxu0 0
        %2995 = vmatpush2.bf16.msra.mxu0 0
        %2996 = vmatprep.subr.bf16.mxu0 0
        %2997 = vmatpush2.bf16.msra.mxu0 0
        %2998 = vmatprep.subr.bf16.mxu0 0
        %2999 = vmatpush2.bf16.msra.mxu0 0
        %3000 = vmatprep.subr.bf16.mxu0 0
        %3001 = vmatpush2.bf16.msra.mxu0 0
        %3002 = vmatprep.subr.bf16.mxu0 0
        %3003 = vmatpush2.bf16.msra.mxu0 0
        %3004 = vmatprep.subr.bf16.mxu0 0
        %3005 = vmatpush2.bf16.msra.mxu0 0
        %3006 = vmatprep.subr.bf16.mxu0 0
        %3007 = vmatpush2.bf16.msra.mxu0 0
        %3008 = vmatprep.mubr.bf16.mxu0 0
        %3009 = vmatmul.mubr.bf16.gmra.mxu0 %v2974
        %v3010 = vpop.f32.mrf.mxu0
        %v3011 = vadd.f32 %v2948, %v3010
        %v3012 = vpop.f32.mrf.mxu0
        %v3013 = vpop.f32.mrf.mxu0
        %v3014 = vadd.f32 %v2948, %v3013
        %v3015 = vpop.f32.mrf.mxu0
        %3016 = vdwg.mxu0
        %v3017 = vmax.f32 %v3011, 0.0
        %v3018 = vmax.f32 %v3014, 0.0
        %v3019 = vpack.c.bf16 %v3018, %v3017
        %v3020 = vld [vmem:[#allocation7 + $0x3b0] sm:$0xf]
        %v3021 = vld [vmem:[#allocation7 + $0x3b4] sm:$0xf]
        %v3022 = vld [vmem:[#allocation7 + $0x3b8] sm:$0xf]
        %v3023 = vld [vmem:[#allocation7 + $0x3bc] sm:$0xf]
        %v3024 = vld [vmem:[#allocation7 + $0x3c0] sm:$0xf]
        %v3025 = vld [vmem:[#allocation7 + $0x3c4] sm:$0xf]
        %v3026 = vld [vmem:[#allocation7 + $0x3c8] sm:$0xf]
        %v3027 = vld [vmem:[#allocation7 + $0x3cc] sm:$0xf]
        %v3028 = vld [vmem:[#allocation7 + $0x3d0] sm:$0xf]
        %v3029 = vld [vmem:[#allocation7 + $0x3d4] sm:$0xf]
        %v3030 = vld [vmem:[#allocation7 + $0x3d8] sm:$0xf]
        %v3031 = vld [vmem:[#allocation7 + $0x3dc] sm:$0xf]
        %v3032 = vld [vmem:[#allocation7 + $0x3e0] sm:$0xf]
        %v3033 = vld [vmem:[#allocation7 + $0x3e4] sm:$0xf]
        %v3034 = vld [vmem:[#allocation7 + $0x3e8] sm:$0xf]
        %v3035 = vld [vmem:[#allocation7 + $0x3ec] sm:$0xf]
        %v3036 = vld [vmem:[#allocation9 + $0x23] sm:$0x1]
        %v3037 = vlaneseq
        %v3038 = vshrl.u32 %v3037, 7
        %v3039 = vsub.s32 0, %v3038
        %v3040 = vrot.slane %v3036, %v3039
        %v3057 = vunpack.c.l.b16 %v3020
        %v3058 = vunpack.c.l.b16 %v3021
        %v3059 = vunpack.c.l.b16 %v3022
        %v3060 = vunpack.c.l.b16 %v3023
        %v3061 = vunpack.c.l.b16 %v3024
        %v3062 = vunpack.c.l.b16 %v3025
        %v3063 = vunpack.c.l.b16 %v3026
        %v3064 = vunpack.c.l.b16 %v3027
        %v3065 = vunpack.c.l.b16 %v3028
        %v3066 = vunpack.c.l.b16 %v3029
        %v3067 = vunpack.c.l.b16 %v3030
        %v3068 = vunpack.c.l.b16 %v3031
        %v3069 = vunpack.c.l.b16 %v3032
        %v3070 = vunpack.c.l.b16 %v3033
        %v3071 = vunpack.c.l.b16 %v3034
        %v3072 = vunpack.c.l.b16 %v3035
        %v3073 = vpack.c.b16 %v3058, %v3057
        %v3074 = vpack.c.b16 %v3060, %v3059
        %v3075 = vpack.c.b16 %v3062, %v3061
        %v3076 = vpack.c.b16 %v3064, %v3063
        %v3077 = vpack.c.b16 %v3066, %v3065
        %v3078 = vpack.c.b16 %v3068, %v3067
        %v3079 = vpack.c.b16 %v3070, %v3069
        %v3080 = vpack.c.b16 %v3072, %v3071
        %3089 = vmatprep.subr.bf16.mxu0 0
        %3090 = vmatpush1.bf16.msra.mxu0 %v3080
        %3091 = vmatprep.subr.bf16.mxu0 0
        %3092 = vmatpush1.bf16.msra.mxu0 %v3079
        %3093 = vmatprep.subr.bf16.mxu0 0
        %3094 = vmatpush1.bf16.msra.mxu0 %v3078
        %3095 = vmatprep.subr.bf16.mxu0 0
        %3096 = vmatpush1.bf16.msra.mxu0 %v3077
        %3097 = vmatprep.subr.bf16.mxu0 0
        %3098 = vmatpush1.bf16.msra.mxu0 %v3076
        %3099 = vmatprep.subr.bf16.mxu0 0
        %3100 = vmatpush1.bf16.msra.mxu0 %v3075
        %3101 = vmatprep.subr.bf16.mxu0 0
        %3102 = vmatpush1.bf16.msra.mxu0 %v3074
        %3103 = vmatprep.subr.bf16.mxu0 0
        %3104 = vmatpush1.bf16.msra.mxu0 %v3073
        %3105 = vmatprep.subr.bf16.mxu0 0
        %3106 = vmatpush2.bf16.msra.mxu0 0
        %3107 = vmatprep.subr.bf16.mxu0 0
        %3108 = vmatpush2.bf16.msra.mxu0 0
        %3109 = vmatprep.subr.bf16.mxu0 0
        %3110 = vmatpush2.bf16.msra.mxu0 0
        %3111 = vmatprep.subr.bf16.mxu0 0
        %3112 = vmatpush2.bf16.msra.mxu0 0
        %3113 = vmatprep.subr.bf16.mxu0 0
        %3114 = vmatpush2.bf16.msra.mxu0 0
        %3115 = vmatprep.subr.bf16.mxu0 0
        %3116 = vmatpush2.bf16.msra.mxu0 0
        %3117 = vmatprep.subr.bf16.mxu0 0
        %3118 = vmatpush2.bf16.msra.mxu0 0
        %3119 = vmatprep.subr.bf16.mxu0 0
        %3120 = vmatpush2.bf16.msra.mxu0 0
        %3121 = vmatprep.mubr.bf16.mxu0 0
        %3122 = vmatmul.mubr.bf16.gmra.mxu0 %v3019
        %v3123 = vpop.f32.mrf.mxu0
        %v3124 = vadd.f32 %v3040, %v3123
        %v3125 = vpop.f32.mrf.mxu0
        %v3126 = vpop.f32.mrf.mxu0
        %v3127 = vadd.f32 %v3040, %v3126
        %v3128 = vpop.f32.mrf.mxu0
        %3129 = vdwg.mxu0
        %v3130 = vadd.f32 %v3124, %v2933
        %v3131 = vadd.f32 %v3127, %v2934
        %v3132 = vsel %vm787, %v3130, 0.0
        %3133 = vadd.xlane.f32.xlu0 %v3132
        %v3134 = vpop.xlane.xlu0 %3133
        %v3135 = vsel %vm787, %v3131, 0.0
        %3136 = vadd.xlane.f32.xlu0 %v3135
        %v3137 = vpop.xlane.xlu0 %3136
        %v3138 = vmul.f32 %v3134, %v1243
        %v3139 = vmul.f32 %v3137, %v1243
        %v3140 = vsub.f32 %v3130, %v3138
        %v3141 = vsub.f32 %v3131, %v3139
        %v3142 = vmul.f32 %v3140, %v3140
        %v3143 = vmul.f32 %v3141, %v3141
        %v3144 = vsel %vm787, %v3142, 0.0
        %3145 = vadd.xlane.f32.xlu0 %v3144
        %v3146 = vpop.xlane.xlu0 %3145
        %v3147 = vsel %vm787, %v3143, 0.0
        %3148 = vadd.xlane.f32.xlu0 %v3147
        %v3149 = vpop.xlane.xlu0 %3148
        %v3150 = vmul.f32 %v3146, %v1243
        %v3151 = vmul.f32 %v3149, %v1243
        %v3152 = vadd.f32 %v3150, 1e-05
        %v3153 = vadd.f32 %v3151, 1e-05
        %v3154 = vrsqrt.pop %v3152
        %v3155 = vrsqrt.pop %v3153
        %v3156 = vmul.f32 %v3140, %v3154
        %v3157 = vmul.f32 %v3141, %v3155
        %v3158 = vld [vmem:[#allocation9 + $0x24] sm:$0x1]
        %v3159 = vlaneseq
        %v3160 = vshrl.u32 %v3159, 7
        %v3161 = vsub.s32 0, %v3160
        %v3162 = vrot.slane %v3158, %v3161
        %v3163 = vmul.f32 %v3156, %v3162
        %v3164 = vmul.f32 %v3157, %v3162
        %v3165 = vld [vmem:[#allocation9 + $0x25] sm:$0x1]
        %v3166 = vlaneseq
        %v3167 = vshrl.u32 %v3166, 7
        %v3168 = vsub.s32 0, %v3167
        %v3169 = vrot.slane %v3165, %v3168
        %v3170 = vadd.f32 %v3163, %v3169
        %v3171 = vadd.f32 %v3164, %v3169
        %3174 = vrot.lane.b32.xlu0 %v2575, 64
        %v3175 = vpop.permute.xlu0 %3174
        %3176 = vrot.lane.b32.xlu0 %v2576, 64
        %v3177 = vpop.permute.xlu0 %3176
        %v3180 = vsel %vm787, %v3170, %v3175
        %v3181 = vsel %vm787, %v3171, %v3177
        %3182 = vst [vmem:[%s222] sm:$0xff] %v3180
        %3183 = vst [vmem:[%s222 + $0x8] sm:$0xff] %v3181
        %s3184 = sand.u32 %s102, 1
        %s3185 = scalar_lea.sflag [#allocation6], %s3184
        %s3186 = sand.u32 %s102, 1
        %s3187 = smul.addr %s3186, 16
        %s3188 = scalar_lea.vmem [#allocation10], %s3187
        // Predicated region
        $region45: #{tpu_custom_call.1} parent=31 // pred_check
          %p3189 = pneg %p112
        $region46: #{tpu_custom_call.1} parent=31 // pred_check_branch
          %3191 = sbr.rel (%p3189) target = $region48
        $region47: #{tpu_custom_call.1} parent=31 // pred_region
          %s3192 = smul.u32 2, %s26
          %s3194 = ssub.s32 256, 256
          %3195 = vsyncadd %s3185, %s3194
          %s3196 = smul.addr %s3192, 128
          %s3197 = scalar_lea.hbm %s4, %s3196
          %s3198 = sshll.u32 %s3188, 4
          %s3199 = int_to_ptr.vmem [resolvable:$true] %s3198
          %3204 = dma.vmem_to_hbm [thread:$0]  %s3199, 256, %s3197, %s3185, 128, 128, 8
        $region48: #{tpu_custom_call.1} parent=31 // pred_fallthru
          _
      $region32: #{tpu_custom_call.1} parent=5 // pred_fallthru
        _
      %p3205 = scmp.le.s32.totalorder 2, %s21
      // Predicated region
      $region49: #{tpu_custom_call.1} parent=5 // pred_check
        %p3206 = pneg %p3205
      $region50: #{tpu_custom_call.1} parent=5 // pred_check_branch
        %3208 = sbr.rel (%p3206) target = $region52
      $region51: #{tpu_custom_call.1} parent=5 // pred_region
        %s3209 = ssub.s32 %s21, 2
        // Predicated region
        $region53: #{tpu_custom_call.1} parent=51 // pred_check
          %p3210 = pneg %p118
        $region54: #{tpu_custom_call.1} parent=51 // pred_check_branch
          %3212 = sbr.rel (%p3210) target = $region56
        $region55: #{tpu_custom_call.1} parent=51 // pred_region
          %s3213 = sand.u32 %s103, 1
          %s3214 = scalar_lea.sflag [#allocation6], %s3213
          %s3215 = sand.u32 %s103, 1
          %s3216 = smul.addr %s3215, 16
          %s3217 = scalar_lea.vmem [#allocation10], %s3216
          %3218 = dma.done %s3214, 256
        $region56: #{tpu_custom_call.1} parent=51 // pred_fallthru
          _
      $region52: #{tpu_custom_call.1} parent=5 // pred_fallthru
        _
    $region6: #{tpu_custom_call.1} parent=1 // loop_footer
      %s25 = sadd.s32 1, %s21
    $region7: #{tpu_custom_call.1} parent=1 // loop_footer_branch
      %20 = sbr.rel target = $region3
    $region8: #{tpu_custom_call.1} parent=1 // loop_exit
      _
    %3219 = vsyncpa [#allocation5], 1
    %s3220 = scalar_lea.sflag [#allocation5], 1
    %3221 = vsyncpa %s3220, 1
    %3222 = vsyncpa [#allocation8], 1
    %3223 = vsyncpa [#allocation6], 1
    %s3224 = scalar_lea.sflag [#allocation6], 1
    %3225 = vsyncpa %s3224, 1

</llo_original>
